<compile_context>
chip_gen: v7x
topology: tpu7x:2x2x1
jax: 0.10.0
libtpu: 0.0.40
codegen_flags: <defaults>
</compile_context>

<pallas_src>
import numpy as np
import jax
import jax.numpy as jnp
from jax import lax
from jax.experimental import pallas as pl
from jax.experimental.pallas import tpu as pltpu

# ----- model / problem sizes (small, consistent with SparseDNS defaults) -----
INPUT_SIZE = 28
HIDDEN_SIZE = 16
OUTPUT_SIZE = 10
N_BLOCKS = 6
BATCH = 2
SEQ = 4                      # number of time points


# ============================ plain-JAX glue =================================
def tridiagonal_solve_jax(b, A_upper, A_diagonal, A_lower):
    # b: (Bp, Ch, K); A_upper/A_lower: (Bp, K-1); A_diagonal: (Bp, K)
    K = b.shape[-1]
    Au = jnp.broadcast_to(A_upper[:, None, :], b[..., :-1].shape)
    Al = jnp.broadcast_to(A_lower[:, None, :], b[..., :-1].shape)
    Ad = jnp.broadcast_to(A_diagonal[:, None, :], b.shape)
    new_b = [b[..., 0]]
    new_d = [Ad[..., 0]]
    for i in range(1, K):
        w = Al[..., i - 1] / new_d[i - 1]
        new_d.append(Ad[..., i] - w * Au[..., i - 1])
        new_b.append(b[..., i] - w * new_b[i - 1])
    outs = [None] * K
    outs[K - 1] = new_b[K - 1] / new_d[K - 1]
    for i in range(K - 2, -1, -1):
        outs[i] = (new_b[i] - Au[..., i] * outs[i + 1]) / new_d[i]
    return jnp.stack(outs, axis=-1)                       # (Bp, Ch, K)


def cubic_spline_jax(times, x):
    # times: (Bp, T), x: (Bp, T, Ch) -> coeffs (a, b, two_c, three_d), each (Bp, T-1, Ch)
    path = jnp.swapaxes(x, -1, -2)                        # (Bp, Ch, T)
    td = times[:, 1:] - times[:, :-1]
    tdr = 1.0 / td
    tdr2 = tdr ** 2
    three_pd = 3.0 * (path[..., 1:] - path[..., :-1])
    six_pd = 2.0 * three_pd
    pds = three_pd * tdr2[:, None, :]
    T = times.shape[1]
    sd = jnp.zeros((times.shape[0], T), dtype=path.dtype)
    sd = sd.at[:, :-1].set(tdr)
    sd = sd.at[:, 1:].add(tdr)
    sd = sd * 2.0
    rhs = jnp.zeros(path.shape, dtype=path.dtype)
    rhs = rhs.at[..., :-1].set(pds)
    rhs = rhs.at[..., 1:].add(pds)
    kd = tridiagonal_solve_jax(rhs, tdr, sd, tdr)         # (Bp, Ch, T)
    a = path[..., :-1]
    bcoef = kd[..., :-1]
    two_c = (six_pd * tdr[:, None, :] - 4.0 * kd[..., :-1] - 2.0 * kd[..., 1:]) * tdr[:, None, :]
    three_d = (-six_pd * tdr[:, None, :] + 3.0 * (kd[..., :-1] + kd[..., 1:])) * tdr2[:, None, :]
    return (jnp.swapaxes(a, -1, -2), jnp.swapaxes(bcoef, -1, -2),
            jnp.swapaxes(two_c, -1, -2), jnp.swapaxes(three_d, -1, -2))


def spline_derivatives(times, coeffs, insert_vals):
    # NaturalCubicSpline.derivative at each (static) insert_t value.
    _, bcoef, two_c, three_d = coeffs
    Bp = times.shape[0]
    rng = jnp.arange(Bp)
    maxlen = bcoef.shape[-2] - 1
    derivs = []
    for tv in insert_vals:                                # python floats (static)
        idx = jnp.sum((tv > times).astype(jnp.int32), axis=1) - 1
        idx = jnp.clip(idx, 0, maxlen)
        frac = (tv - times[rng, idx])[:, None]
        inner = two_c[rng, idx, :] + three_d[rng, idx, :] * frac
        derivs.append(bcoef[rng, idx, :] + inner * frac)
    return jnp.stack(derivs, axis=0)                      # (n_steps, Bp, Ch)


def h_encoder(params, x0):
    h = jax.nn.relu(x0 @ params['he_lin_w'] + params['he_lin_b'])
    return jnp.einsum('bd,ndh->bnh', h, params['he_w']) + params['he_b'][None]


def x_encoder(params, x):
    h = jax.nn.relu(x @ params['xe_lin_w'] + params['xe_lin_b'])
    return jnp.einsum('btd,nde->bnte', h, params['xe_w']) + params['xe_b'][None, :, None, :]


def initial_l(params, z0, n_blocks):
    kz = z0 @ params['key_w_T'].T + params['key_b'][None, :, None]
    qz = z0 @ params['query_w'] + params['query_b'][None, :, None]
    return jnp.einsum('bim,bjm->bij', qz, kz) / n_blocks


# =============================== Pallas kernel ===============================
def sparse_dns_kernel(z0_ref, l0_ref, w0_ref, dxdt_ref,
                      w1_ref, b1_ref, w2_ref, b2_ref, sel_ref,
                      qwkw_ref, qwkbt_ref,
                      yw_ref, rowmask_ref, fold_ref, psum_ref, bd_ref,
                      out_ref):
    f32 = jnp.float32
    bf16 = jnp.bfloat16
    n_steps = dxdt_ref.shape[0]
    nb = z0_ref.shape[0] // psum_ref.shape[0]  # blocks per batch element
    t_dims = (((1,), (1,)), ((), ()))          # contraction A @ B.T

    def step(s, carry):
        z, l, w = carry                        # (BN,H), (BN,BN), (BN,H)

        # ---- sparsemax(l, axis=-1): sort-free support counting.
        # Off-batch entries of l are -1e9, so they never enter the support and
        # a0 is exactly block-diagonal (one sparsemax per batch element).
        # Temporaries stay as bool masks + one select: no (BN,BN,BN) f32
        # multiply is materialized (vreg-pressure / VPU-work reduction).
        zi = l[:, :, None]
        zj = l[:, None, :]
        mask = zj >= zi                                           # (BN,BN,BN) bool
        cnt = jnp.sum(mask.astype(f32), axis=-1)                  # (BN,BN)
        ssum = jnp.sum(jnp.where(mask, zj, 0.0), axis=-1)         # (BN,BN)
        support = (1.0 + cnt * l) > ssum                          # (BN,BN) bool
        kk = jnp.sum(jnp.where(support, 1.0, 0.0), axis=-1, keepdims=True)
        ssup = jnp.sum(jnp.where(support, l, 0.0), axis=-1, keepdims=True)
        # kk >= 1 always (each row's maximum is in its own support), so the
        # approx EUP reciprocal is safe; ~2^-12 rel. error << 1e-2 tolerance.
        tau = (ssup - 1.0) * pl.reciprocal(kk, approx=True)
        a0 = jnp.maximum(l - tau, 0.0)                            # (BN, BN)

        # ---- CDEFunc MLP + contraction with dX/dt ----
        h = jnp.dot(a0, z, preferred_element_type=f32)            # (BN, H)
        h1 = jnp.maximum(jnp.dot(h, w1_ref[...], preferred_element_type=f32)
                         + b1_ref[...], 0.0)
        h2 = jnp.tanh(jnp.dot(h1.astype(bf16), w2_ref[...],
                              preferred_element_type=f32) + b2_ref[...])  # (BN, H*C)
        # 896-wide product done in bf16 (no f32 upcast of dX/dt); the sel
        # matmul that follows still accumulates in f32.
        prod = h2.astype(bf16) * dxdt_ref[s]                      # (BN, H*C) bf16
        dz = jnp.dot(prod, sel_ref[...], preferred_element_type=f32)  # (BN, H)

        z = z + dz * (1.0 / 3.0)
        dzqk = jnp.dot(dz, qwkw_ref[...], preferred_element_type=f32)  # (BN, H)
        w = w + dzqk * (1.0 / 3.0)             # carried z@qw@kwt + query-bias term

        # ---- attention-logit update: the three rank-H dl terms folded into a
        # single K=3H dot_general (one MXU push+drain per step instead of 3).
        lhs = jnp.concatenate([dzqk, w, dz], axis=1)              # (BN, 3H)
        rhs = jnp.concatenate([z, dz, qwkbt_ref[...]], axis=1)    # (BN, 3H)
        dl = lax.dot_general(lhs, rhs, t_dims, preferred_element_type=f32)
        # Cross-batch dl contributions land on the -1e9 sentinel blocks;
        # harmless while |dl| * n_steps / (3*nb) << 1e9.
        l = l + dl * (1.0 / (nb * 3.0))
        return z, l, w

    # Strictly serial recurrence: no unroll (unrolling only raises liveness).
    z, l, w = lax.fori_loop(0, n_steps, step,
                            (z0_ref[...], l0_ref[...], w0_ref[...]))

    # ---- h_decoder without in-kernel reshape: per-row z @ wd3[row % nb],
    #      then per-batch row-sum, all via constant selector matrices. ----
    y_all = jnp.dot(z, yw_ref[...], preferred_element_type=f32)       # (BN, nb*OUT)
    y_row = jnp.dot(y_all * rowmask_ref[...], fold_ref[...],
                    preferred_element_type=f32)                       # (BN, OUT)
    out = jnp.dot(psum_ref[...], y_row, preferred_element_type=f32)   # (B, OUT)
    out_ref[...] = out + bd_ref[...]


def run_sparse_dns_kernel(z0, l0, dxdt_steps, params):
    # z0: (B, NB, H)  l0: (B, NB, NB)  dxdt_steps: (n_steps, B*NB, C2)
    B, NB, H = z0.shape
    n_steps, BN, C2 = dxdt_steps.shape
    OUT = params['bd'].shape[-1]
    f32, bf16 = jnp.float32, jnp.bfloat16
    CH = H * C2

    # --- batch folded along sublanes ---
    z0s = z0.reshape(BN, H).astype(f32)
    NEG = jnp.float32(-1e9)
    L0 = jnp.full((BN, BN), NEG, f32)
    for b in range(B):
        L0 = L0.at[b * NB:(b + 1) * NB, b * NB:(b + 1) * NB].set(l0[b])

    # --- fold constant weight chains in the wrapper ---
    qw, kwt = params['query_w'], params['key_w_T']
    qwkw = qw @ kwt                                                   # (H, H)
    kbm = jnp.broadcast_to(params['key_b'][None, :], (NB * NB, NB)).astype(f32)
    qwkbT = jnp.tile(qw @ kbm, (1, B)).T                              # (BN, H), pre-transposed
    qbm = jnp.broadcast_to(params['query_b'][:, None], (NB, NB * NB)).astype(f32)
    W0 = z0s @ qwkw + jnp.tile(qbm @ kwt, (B, 1))                     # carried zqk + bias

    w1 = params['cde_w1']
    b1 = params['cde_b1'].reshape(1, H)
    w2 = params['cde_w2'].astype(bf16)                                # (H, CH)
    b2 = params['cde_b2'].reshape(1, CH)
    sel = ((jnp.arange(CH)[:, None] // C2)
           == jnp.arange(H)[None, :]).astype(bf16)                    # (CH, H)

    # lane-tiled dX/dt stored bf16 (halves HBM/VMEM traffic of the largest input)
    dxdt_tiled = jnp.tile(dxdt_steps, (1, 1, H)).astype(bf16)         # (n_steps, BN, CH)

    # decoder selectors: out[b] = sum_n z[b*NB+n] @ wd3[n]
    yw = params['wd_t'].reshape(NB, H, OUT).transpose(1, 0, 2).reshape(H, NB * OUT)
    rowmask = ((jnp.arange(BN)[:, None] % NB)
               == (jnp.arange(NB * OUT)[None, :] // OUT)).astype(f32)  # (BN, NB*OUT)
    fold = jnp.tile(jnp.eye(OUT, dtype=f32), (NB, 1))                  # (NB*OUT, OUT)
    psum = ((jnp.arange(BN)[None, :] // NB)
            == jnp.arange(B)[:, None]).astype(f32)                     # (B, BN)
    bd = params['bd'].reshape(1, OUT)

    def rep(arr):
        shp = arr.shape
        return pl.BlockSpec(shp, lambda i, _n=len(shp): (0,) * _n)

    args = (z0s, L0, W0, dxdt_tiled, w1, b1, w2, b2, sel,
            qwkw, qwkbT, yw, rowmask, fold, psum, bd)

    return pl.pallas_call(
        sparse_dns_kernel,
        out_shape=jax.ShapeDtypeStruct((B, OUT), f32),
        grid=(1,),                                   # whole batch in one invocation
        in_specs=[rep(a) for a in args],
        out_specs=pl.BlockSpec((B, OUT), lambda i: (0, 0)),
        compiler_params=pltpu.CompilerParams(dimension_semantics=("arbitrary",)),
    )(*args)


# ============================ pure-JAX reference =============================
def sparsemax_ref(z):
    K = z.shape[-1]
    zs = jnp.sort(z, axis=-1)[..., ::-1]
    ks = jnp.arange(1, K + 1, dtype=z.dtype)
    cs = jnp.cumsum(zs, axis=-1)
    cond = (1.0 + ks * zs) > cs
    kz = jnp.sum(cond.astype(jnp.int32), axis=-1, keepdims=True)
    cs_k = jnp.take_along_axis(cs, kz - 1, axis=-1)
    tau = (cs_k - 1.0) / kz.astype(z.dtype)
    return jnp.maximum(z - tau, 0.0)


def reference_loop(z0, l0, dxdt_steps, params, n_blocks, hidden):
    z, l = z0, l0
    w1, b1 = params['cde_w1'], params['cde_b1']
    w2, b2 = params['cde_w2'], params['cde_b2']
    qw, kwt = params['query_w'], params['key_w_T']
    kbm = jnp.broadcast_to(params['key_b'][None, :], (n_blocks * n_blocks, n_blocks))
    qbm = jnp.broadcast_to(params['query_b'][:, None], (n_blocks, n_blocks * n_blocks))
    C2 = dxdt_steps.shape[-1]
    for s in range(dxdt_steps.shape[0]):
        a0 = sparsemax_ref(l)
        dxdt = dxdt_steps[s]                                  # (B, NB, C)
        h = jnp.einsum('bij,bjk->bik', a0, z)
        h1 = jax.nn.relu(h @ w1 + b1)
        h2 = jnp.tanh(h1 @ w2 + b2)
        F = h2.reshape(h2.shape[0], n_blocks, hidden, C2)
        dz = jnp.einsum('bnhc,bnc->bnh', F, dxdt)
        z = z + dz / 3.0
        dl = jnp.einsum('bih,bjh->bij', (dz @ qw) @ kwt, z)
        dl = dl + jnp.einsum('bih,bjh->bij', (z @ qw) @ kwt, dz)
        dl = dl + (dz @ qw) @ kbm
        dl = dl + jnp.einsum('ih,bjh->bij', qbm @ kwt, dz)
        l = l + dl / n_blocks / 3.0
    return z.reshape(z.shape[0], -1) @ params['wd_t'] + params['bd']


# ==================================== main ===================================
def main():
    I, H, OUT, NB, B, T = INPUT_SIZE, HIDDEN_SIZE, OUTPUT_SIZE, N_BLOCKS, BATCH, SEQ
    C2 = 2 * I
    f32 = jnp.float32
    key = jax.random.PRNGKey(0)
    ks = jax.random.split(key, 17)

    params = dict(
        xe_lin_w=0.1 * jax.random.normal(ks[0], (I, C2), f32),
        xe_lin_b=0.1 * jax.random.normal(ks[1], (C2,), f32),
        xe_w=0.01 * jax.random.uniform(ks[2], (NB, C2, C2), f32),
        xe_b=jnp.zeros((NB, C2), f32),
        he_lin_w=0.1 * jax.random.normal(ks[3], (I, C2), f32),
        he_lin_b=0.1 * jax.random.normal(ks[4], (C2,), f32),
        he_w=0.01 * jax.random.uniform(ks[5], (NB, C2, H), f32),
        he_b=jnp.zeros((NB, H), f32),
        cde_w1=0.1 * jax.random.normal(ks[6], (H, H), f32),
        cde_b1=0.1 * jax.random.normal(ks[7], (H,), f32),
        cde_w2=0.1 * jax.random.normal(ks[8], (H, C2 * H), f32),
        cde_b2=0.1 * jax.random.normal(ks[9], (C2 * H,), f32),
        key_w_T=0.01 * jax.random.normal(ks[10], (NB * NB, H), f32),
        query_w=0.01 * jax.random.normal(ks[11], (H, NB * NB), f32),
        key_b=0.01 * jax.random.normal(ks[12], (NB,), f32),
        query_b=0.01 * jax.random.normal(ks[13], (NB,), f32),
        wd_t=0.1 * jax.random.normal(ks[14], (NB * H, OUT), f32),
        bd=jnp.zeros((OUT,), f32),
    )

    x = 0.5 * jax.random.normal(ks[15], (B, T, I), f32)
    t = jnp.broadcast_to(jnp.arange(T, dtype=f32)[None, :], (B, T))

    # ----- SparseDNS.forward glue (spline construction stays in plain JAX) -----
    z0 = h_encoder(params, x[:, 0, :])                       # (B, NB, H)
    l0 = initial_l(params, z0, NB)                           # (B, NB, NB)
    xe = x_encoder(params, x)                                # (B, NB, T, 2I)
    temp_t = jnp.repeat(t, NB, axis=0)                       # (B*NB, T)
    coeffs = cubic_spline_jax(temp_t, xe.reshape(B * NB, T, C2))
    t0, t1 = int(t[0, 0]), int(t[0, -1])
    insert_vals = [float(v) for v in np.linspace(t0, t1, 3 * (t1 - t0) + 1)]
    derivs = spline_derivatives(temp_t, coeffs, insert_vals)  # (n_steps, B*NB, 2I)

    out = run_sparse_dns_kernel(z0, l0, derivs, params)
    out = jax.block_until_ready(out)

    n_steps = len(insert_vals)
    dxdt_steps_ref = derivs.reshape(n_steps, B, NB, C2)
    ref = reference_loop(z0, l0, dxdt_steps_ref, params, NB, H)
    if not np.allclose(np.asarray(out), np.asarray(ref), rtol=1e-2, atol=1e-2):
        raise AssertionError("Pallas kernel disagrees with JAX reference")
    print("KERNEL_OK")


if __name__ == "__main__":
    main()
</pallas_src>

<mosaic_0001>
module attributes {stable_mosaic.version = 11 : i64} {
  func.func @sparse_dns_kernel(%arg0: i32, %arg1: memref<12x16xf32, #tpu.memory_space<vmem>>, %arg2: memref<12x12xf32, #tpu.memory_space<vmem>>, %arg3: memref<12x16xf32, #tpu.memory_space<vmem>>, %arg4: memref<10x12x896xbf16, #tpu.memory_space<vmem>>, %arg5: memref<16x16xf32, #tpu.memory_space<vmem>>, %arg6: memref<1x16xf32, #tpu.memory_space<vmem>>, %arg7: memref<16x896xbf16, #tpu.memory_space<vmem>>, %arg8: memref<1x896xf32, #tpu.memory_space<vmem>>, %arg9: memref<896x16xbf16, #tpu.memory_space<vmem>>, %arg10: memref<16x16xf32, #tpu.memory_space<vmem>>, %arg11: memref<12x16xf32, #tpu.memory_space<vmem>>, %arg12: memref<16x60xf32, #tpu.memory_space<vmem>>, %arg13: memref<12x60xf32, #tpu.memory_space<vmem>>, %arg14: memref<60x10xf32, #tpu.memory_space<vmem>>, %arg15: memref<2x12xf32, #tpu.memory_space<vmem>>, %arg16: memref<1x10xf32, #tpu.memory_space<vmem>>, %arg17: memref<2x10xf32, #tpu.memory_space<vmem>>) attributes {dimension_semantics = [#tpu.dimension_semantics<arbitrary>], iteration_bounds = array<i64: 1>, scalar_prefetch = 0 : i64, scratch_operands = 0 : i64, tpu.core_type = #tpu.core_type<tc>, window_params = [{pipeline_mode = #tpu.pipeline_mode<synchronous>, transform_indices = @transform_0, window_bounds = array<i64: 12, 16>}, {pipeline_mode = #tpu.pipeline_mode<synchronous>, transform_indices = @transform_1, window_bounds = array<i64: 12, 12>}, {pipeline_mode = #tpu.pipeline_mode<synchronous>, transform_indices = @transform_2, window_bounds = array<i64: 12, 16>}, {pipeline_mode = #tpu.pipeline_mode<synchronous>, transform_indices = @transform_3, window_bounds = array<i64: 10, 12, 896>}, {pipeline_mode = #tpu.pipeline_mode<synchronous>, transform_indices = @transform_4, window_bounds = array<i64: 16, 16>}, {pipeline_mode = #tpu.pipeline_mode<synchronous>, transform_indices = @transform_5, window_bounds = array<i64: 1, 16>}, {pipeline_mode = #tpu.pipeline_mode<synchronous>, transform_indices = @transform_6, window_bounds = array<i64: 16, 896>}, {pipeline_mode = #tpu.pipeline_mode<synchronous>, transform_indices = @transform_7, window_bounds = array<i64: 1, 896>}, {pipeline_mode = #tpu.pipeline_mode<synchronous>, transform_indices = @transform_8, window_bounds = array<i64: 896, 16>}, {pipeline_mode = #tpu.pipeline_mode<synchronous>, transform_indices = @transform_9, window_bounds = array<i64: 16, 16>}, {pipeline_mode = #tpu.pipeline_mode<synchronous>, transform_indices = @transform_10, window_bounds = array<i64: 12, 16>}, {pipeline_mode = #tpu.pipeline_mode<synchronous>, transform_indices = @transform_11, window_bounds = array<i64: 16, 60>}, {pipeline_mode = #tpu.pipeline_mode<synchronous>, transform_indices = @transform_12, window_bounds = array<i64: 12, 60>}, {pipeline_mode = #tpu.pipeline_mode<synchronous>, transform_indices = @transform_13, window_bounds = array<i64: 60, 10>}, {pipeline_mode = #tpu.pipeline_mode<synchronous>, transform_indices = @transform_14, window_bounds = array<i64: 2, 12>}, {pipeline_mode = #tpu.pipeline_mode<synchronous>, transform_indices = @transform_15, window_bounds = array<i64: 1, 10>}, {pipeline_mode = #tpu.pipeline_mode<synchronous>, transform_indices = @transform_16, window_bounds = array<i64: 2, 10>}]} {
    %c0 = arith.constant 0 : index
    %c0_0 = arith.constant 0 : index
    %0 = vector.load %arg1[%c0, %c0_0] : memref<12x16xf32, #tpu.memory_space<vmem>>, vector<12x16xf32>
    %c0_1 = arith.constant 0 : index
    %c0_2 = arith.constant 0 : index
    %1 = vector.load %arg2[%c0_1, %c0_2] : memref<12x12xf32, #tpu.memory_space<vmem>>, vector<12x12xf32>
    %c0_3 = arith.constant 0 : index
    %c0_4 = arith.constant 0 : index
    %2 = vector.load %arg3[%c0_3, %c0_4] : memref<12x16xf32, #tpu.memory_space<vmem>>, vector<12x16xf32>
    %c0_i32 = arith.constant 0 : i32
    %c10_i32 = arith.constant 10 : i32
    %3 = arith.addi %c0_i32, %c10_i32 : i32
    %c1_i32 = arith.constant 1 : i32
    %4:3 = scf.for %arg18 = %c0_i32 to %3 step %c1_i32 iter_args(%arg19 = %0, %arg20 = %1, %arg21 = %2) -> (vector<12x16xf32>, vector<12x12xf32>, vector<12x16xf32>)  : i32 {
      %17 = vector.shape_cast %arg20 : vector<12x12xf32> to vector<12x12x1xf32>
      %18 = vector.shape_cast %arg20 : vector<12x12xf32> to vector<12x1x12xf32>
      %19 = vector.broadcast %18 : vector<12x1x12xf32> to vector<12x12x12xf32>
      %20 = vector.broadcast %17 : vector<12x12x1xf32> to vector<12x12x12xf32>
      %21 = arith.cmpf oge, %19, %20 : vector<12x12x12xf32>
      %22 = arith.extui %21 : vector<12x12x12xi1> to vector<12x12x12xi32>
      %23 = arith.sitofp %22 : vector<12x12x12xi32> to vector<12x12x12xf32>
      %cst_20 = arith.constant dense<0.000000e+00> : vector<12x12xf32>
      %24 = vector.multi_reduction <add>, %23, %cst_20 [2] : vector<12x12x12xf32> to vector<12x12xf32>
      %cst_21 = arith.constant 0.000000e+00 : f32
      %25 = vector.shape_cast %18 : vector<12x1x12xf32> to vector<12x1x12xf32>
      %26 = vector.broadcast %25 : vector<12x1x12xf32> to vector<12x12x12xf32>
      %27 = vector.broadcast %cst_21 : f32 to vector<12x12x12xf32>
      %28 = arith.select %21, %26, %27 : vector<12x12x12xi1>, vector<12x12x12xf32>
      %cst_22 = arith.constant dense<0.000000e+00> : vector<12x12xf32>
      %29 = vector.multi_reduction <add>, %28, %cst_22 [2] : vector<12x12x12xf32> to vector<12x12xf32>
      %30 = arith.mulf %24, %arg20 : vector<12x12xf32>
      %cst_23 = arith.constant 1.000000e+00 : f32
      %31 = vector.broadcast %cst_23 : f32 to vector<12x12xf32>
      %32 = arith.addf %31, %30 : vector<12x12xf32>
      %33 = arith.cmpf ogt, %32, %29 : vector<12x12xf32>
      %cst_24 = arith.constant 1.000000e+00 : f32
      %cst_25 = arith.constant 0.000000e+00 : f32
      %34 = vector.broadcast %cst_24 : f32 to vector<12x12xf32>
      %35 = vector.broadcast %cst_25 : f32 to vector<12x12xf32>
      %36 = arith.select %33, %34, %35 : vector<12x12xi1>, vector<12x12xf32>
      %cst_26 = arith.constant dense<0.000000e+00> : vector<12xf32>
      %37 = vector.multi_reduction <add>, %36, %cst_26 [1] : vector<12x12xf32> to vector<12xf32>
      %38 = vector.shape_cast %37 : vector<12xf32> to vector<12x1xf32>
      %cst_27 = arith.constant 0.000000e+00 : f32
      %39 = vector.broadcast %cst_27 : f32 to vector<12x12xf32>
      %40 = arith.select %33, %arg20, %39 : vector<12x12xi1>, vector<12x12xf32>
      %cst_28 = arith.constant dense<0.000000e+00> : vector<12xf32>
      %41 = vector.multi_reduction <add>, %40, %cst_28 [1] : vector<12x12xf32> to vector<12xf32>
      %42 = vector.shape_cast %41 : vector<12xf32> to vector<12x1xf32>
      %cst_29 = arith.constant 1.000000e+00 : f32
      %43 = vector.broadcast %cst_29 : f32 to vector<12x1xf32>
      %44 = arith.subf %42, %43 : vector<12x1xf32>
      %45 = tpu.reciprocal %38 {approx = true} : vector<12x1xf32> -> vector<12x1xf32>
      %46 = arith.mulf %44, %45 : vector<12x1xf32>
      %47 = vector.broadcast %46 : vector<12x1xf32> to vector<12x12xf32>
      %48 = arith.subf %arg20, %47 : vector<12x12xf32>
      %cst_30 = arith.constant 0.000000e+00 : f32
      %49 = vector.broadcast %cst_30 : f32 to vector<12x12xf32>
      %50 = arith.maximumf %48, %49 : vector<12x12xf32>
      %cst_31 = arith.constant dense<0.000000e+00> : vector<12x16xf32>
      %51 = tpu.matmul %50, %arg19, %cst_31 {dimension_numbers = #tpu.dot_dimension_numbers<[1], [0], [0], [1], [0, 0, 1, 1], [], []>} : vector<12x12xf32>, vector<12x16xf32>, vector<12x16xf32> -> vector<12x16xf32>
      %c0_32 = arith.constant 0 : index
      %c0_33 = arith.constant 0 : index
      %52 = vector.load %arg5[%c0_32, %c0_33] : memref<16x16xf32, #tpu.memory_space<vmem>>, vector<16x16xf32>
      %cst_34 = arith.constant dense<0.000000e+00> : vector<12x16xf32>
      %53 = tpu.matmul %51, %52, %cst_34 {dimension_numbers = #tpu.dot_dimension_numbers<[1], [0], [0], [1], [0, 0, 1, 1], [], []>} : vector<12x16xf32>, vector<16x16xf32>, vector<12x16xf32> -> vector<12x16xf32>
      %c0_35 = arith.constant 0 : index
      %c0_36 = arith.constant 0 : index
      %54 = vector.load %arg6[%c0_35, %c0_36] : memref<1x16xf32, #tpu.memory_space<vmem>>, vector<1x16xf32>
      %55 = vector.broadcast %54 : vector<1x16xf32> to vector<12x16xf32>
      %56 = arith.addf %53, %55 : vector<12x16xf32>
      %cst_37 = arith.constant 0.000000e+00 : f32
      %57 = vector.broadcast %cst_37 : f32 to vector<12x16xf32>
      %58 = arith.maximumf %56, %57 : vector<12x16xf32>
      %59 = arith.truncf %58 : vector<12x16xf32> to vector<12x16xbf16>
      %c0_38 = arith.constant 0 : index
      %c0_39 = arith.constant 0 : index
      %60 = vector.load %arg7[%c0_38, %c0_39] : memref<16x896xbf16, #tpu.memory_space<vmem>>, vector<16x896xbf16>
      %cst_40 = arith.constant dense<0.000000e+00> : vector<12x896xf32>
      %61 = tpu.matmul %59, %60, %cst_40 {dimension_numbers = #tpu.dot_dimension_numbers<[1], [0], [0], [1], [0, 0, 1, 1], [], []>} : vector<12x16xbf16>, vector<16x896xbf16>, vector<12x896xf32> -> vector<12x896xf32>
      %c0_41 = arith.constant 0 : index
      %c0_42 = arith.constant 0 : index
      %62 = vector.load %arg8[%c0_41, %c0_42] : memref<1x896xf32, #tpu.memory_space<vmem>>, vector<1x896xf32>
      %63 = vector.broadcast %62 : vector<1x896xf32> to vector<12x896xf32>
      %64 = arith.addf %61, %63 : vector<12x896xf32>
      %65 = math.tanh %64 : vector<12x896xf32>
      %66 = arith.truncf %65 : vector<12x896xf32> to vector<12x896xbf16>
      %67 = arith.index_cast %arg18 : i32 to index
      %c0_43 = arith.constant 0 : index
      %c0_44 = arith.constant 0 : index
      %68 = vector.load %arg4[%67, %c0_43, %c0_44] : memref<10x12x896xbf16, #tpu.memory_space<vmem>>, vector<1x12x896xbf16>
      %69 = vector.shape_cast %68 : vector<1x12x896xbf16> to vector<12x896xbf16>
      %70 = arith.mulf %66, %69 : vector<12x896xbf16>
      %c0_45 = arith.constant 0 : index
      %c0_46 = arith.constant 0 : index
      %71 = vector.load %arg9[%c0_45, %c0_46] : memref<896x16xbf16, #tpu.memory_space<vmem>>, vector<896x16xbf16>
      %cst_47 = arith.constant dense<0.000000e+00> : vector<12x16xf32>
      %72 = tpu.matmul %70, %71, %cst_47 {dimension_numbers = #tpu.dot_dimension_numbers<[1], [0], [0], [1], [0, 0, 1, 1], [], []>} : vector<12x896xbf16>, vector<896x16xbf16>, vector<12x16xf32> -> vector<12x16xf32>
      %cst_48 = arith.constant 0.333333343 : f32
      %73 = vector.broadcast %cst_48 : f32 to vector<12x16xf32>
      %74 = arith.mulf %72, %73 : vector<12x16xf32>
      %75 = arith.addf %arg19, %74 : vector<12x16xf32>
      %c0_49 = arith.constant 0 : index
      %c0_50 = arith.constant 0 : index
      %76 = vector.load %arg10[%c0_49, %c0_50] : memref<16x16xf32, #tpu.memory_space<vmem>>, vector<16x16xf32>
      %cst_51 = arith.constant dense<0.000000e+00> : vector<12x16xf32>
      %77 = tpu.matmul %72, %76, %cst_51 {dimension_numbers = #tpu.dot_dimension_numbers<[1], [0], [0], [1], [0, 0, 1, 1], [], []>} : vector<12x16xf32>, vector<16x16xf32>, vector<12x16xf32> -> vector<12x16xf32>
      %cst_52 = arith.constant 0.333333343 : f32
      %78 = vector.broadcast %cst_52 : f32 to vector<12x16xf32>
      %79 = arith.mulf %77, %78 : vector<12x16xf32>
      %80 = arith.addf %arg21, %79 : vector<12x16xf32>
      %81 = tpu.concatenate %77, %80, %72 in 1 : vector<12x16xf32>, vector<12x16xf32>, vector<12x16xf32> -> vector<12x48xf32>
      %c0_53 = arith.constant 0 : index
      %c0_54 = arith.constant 0 : index
      %82 = vector.load %arg11[%c0_53, %c0_54] : memref<12x16xf32, #tpu.memory_space<vmem>>, vector<12x16xf32>
      %83 = tpu.concatenate %75, %72, %82 in 1 : vector<12x16xf32>, vector<12x16xf32>, vector<12x16xf32> -> vector<12x48xf32>
      %cst_55 = arith.constant dense<0.000000e+00> : vector<12x12xf32>
      %84 = tpu.matmul %81, %83, %cst_55 {dimension_numbers = #tpu.dot_dimension_numbers<[1], [1], [0], [0], [0, 0, 1, 0], [], []>} : vector<12x48xf32>, vector<12x48xf32>, vector<12x12xf32> -> vector<12x12xf32>
      %cst_56 = arith.constant 0.055555556 : f32
      %85 = vector.broadcast %cst_56 : f32 to vector<12x12xf32>
      %86 = arith.mulf %84, %85 : vector<12x12xf32>
      %87 = arith.addf %arg20, %86 : vector<12x12xf32>
      scf.yield %75, %87, %80 : vector<12x16xf32>, vector<12x12xf32>, vector<12x16xf32>
    }
    %c10_i32_5 = arith.constant 10 : i32
    %c0_6 = arith.constant 0 : index
    %c0_7 = arith.constant 0 : index
    %5 = vector.load %arg12[%c0_6, %c0_7] : memref<16x60xf32, #tpu.memory_space<vmem>>, vector<16x60xf32>
    %cst = arith.constant dense<0.000000e+00> : vector<12x60xf32>
    %6 = tpu.matmul %4#0, %5, %cst {dimension_numbers = #tpu.dot_dimension_numbers<[1], [0], [0], [1], [0, 0, 1, 1], [], []>} : vector<12x16xf32>, vector<16x60xf32>, vector<12x60xf32> -> vector<12x60xf32>
    %c0_8 = arith.constant 0 : index
    %c0_9 = arith.constant 0 : index
    %7 = vector.load %arg13[%c0_8, %c0_9] : memref<12x60xf32, #tpu.memory_space<vmem>>, vector<12x60xf32>
    %8 = arith.mulf %6, %7 : vector<12x60xf32>
    %c0_10 = arith.constant 0 : index
    %c0_11 = arith.constant 0 : index
    %9 = vector.load %arg14[%c0_10, %c0_11] : memref<60x10xf32, #tpu.memory_space<vmem>>, vector<60x10xf32>
    %cst_12 = arith.constant dense<0.000000e+00> : vector<12x10xf32>
    %10 = tpu.matmul %8, %9, %cst_12 {dimension_numbers = #tpu.dot_dimension_numbers<[1], [0], [0], [1], [0, 0, 1, 1], [], []>} : vector<12x60xf32>, vector<60x10xf32>, vector<12x10xf32> -> vector<12x10xf32>
    %c0_13 = arith.constant 0 : index
    %c0_14 = arith.constant 0 : index
    %11 = vector.load %arg15[%c0_13, %c0_14] : memref<2x12xf32, #tpu.memory_space<vmem>>, vector<2x12xf32>
    %cst_15 = arith.constant dense<0.000000e+00> : vector<2x10xf32>
    %12 = tpu.matmul %11, %10, %cst_15 {dimension_numbers = #tpu.dot_dimension_numbers<[1], [0], [0], [1], [0, 0, 1, 1], [], []>} : vector<2x12xf32>, vector<12x10xf32>, vector<2x10xf32> -> vector<2x10xf32>
    %c0_16 = arith.constant 0 : index
    %c0_17 = arith.constant 0 : index
    %13 = vector.load %arg16[%c0_16, %c0_17] : memref<1x10xf32, #tpu.memory_space<vmem>>, vector<1x10xf32>
    %14 = vector.broadcast %13 : vector<1x10xf32> to vector<2x10xf32>
    %15 = arith.addf %12, %14 : vector<2x10xf32>
    %c0_18 = arith.constant 0 : index
    %c0_19 = arith.constant 0 : index
    %16 = vector.load %arg17[%c0_18, %c0_19] : memref<2x10xf32, #tpu.memory_space<vmem>>, vector<2x10xf32>
    tpu.vector_store %arg17[%c0_18, %c0_19], %15 {strides = array<i32>} : memref<2x10xf32, #tpu.memory_space<vmem>>, vector<2x10xf32>,
    return
  }
  func.func @transform_0(%arg0: i32) -> (i32, i32) {
    %c0_i32 = arith.constant 0 : i32
    %c0_i32_0 = arith.constant 0 : i32
    %c0_i32_1 = arith.constant 0 : i32
    return %c0_i32, %c0_i32_0 : i32, i32
  }
  func.func @transform_1(%arg0: i32) -> (i32, i32) {
    %c0_i32 = arith.constant 0 : i32
    %c0_i32_0 = arith.constant 0 : i32
    %c0_i32_1 = arith.constant 0 : i32
    return %c0_i32, %c0_i32_0 : i32, i32
  }
  func.func @transform_2(%arg0: i32) -> (i32, i32) {
    %c0_i32 = arith.constant 0 : i32
    %c0_i32_0 = arith.constant 0 : i32
    %c0_i32_1 = arith.constant 0 : i32
    return %c0_i32, %c0_i32_0 : i32, i32
  }
  func.func @transform_3(%arg0: i32) -> (i32, i32, i32) {
    %c0_i32 = arith.constant 0 : i32
    %c0_i32_0 = arith.constant 0 : i32
    %c0_i32_1 = arith.constant 0 : i32
    %c0_i32_2 = arith.constant 0 : i32
    return %c0_i32, %c0_i32_0, %c0_i32_1 : i32, i32, i32
  }
  func.func @transform_4(%arg0: i32) -> (i32, i32) {
    %c0_i32 = arith.constant 0 : i32
    %c0_i32_0 = arith.constant 0 : i32
    %c0_i32_1 = arith.constant 0 : i32
    return %c0_i32, %c0_i32_0 : i32, i32
  }
  func.func @transform_5(%arg0: i32) -> (i32, i32) {
    %c0_i32 = arith.constant 0 : i32
    %c0_i32_0 = arith.constant 0 : i32
    %c0_i32_1 = arith.constant 0 : i32
    return %c0_i32, %c0_i32_0 : i32, i32
  }
  func.func @transform_6(%arg0: i32) -> (i32, i32) {
    %c0_i32 = arith.constant 0 : i32
    %c0_i32_0 = arith.constant 0 : i32
    %c0_i32_1 = arith.constant 0 : i32
    return %c0_i32, %c0_i32_0 : i32, i32
  }
  func.func @transform_7(%arg0: i32) -> (i32, i32) {
    %c0_i32 = arith.constant 0 : i32
    %c0_i32_0 = arith.constant 0 : i32
    %c0_i32_1 = arith.constant 0 : i32
    return %c0_i32, %c0_i32_0 : i32, i32
  }
  func.func @transform_8(%arg0: i32) -> (i32, i32) {
    %c0_i32 = arith.constant 0 : i32
    %c0_i32_0 = arith.constant 0 : i32
    %c0_i32_1 = arith.constant 0 : i32
    return %c0_i32, %c0_i32_0 : i32, i32
  }
  func.func @transform_9(%arg0: i32) -> (i32, i32) {
    %c0_i32 = arith.constant 0 : i32
    %c0_i32_0 = arith.constant 0 : i32
    %c0_i32_1 = arith.constant 0 : i32
    return %c0_i32, %c0_i32_0 : i32, i32
  }
  func.func @transform_10(%arg0: i32) -> (i32, i32) {
    %c0_i32 = arith.constant 0 : i32
    %c0_i32_0 = arith.constant 0 : i32
    %c0_i32_1 = arith.constant 0 : i32
    return %c0_i32, %c0_i32_0 : i32, i32
  }
  func.func @transform_11(%arg0: i32) -> (i32, i32) {
    %c0_i32 = arith.constant 0 : i32
    %c0_i32_0 = arith.constant 0 : i32
    %c0_i32_1 = arith.constant 0 : i32
    return %c0_i32, %c0_i32_0 : i32, i32
  }
  func.func @transform_12(%arg0: i32) -> (i32, i32) {
    %c0_i32 = arith.constant 0 : i32
    %c0_i32_0 = arith.constant 0 : i32
    %c0_i32_1 = arith.constant 0 : i32
    return %c0_i32, %c0_i32_0 : i32, i32
  }
  func.func @transform_13(%arg0: i32) -> (i32, i32) {
    %c0_i32 = arith.constant 0 : i32
    %c0_i32_0 = arith.constant 0 : i32
    %c0_i32_1 = arith.constant 0 : i32
    return %c0_i32, %c0_i32_0 : i32, i32
  }
  func.func @transform_14(%arg0: i32) -> (i32, i32) {
    %c0_i32 = arith.constant 0 : i32
    %c0_i32_0 = arith.constant 0 : i32
    %c0_i32_1 = arith.constant 0 : i32
    return %c0_i32, %c0_i32_0 : i32, i32
  }
  func.func @transform_15(%arg0: i32) -> (i32, i32) {
    %c0_i32 = arith.constant 0 : i32
    %c0_i32_0 = arith.constant 0 : i32
    %c0_i32_1 = arith.constant 0 : i32
    return %c0_i32, %c0_i32_0 : i32, i32
  }
  func.func @transform_16(%arg0: i32) -> (i32, i32) {
    %c0_i32 = arith.constant 0 : i32
    %c0_i32_0 = arith.constant 0 : i32
    %c0_i32_1 = arith.constant 0 : i32
    return %c0_i32, %c0_i32_0 : i32, i32
  }
}

</mosaic_0001>

<llo_original>
// kernel: tpu_custom_call.1
$region0: #{tpu_custom_call.1}
  #allocation0 [shape = 'u32[]', space=smem, size = 0x4, offset = 0x4, fixed_abs, tag = 'smem constant byte address 0x4 - core index']
  #allocation1 [shape = 'u32[144,128]{1,0:T(1,128)}', space=vmem, size = 0x12000, scoped, tag = 'internal scratch']
  %s0 = inlined_call_operand.vmem [shape: f32[12,16], index: 0, kind: input, shape index: {}]
  %s1 = inlined_call_operand.vmem [shape: f32[12,12], index: 1, kind: input, shape index: {}]
  %s2 = inlined_call_operand.hbm [shape: f32[12,16], index: 2, kind: input, shape index: {}]
  %s3 = inlined_call_operand.vmem [shape: bf16[10,12,896], index: 3, kind: input, shape index: {}]
  %s4 = inlined_call_operand.hbm [shape: f32[16,16], index: 4, kind: input, shape index: {}]
  %s5 = inlined_call_operand.vmem [shape: f32[1,16], index: 5, kind: input, shape index: {}]
  %s6 = inlined_call_operand.hbm [shape: bf16[16,896], index: 6, kind: input, shape index: {}]
  %s7 = inlined_call_operand.hbm [shape: f32[1,896], index: 7, kind: input, shape index: {}]
  %s8 = inlined_call_operand.vmem [shape: bf16[896,16], index: 8, kind: input, shape index: {}]
  %s9 = inlined_call_operand.vmem [shape: f32[16,16], index: 9, kind: input, shape index: {}]
  %s10 = inlined_call_operand.hbm [shape: f32[12,16], index: 10, kind: input, shape index: {}]
  %s11 = inlined_call_operand.hbm [shape: f32[16,60], index: 11, kind: input, shape index: {}]
  %s12 = inlined_call_operand.vmem [shape: f32[12,60], index: 12, kind: input, shape index: {}]
  %s13 = inlined_call_operand.vmem [shape: f32[60,10], index: 13, kind: input, shape index: {}]
  %s14 = inlined_call_operand.vmem [shape: f32[2,12], index: 14, kind: input, shape index: {}]
  %s15 = inlined_call_operand.vmem [shape: f32[1,10], index: 15, kind: input, shape index: {}]
  %s16 = inlined_call_operand.hbm [shape: f32[2,10], index: 16, kind: output, shape index: {}]
  %s17 = sld [smem:[#allocation0]]
  $region105: #{tpu_custom_call.1} parent=0
    _
  %s19 = ssub.s32 1, %s17
  %s20 = scalar_select 0, %s19, %s17
  $region1: #{tpu_custom_call.1} parent=0
    #allocation2 [shape = 'u8[8192]{0}', space=vmem, size = 0x2000, scoped, tag = 'input window, operand 2, single buffered']
    #allocation3 [shape = 's32[1]{0}', space=sflag, size = 0x4, scoped, tag = 'scoped memory for tpu_custom_call.1']
    #allocation4 [shape = 's32[1]{0}', space=sflag, size = 0x4, scoped, tag = 'scoped memory for tpu_custom_call.1']
    #allocation5 [shape = 'u8[8192]{0}', space=vmem, size = 0x2000, scoped, tag = 'input window, operand 4, single buffered']
    #allocation6 [shape = 's32[1]{0}', space=sflag, size = 0x4, scoped, tag = 'scoped memory for tpu_custom_call.1']
    #allocation7 [shape = 'u8[28672]{0}', space=vmem, size = 0x7000, scoped, tag = 'input window, operand 6, single buffered']
    #allocation8 [shape = 'u8[3584]{0}', space=vmem, size = 0x1000, scoped, tag = 'input window, operand 7, single buffered']
    #allocation9 [shape = 's32[1]{0}', space=sflag, size = 0x4, scoped, tag = 'scoped memory for tpu_custom_call.1']
    #allocation10 [shape = 'u8[8192]{0}', space=vmem, size = 0x2000, scoped, tag = 'input window, operand 10, single buffered']
    #allocation11 [shape = 'u8[8192]{0}', space=vmem, size = 0x2000, scoped, tag = 'input window, operand 11, single buffered']
    #allocation12 [shape = 's32[1]{0}', space=sflag, size = 0x4, scoped, tag = 'scoped memory for tpu_custom_call.1']
    #allocation13 [shape = 'u8[1024]{0}', space=vmem, size = 0x400, scoped, tag = 'output window, operand 0, single buffered']
    %21 = vsyncpa [#allocation3], 0
    %22 = vsyncpa [#allocation6], 0
    %23 = vsyncpa [#allocation9], 0
    %24 = vsyncpa [#allocation12], 0
    %25 = vsyncpa [#allocation4], 0
    // Predicated region
    $region2: #{tpu_custom_call.1} parent=1 // pred_check
      _
    $region3: #{tpu_custom_call.1} parent=1 // pred_check_branch
      %27 = sbr.rel (0) target = $region5
    $region4: #{tpu_custom_call.1} parent=1 // pred_region
      _
    $region5: #{tpu_custom_call.1} parent=1 // pred_fallthru
      _
    // Predicated region
    $region6: #{tpu_custom_call.1} parent=1 // pred_check
      _
    $region7: #{tpu_custom_call.1} parent=1 // pred_check_branch
      %29 = sbr.rel (0) target = $region9
    $region8: #{tpu_custom_call.1} parent=1 // pred_region
      _
    $region9: #{tpu_custom_call.1} parent=1 // pred_fallthru
      _
    // Predicated region
    $region10: #{tpu_custom_call.1} parent=1 // pred_check
      _
    $region11: #{tpu_custom_call.1} parent=1 // pred_check_branch
      %31 = sbr.rel (0) target = $region13
    $region12: #{tpu_custom_call.1} parent=1 // pred_region
      %s33 = ssub.s32 256, 256
      %34 = vsyncadd [#allocation3], %s33
      %s35 = sshll.u32 [#allocation2], 4
      %s36 = int_to_ptr.vmem [resolvable:$true] %s35
      %41 = dma.hbm_to_vmem [thread:$0]  %s2, 256, %s36, [#allocation3], 128, 128, 8
    $region13: #{tpu_custom_call.1} parent=1 // pred_fallthru
      _
    // Predicated region
    $region14: #{tpu_custom_call.1} parent=1 // pred_check
      _
    $region15: #{tpu_custom_call.1} parent=1 // pred_check_branch
      %43 = sbr.rel (0) target = $region17
    $region16: #{tpu_custom_call.1} parent=1 // pred_region
      _
    $region17: #{tpu_custom_call.1} parent=1 // pred_fallthru
      _
    // Predicated region
    $region18: #{tpu_custom_call.1} parent=1 // pred_check
      _
    $region19: #{tpu_custom_call.1} parent=1 // pred_check_branch
      %45 = sbr.rel (0) target = $region21
    $region20: #{tpu_custom_call.1} parent=1 // pred_region
      %s47 = ssub.s32 256, 256
      %48 = vsyncadd [#allocation6], %s47
      %s49 = sshll.u32 [#allocation5], 4
      %s50 = int_to_ptr.vmem [resolvable:$true] %s49
      %55 = dma.hbm_to_vmem [thread:$0]  %s4, 256, %s50, [#allocation6], 128, 128, 8
    $region21: #{tpu_custom_call.1} parent=1 // pred_fallthru
      _
    // Predicated region
    $region22: #{tpu_custom_call.1} parent=1 // pred_check
      _
    $region23: #{tpu_custom_call.1} parent=1 // pred_check_branch
      %57 = sbr.rel (0) target = $region25
    $region24: #{tpu_custom_call.1} parent=1 // pred_region
      _
    $region25: #{tpu_custom_call.1} parent=1 // pred_fallthru
      _
    // Predicated region
    $region26: #{tpu_custom_call.1} parent=1 // pred_check
      _
    $region27: #{tpu_custom_call.1} parent=1 // pred_check_branch
      %59 = sbr.rel (0) target = $region29
    $region28: #{tpu_custom_call.1} parent=1 // pred_region
      %s61 = ssub.s32 896, 896
      %62 = vsyncadd [#allocation6], %s61
      %s63 = sshll.u32 [#allocation7], 4
      %s64 = int_to_ptr.vmem [resolvable:$true] %s63
      %69 = dma.hbm_to_vmem [thread:$0]  %s6, 896, %s64, [#allocation6], 448, 448, 28
    $region29: #{tpu_custom_call.1} parent=1 // pred_fallthru
      _
    // Predicated region
    $region30: #{tpu_custom_call.1} parent=1 // pred_check
      _
    $region31: #{tpu_custom_call.1} parent=1 // pred_check_branch
      %71 = sbr.rel (0) target = $region33
    $region32: #{tpu_custom_call.1} parent=1 // pred_region
      %s73 = ssub.s32 112, 112
      %74 = vsyncadd [#allocation9], %s73
      %s76 = sshll.u32 [#allocation8], 4
      %s77 = int_to_ptr.vmem [resolvable:$true] %s76
      %79 = dma.hbm_to_vmem [thread:$0]  %s7, 112, %s77, [#allocation9]
    $region33: #{tpu_custom_call.1} parent=1 // pred_fallthru
      _
    // Predicated region
    $region34: #{tpu_custom_call.1} parent=1 // pred_check
      _
    $region35: #{tpu_custom_call.1} parent=1 // pred_check_branch
      %81 = sbr.rel (0) target = $region37
    $region36: #{tpu_custom_call.1} parent=1 // pred_region
      _
    $region37: #{tpu_custom_call.1} parent=1 // pred_fallthru
      _
    // Predicated region
    $region38: #{tpu_custom_call.1} parent=1 // pred_check
      _
    $region39: #{tpu_custom_call.1} parent=1 // pred_check_branch
      %83 = sbr.rel (0) target = $region41
    $region40: #{tpu_custom_call.1} parent=1 // pred_region
      _
    $region41: #{tpu_custom_call.1} parent=1 // pred_fallthru
      _
    // Predicated region
    $region42: #{tpu_custom_call.1} parent=1 // pred_check
      _
    $region43: #{tpu_custom_call.1} parent=1 // pred_check_branch
      %85 = sbr.rel (0) target = $region45
    $region44: #{tpu_custom_call.1} parent=1 // pred_region
      %s87 = ssub.s32 256, 256
      %88 = vsyncadd [#allocation9], %s87
      %s89 = sshll.u32 [#allocation10], 4
      %s90 = int_to_ptr.vmem [resolvable:$true] %s89
      %95 = dma.hbm_to_vmem [thread:$0]  %s10, 256, %s90, [#allocation9], 128, 128, 8
    $region45: #{tpu_custom_call.1} parent=1 // pred_fallthru
      _
    // Predicated region
    $region46: #{tpu_custom_call.1} parent=1 // pred_check
      _
    $region47: #{tpu_custom_call.1} parent=1 // pred_check_branch
      %97 = sbr.rel (0) target = $region49
    $region48: #{tpu_custom_call.1} parent=1 // pred_region
      %s99 = ssub.s32 256, 256
      %100 = vsyncadd [#allocation12], %s99
      %s101 = sshll.u32 [#allocation11], 4
      %s102 = int_to_ptr.vmem [resolvable:$true] %s101
      %107 = dma.hbm_to_vmem [thread:$0]  %s11, 256, %s102, [#allocation12], 128, 128, 8
    $region49: #{tpu_custom_call.1} parent=1 // pred_fallthru
      _
    // Predicated region
    $region50: #{tpu_custom_call.1} parent=1 // pred_check
      _
    $region51: #{tpu_custom_call.1} parent=1 // pred_check_branch
      %109 = sbr.rel (0) target = $region53
    $region52: #{tpu_custom_call.1} parent=1 // pred_region
      _
    $region53: #{tpu_custom_call.1} parent=1 // pred_fallthru
      _
    // Predicated region
    $region54: #{tpu_custom_call.1} parent=1 // pred_check
      _
    $region55: #{tpu_custom_call.1} parent=1 // pred_check_branch
      %111 = sbr.rel (0) target = $region57
    $region56: #{tpu_custom_call.1} parent=1 // pred_region
      _
    $region57: #{tpu_custom_call.1} parent=1 // pred_fallthru
      _
    // Predicated region
    $region58: #{tpu_custom_call.1} parent=1 // pred_check
      _
    $region59: #{tpu_custom_call.1} parent=1 // pred_check_branch
      %113 = sbr.rel (0) target = $region61
    $region60: #{tpu_custom_call.1} parent=1 // pred_region
      _
    $region61: #{tpu_custom_call.1} parent=1 // pred_fallthru
      _
    // Predicated region
    $region62: #{tpu_custom_call.1} parent=1 // pred_check
      _
    $region63: #{tpu_custom_call.1} parent=1 // pred_check_branch
      %115 = sbr.rel (0) target = $region65
    $region64: #{tpu_custom_call.1} parent=1 // pred_region
      _
    $region65: #{tpu_custom_call.1} parent=1 // pred_fallthru
      _
    // Predicated region
    $region66: #{tpu_custom_call.1} parent=1 // pred_check
      _
    $region67: #{tpu_custom_call.1} parent=1 // pred_check_branch
      %117 = sbr.rel (0) target = $region69
    $region68: #{tpu_custom_call.1} parent=1 // pred_region
      %118 = dma.done [#allocation3], 256
    $region69: #{tpu_custom_call.1} parent=1 // pred_fallthru
      _
    // Predicated region
    $region70: #{tpu_custom_call.1} parent=1 // pred_check
      _
    $region71: #{tpu_custom_call.1} parent=1 // pred_check_branch
      %120 = sbr.rel (0) target = $region73
    $region72: #{tpu_custom_call.1} parent=1 // pred_region
      %121 = dma.done [#allocation6], 256
    $region73: #{tpu_custom_call.1} parent=1 // pred_fallthru
      _
    // Predicated region
    $region74: #{tpu_custom_call.1} parent=1 // pred_check
      _
    $region75: #{tpu_custom_call.1} parent=1 // pred_check_branch
      %123 = sbr.rel (0) target = $region77
    $region76: #{tpu_custom_call.1} parent=1 // pred_region
      %124 = dma.done [#allocation6], 896
    $region77: #{tpu_custom_call.1} parent=1 // pred_fallthru
      _
    // Predicated region
    $region78: #{tpu_custom_call.1} parent=1 // pred_check
      _
    $region79: #{tpu_custom_call.1} parent=1 // pred_check_branch
      %126 = sbr.rel (0) target = $region81
    $region80: #{tpu_custom_call.1} parent=1 // pred_region
      %127 = dma.done [#allocation9], 112
    $region81: #{tpu_custom_call.1} parent=1 // pred_fallthru
      _
    // Predicated region
    $region82: #{tpu_custom_call.1} parent=1 // pred_check
      _
    $region83: #{tpu_custom_call.1} parent=1 // pred_check_branch
      %129 = sbr.rel (0) target = $region85
    $region84: #{tpu_custom_call.1} parent=1 // pred_region
      %130 = dma.done [#allocation9], 256
    $region85: #{tpu_custom_call.1} parent=1 // pred_fallthru
      _
    // Predicated region
    $region86: #{tpu_custom_call.1} parent=1 // pred_check
      _
    $region87: #{tpu_custom_call.1} parent=1 // pred_check_branch
      %132 = sbr.rel (0) target = $region89
    $region88: #{tpu_custom_call.1} parent=1 // pred_region
      %133 = dma.done [#allocation12], 256
    $region89: #{tpu_custom_call.1} parent=1 // pred_fallthru
      _
    %v135 = vld [vmem:[%s0] sm:$0xff]
    %v136 = vld [vmem:[%s0 + $0x8] sm:$0xf]
    %v137 = vld [vmem:[%s1] sm:$0xff]
    %v138 = vld [vmem:[%s1 + $0x8] sm:$0xf]
    %v139 = vld [vmem:[#allocation2] sm:$0xff]
    %v140 = vld [vmem:[#allocation2 + $0x8] sm:$0xf]
    loop: start=0, step=1, limit=10
    $region90: #{tpu_custom_call.1} parent=1 // loop_pre_header
      _
    $region91: #{tpu_custom_call.1} parent=1 // loop_header
      %s142 = sphi 0, %s146
      %p143 = scmp.ge.s32.totalorder %s142, 10
      %v147 = vphi %v135, %v2525
      %v148 = vphi %v136, %v2526
      %v149 = vphi %v137, %v2743
      %v150 = vphi %v138, %v2744
      %v151 = vphi %v139, %v2612
      %v152 = vphi %v140, %v2613
    $region92: #{tpu_custom_call.1} parent=1 // loop_header_branch
      %145 = sbr.rel (%p143) target = $region96
    $region93: #{tpu_custom_call.1} parent=1 // loop_body
      %v153 = vlaneseq
      %v154 = vshrl.u32 %v153, 7
      %v155 = vsub.s32 0, %v154
      %v156 = vrot.slane %v149, %v155
      %158 = vbcast.lane.b32.xlu0 %v156, 256
      %v159 = vpop.permute.xlu0 %158
      %s161 = sor.u32 256, 8
      %162 = vbcast.lane.b32.xlu0 %v156, %s161
      %v163 = vpop.permute.xlu0 %162
      %v164 = vlaneseq
      %v165 = vshrl.u32 %v164, 7
      %v166 = vsub.s32 1, %v165
      %v167 = vrot.slane %v149, %v166
      %169 = vbcast.lane.b32.xlu0 %v167, 256
      %v170 = vpop.permute.xlu0 %169
      %s172 = sor.u32 256, 8
      %173 = vbcast.lane.b32.xlu0 %v167, %s172
      %v174 = vpop.permute.xlu0 %173
      %v175 = vlaneseq
      %v176 = vshrl.u32 %v175, 7
      %v177 = vsub.s32 2, %v176
      %v178 = vrot.slane %v149, %v177
      %180 = vbcast.lane.b32.xlu0 %v178, 256
      %v181 = vpop.permute.xlu0 %180
      %s183 = sor.u32 256, 8
      %184 = vbcast.lane.b32.xlu0 %v178, %s183
      %v185 = vpop.permute.xlu0 %184
      %v186 = vlaneseq
      %v187 = vshrl.u32 %v186, 7
      %v188 = vsub.s32 3, %v187
      %v189 = vrot.slane %v149, %v188
      %191 = vbcast.lane.b32.xlu0 %v189, 256
      %v192 = vpop.permute.xlu0 %191
      %s194 = sor.u32 256, 8
      %195 = vbcast.lane.b32.xlu0 %v189, %s194
      %v196 = vpop.permute.xlu0 %195
      %v197 = vlaneseq
      %v198 = vshrl.u32 %v197, 7
      %v199 = vsub.s32 4, %v198
      %v200 = vrot.slane %v149, %v199
      %202 = vbcast.lane.b32.xlu0 %v200, 256
      %v203 = vpop.permute.xlu0 %202
      %s205 = sor.u32 256, 8
      %206 = vbcast.lane.b32.xlu0 %v200, %s205
      %v207 = vpop.permute.xlu0 %206
      %v208 = vlaneseq
      %v209 = vshrl.u32 %v208, 7
      %v210 = vsub.s32 5, %v209
      %v211 = vrot.slane %v149, %v210
      %213 = vbcast.lane.b32.xlu0 %v211, 256
      %v214 = vpop.permute.xlu0 %213
      %s216 = sor.u32 256, 8
      %217 = vbcast.lane.b32.xlu0 %v211, %s216
      %v218 = vpop.permute.xlu0 %217
      %v219 = vlaneseq
      %v220 = vshrl.u32 %v219, 7
      %v221 = vsub.s32 6, %v220
      %v222 = vrot.slane %v149, %v221
      %224 = vbcast.lane.b32.xlu0 %v222, 256
      %v225 = vpop.permute.xlu0 %224
      %s227 = sor.u32 256, 8
      %228 = vbcast.lane.b32.xlu0 %v222, %s227
      %v229 = vpop.permute.xlu0 %228
      %v230 = vlaneseq
      %v231 = vshrl.u32 %v230, 7
      %v232 = vsub.s32 7, %v231
      %v233 = vrot.slane %v149, %v232
      %235 = vbcast.lane.b32.xlu0 %v233, 256
      %v236 = vpop.permute.xlu0 %235
      %s238 = sor.u32 256, 8
      %239 = vbcast.lane.b32.xlu0 %v233, %s238
      %v240 = vpop.permute.xlu0 %239
      %v241 = vlaneseq
      %v242 = vshrl.u32 %v241, 7
      %v243 = vsub.s32 0, %v242
      %v244 = vrot.slane %v150, %v243
      %246 = vbcast.lane.b32.xlu0 %v244, 256
      %v247 = vpop.permute.xlu0 %246
      %s249 = sor.u32 256, 8
      %250 = vbcast.lane.b32.xlu0 %v244, %s249
      %v251 = vpop.permute.xlu0 %250
      %v252 = vlaneseq
      %v253 = vshrl.u32 %v252, 7
      %v254 = vsub.s32 1, %v253
      %v255 = vrot.slane %v150, %v254
      %257 = vbcast.lane.b32.xlu0 %v255, 256
      %v258 = vpop.permute.xlu0 %257
      %s260 = sor.u32 256, 8
      %261 = vbcast.lane.b32.xlu0 %v255, %s260
      %v262 = vpop.permute.xlu0 %261
      %v263 = vlaneseq
      %v264 = vshrl.u32 %v263, 7
      %v265 = vsub.s32 2, %v264
      %v266 = vrot.slane %v150, %v265
      %268 = vbcast.lane.b32.xlu0 %v266, 256
      %v269 = vpop.permute.xlu0 %268
      %s271 = sor.u32 256, 8
      %272 = vbcast.lane.b32.xlu0 %v266, %s271
      %v273 = vpop.permute.xlu0 %272
      %v274 = vlaneseq
      %v275 = vshrl.u32 %v274, 7
      %v276 = vsub.s32 3, %v275
      %v277 = vrot.slane %v150, %v276
      %279 = vbcast.lane.b32.xlu0 %v277, 256
      %v280 = vpop.permute.xlu0 %279
      %s282 = sor.u32 256, 8
      %283 = vbcast.lane.b32.xlu0 %v277, %s282
      %v284 = vpop.permute.xlu0 %283
      %v287 = vcombine.high %v149, %v149
      %v289 = vunpack.c.l.s4 1966171168
      %v290 = vunpack.c.0.s8 %v289
      %v291 = vlaneseq
      %v292 = vshrl.u32 %v291, 7
      %v293 = vsub.s32 %v290, %v292
      %v294 = vrot.slane %v149, %v293
      %v296 = vunpack.c.l.s4 1966171168
      %v297 = vunpack.c.0.s8 %v296
      %v298 = vlaneseq
      %v299 = vshrl.u32 %v298, 7
      %v300 = vsub.s32 %v297, %v299
      %v301 = vrot.slane %v287, %v300
      %v302 = vcombine.high %v294, %v294
      %v303 = vcombine.high %v301, %v301
      %v305 = vunpack.c.l.s4 1966171168
      %v306 = vunpack.c.0.s8 %v305
      %v307 = vlaneseq
      %v308 = vshrl.u32 %v307, 7
      %v309 = vsub.s32 %v306, %v308
      %v310 = vrot.slane %v294, %v309
      %v312 = vunpack.c.l.s4 1966171168
      %v313 = vunpack.c.0.s8 %v312
      %v314 = vlaneseq
      %v315 = vshrl.u32 %v314, 7
      %v316 = vsub.s32 %v313, %v315
      %v317 = vrot.slane %v301, %v316
      %v319 = vunpack.c.l.s4 1966171168
      %v320 = vunpack.c.0.s8 %v319
      %v321 = vlaneseq
      %v322 = vshrl.u32 %v321, 7
      %v323 = vsub.s32 %v320, %v322
      %v324 = vrot.slane %v302, %v323
      %v326 = vunpack.c.l.s4 1966171168
      %v327 = vunpack.c.0.s8 %v326
      %v328 = vlaneseq
      %v329 = vshrl.u32 %v328, 7
      %v330 = vsub.s32 %v327, %v329
      %v331 = vrot.slane %v303, %v330
      %v332 = vcombine.high %v310, %v310
      %v333 = vcombine.high %v317, %v317
      %v334 = vcombine.high %v324, %v324
      %v335 = vcombine.high %v331, %v331
      %v337 = vunpack.c.l.s4 1966171168
      %v338 = vunpack.c.0.s8 %v337
      %v339 = vlaneseq
      %v340 = vshrl.u32 %v339, 7
      %v341 = vsub.s32 %v338, %v340
      %v342 = vrot.slane %v150, %v341
      %v343 = vcombine.high %v342, %v342
      %v345 = vunpack.c.l.s4 1966171168
      %v346 = vunpack.c.0.s8 %v345
      %v347 = vlaneseq
      %v348 = vshrl.u32 %v347, 7
      %v349 = vsub.s32 %v346, %v348
      %v350 = vrot.slane %v342, %v349
      %v352 = vunpack.c.l.s4 1966171168
      %v353 = vunpack.c.0.s8 %v352
      %v354 = vlaneseq
      %v355 = vshrl.u32 %v354, 7
      %v356 = vsub.s32 %v353, %v355
      %v357 = vrot.slane %v343, %v356
      %v358 = vcombine.high %v350, %v350
      %v359 = vcombine.high %v357, %v357
      %v360 = vlaneseq
      %v361 = vshrl.u32 %v360, 7
      %v362 = vsub.s32 0, %v361
      %v363 = vrot.slane %v310, %v362
      %v364 = vlaneseq
      %v365 = vshrl.u32 %v364, 7
      %v366 = vsub.s32 0, %v365
      %v367 = vrot.slane %v324, %v366
      %v368 = vlaneseq
      %v369 = vshrl.u32 %v368, 7
      %v370 = vsub.s32 0, %v369
      %v371 = vrot.slane %v332, %v370
      %v372 = vlaneseq
      %v373 = vshrl.u32 %v372, 7
      %v374 = vsub.s32 0, %v373
      %v375 = vrot.slane %v334, %v374
      %v376 = vlaneseq
      %v377 = vshrl.u32 %v376, 7
      %v378 = vsub.s32 0, %v377
      %v379 = vrot.slane %v317, %v378
      %v380 = vlaneseq
      %v381 = vshrl.u32 %v380, 7
      %v382 = vsub.s32 0, %v381
      %v383 = vrot.slane %v331, %v382
      %v384 = vlaneseq
      %v385 = vshrl.u32 %v384, 7
      %v386 = vsub.s32 0, %v385
      %v387 = vrot.slane %v333, %v386
      %v388 = vlaneseq
      %v389 = vshrl.u32 %v388, 7
      %v390 = vsub.s32 0, %v389
      %v391 = vrot.slane %v335, %v390
      %v392 = vlaneseq
      %v393 = vshrl.u32 %v392, 7
      %v394 = vsub.s32 0, %v393
      %v395 = vrot.slane %v350, %v394
      %v396 = vlaneseq
      %v397 = vshrl.u32 %v396, 7
      %v398 = vsub.s32 0, %v397
      %v399 = vrot.slane %v357, %v398
      %v400 = vlaneseq
      %v401 = vshrl.u32 %v400, 7
      %v402 = vsub.s32 0, %v401
      %v403 = vrot.slane %v358, %v402
      %v404 = vlaneseq
      %v405 = vshrl.u32 %v404, 7
      %v406 = vsub.s32 0, %v405
      %v407 = vrot.slane %v359, %v406
      %vm420 = vcmp.ge.f32.partialorder %v363, %v159
      %vm421 = vcmp.ge.f32.partialorder %v363, %v163
      %vm422 = vcmp.ge.f32.partialorder %v367, %v170
      %vm423 = vcmp.ge.f32.partialorder %v367, %v174
      %vm424 = vcmp.ge.f32.partialorder %v371, %v181
      %vm425 = vcmp.ge.f32.partialorder %v371, %v185
      %vm426 = vcmp.ge.f32.partialorder %v375, %v192
      %vm427 = vcmp.ge.f32.partialorder %v375, %v196
      %vm428 = vcmp.ge.f32.partialorder %v379, %v203
      %vm429 = vcmp.ge.f32.partialorder %v379, %v207
      %vm430 = vcmp.ge.f32.partialorder %v383, %v214
      %vm431 = vcmp.ge.f32.partialorder %v383, %v218
      %vm432 = vcmp.ge.f32.partialorder %v387, %v225
      %vm433 = vcmp.ge.f32.partialorder %v387, %v229
      %vm434 = vcmp.ge.f32.partialorder %v391, %v236
      %vm435 = vcmp.ge.f32.partialorder %v391, %v240
      %vm436 = vcmp.ge.f32.partialorder %v395, %v247
      %vm437 = vcmp.ge.f32.partialorder %v395, %v251
      %vm438 = vcmp.ge.f32.partialorder %v399, %v258
      %vm439 = vcmp.ge.f32.partialorder %v399, %v262
      %vm440 = vcmp.ge.f32.partialorder %v403, %v269
      %vm441 = vcmp.ge.f32.partialorder %v403, %v273
      %vm442 = vcmp.ge.f32.partialorder %v407, %v280
      %vm443 = vcmp.ge.f32.partialorder %v407, %v284
      %v444 = vsel %vm420, 1, 0
      %v445 = vsel %vm421, 1, 0
      %v446 = vsel %vm422, 1, 0
      %v447 = vsel %vm423, 1, 0
      %v448 = vsel %vm424, 1, 0
      %v449 = vsel %vm425, 1, 0
      %v450 = vsel %vm426, 1, 0
      %v451 = vsel %vm427, 1, 0
      %v452 = vsel %vm428, 1, 0
      %v453 = vsel %vm429, 1, 0
      %v454 = vsel %vm430, 1, 0
      %v455 = vsel %vm431, 1, 0
      %v456 = vsel %vm432, 1, 0
      %v457 = vsel %vm433, 1, 0
      %v458 = vsel %vm434, 1, 0
      %v459 = vsel %vm435, 1, 0
      %v460 = vsel %vm436, 1, 0
      %v461 = vsel %vm437, 1, 0
      %v462 = vsel %vm438, 1, 0
      %v463 = vsel %vm439, 1, 0
      %v464 = vsel %vm440, 1, 0
      %v465 = vsel %vm441, 1, 0
      %v466 = vsel %vm442, 1, 0
      %v467 = vsel %vm443, 1, 0
      %v468 = vcvt.s32.f32 %v444
      %v469 = vcvt.s32.f32 %v445
      %v470 = vcvt.s32.f32 %v446
      %v471 = vcvt.s32.f32 %v447
      %v472 = vcvt.s32.f32 %v448
      %v473 = vcvt.s32.f32 %v449
      %v474 = vcvt.s32.f32 %v450
      %v475 = vcvt.s32.f32 %v451
      %v476 = vcvt.s32.f32 %v452
      %v477 = vcvt.s32.f32 %v453
      %v478 = vcvt.s32.f32 %v454
      %v479 = vcvt.s32.f32 %v455
      %v480 = vcvt.s32.f32 %v456
      %v481 = vcvt.s32.f32 %v457
      %v482 = vcvt.s32.f32 %v458
      %v483 = vcvt.s32.f32 %v459
      %v484 = vcvt.s32.f32 %v460
      %v485 = vcvt.s32.f32 %v461
      %v486 = vcvt.s32.f32 %v462
      %v487 = vcvt.s32.f32 %v463
      %v488 = vcvt.s32.f32 %v464
      %v489 = vcvt.s32.f32 %v465
      %v490 = vcvt.s32.f32 %v466
      %v491 = vcvt.s32.f32 %v467
      %vm492 = vcmask 97280
      %v493 = vsel %vm492, %v468, 0.0
      %494 = vadd.xlane.f32.xlu0 %v493
      %v495 = vpop.xlane.xlu0 %494
      %vm496 = vcmask 93184
      %v497 = vsel %vm496, %v469, 0.0
      %498 = vadd.xlane.f32.xlu0 %v497
      %v499 = vpop.xlane.xlu0 %498
      %v500 = vsel %vm492, %v470, 0.0
      %501 = vadd.xlane.f32.xlu0 %v500
      %v502 = vpop.xlane.xlu0 %501
      %v503 = vsel %vm496, %v471, 0.0
      %504 = vadd.xlane.f32.xlu0 %v503
      %v505 = vpop.xlane.xlu0 %504
      %v506 = vsel %vm492, %v472, 0.0
      %507 = vadd.xlane.f32.xlu0 %v506
      %v508 = vpop.xlane.xlu0 %507
      %v509 = vsel %vm496, %v473, 0.0
      %510 = vadd.xlane.f32.xlu0 %v509
      %v511 = vpop.xlane.xlu0 %510
      %v512 = vsel %vm492, %v474, 0.0
      %513 = vadd.xlane.f32.xlu0 %v512
      %v514 = vpop.xlane.xlu0 %513
      %v515 = vsel %vm496, %v475, 0.0
      %516 = vadd.xlane.f32.xlu0 %v515
      %v517 = vpop.xlane.xlu0 %516
      %v518 = vsel %vm492, %v476, 0.0
      %519 = vadd.xlane.f32.xlu0 %v518
      %v520 = vpop.xlane.xlu0 %519
      %v521 = vsel %vm496, %v477, 0.0
      %522 = vadd.xlane.f32.xlu0 %v521
      %v523 = vpop.xlane.xlu0 %522
      %v524 = vsel %vm492, %v478, 0.0
      %525 = vadd.xlane.f32.xlu0 %v524
      %v526 = vpop.xlane.xlu0 %525
      %v527 = vsel %vm496, %v479, 0.0
      %528 = vadd.xlane.f32.xlu0 %v527
      %v529 = vpop.xlane.xlu0 %528
      %v530 = vsel %vm492, %v480, 0.0
      %531 = vadd.xlane.f32.xlu0 %v530
      %v532 = vpop.xlane.xlu0 %531
      %v533 = vsel %vm496, %v481, 0.0
      %534 = vadd.xlane.f32.xlu0 %v533
      %v535 = vpop.xlane.xlu0 %534
      %v536 = vsel %vm492, %v482, 0.0
      %537 = vadd.xlane.f32.xlu0 %v536
      %v538 = vpop.xlane.xlu0 %537
      %v539 = vsel %vm496, %v483, 0.0
      %540 = vadd.xlane.f32.xlu0 %v539
      %v541 = vpop.xlane.xlu0 %540
      %v542 = vsel %vm492, %v484, 0.0
      %543 = vadd.xlane.f32.xlu0 %v542
      %v544 = vpop.xlane.xlu0 %543
      %v545 = vsel %vm496, %v485, 0.0
      %546 = vadd.xlane.f32.xlu0 %v545
      %v547 = vpop.xlane.xlu0 %546
      %v548 = vsel %vm492, %v486, 0.0
      %549 = vadd.xlane.f32.xlu0 %v548
      %v550 = vpop.xlane.xlu0 %549
      %v551 = vsel %vm496, %v487, 0.0
      %552 = vadd.xlane.f32.xlu0 %v551
      %v553 = vpop.xlane.xlu0 %552
      %v554 = vsel %vm492, %v488, 0.0
      %555 = vadd.xlane.f32.xlu0 %v554
      %v556 = vpop.xlane.xlu0 %555
      %v557 = vsel %vm496, %v489, 0.0
      %558 = vadd.xlane.f32.xlu0 %v557
      %v559 = vpop.xlane.xlu0 %558
      %v560 = vsel %vm492, %v490, 0.0
      %561 = vadd.xlane.f32.xlu0 %v560
      %v562 = vpop.xlane.xlu0 %561
      %v563 = vsel %vm496, %v491, 0.0
      %564 = vadd.xlane.f32.xlu0 %v563
      %v565 = vpop.xlane.xlu0 %564
      %v566 = vsel %vm420, %v363, 0.0
      %v567 = vsel %vm421, %v363, 0.0
      %v568 = vsel %vm422, %v367, 0.0
      %v569 = vsel %vm423, %v367, 0.0
      %v570 = vsel %vm424, %v371, 0.0
      %v571 = vsel %vm425, %v371, 0.0
      %v572 = vsel %vm426, %v375, 0.0
      %v573 = vsel %vm427, %v375, 0.0
      %v574 = vsel %vm428, %v379, 0.0
      %v575 = vsel %vm429, %v379, 0.0
      %v576 = vsel %vm430, %v383, 0.0
      %v577 = vsel %vm431, %v383, 0.0
      %v578 = vsel %vm432, %v387, 0.0
      %v579 = vsel %vm433, %v387, 0.0
      %v580 = vsel %vm434, %v391, 0.0
      %v581 = vsel %vm435, %v391, 0.0
      %v582 = vsel %vm436, %v395, 0.0
      %v583 = vsel %vm437, %v395, 0.0
      %v584 = vsel %vm438, %v399, 0.0
      %v585 = vsel %vm439, %v399, 0.0
      %v586 = vsel %vm440, %v403, 0.0
      %v587 = vsel %vm441, %v403, 0.0
      %v588 = vsel %vm442, %v407, 0.0
      %v589 = vsel %vm443, %v407, 0.0
      %v590 = vsel %vm492, %v566, 0.0
      %591 = vadd.xlane.f32.xlu0 %v590
      %v592 = vpop.xlane.xlu0 %591
      %v593 = vsel %vm496, %v567, 0.0
      %594 = vadd.xlane.f32.xlu0 %v593
      %v595 = vpop.xlane.xlu0 %594
      %v596 = vsel %vm492, %v568, 0.0
      %597 = vadd.xlane.f32.xlu0 %v596
      %v598 = vpop.xlane.xlu0 %597
      %v599 = vsel %vm496, %v569, 0.0
      %600 = vadd.xlane.f32.xlu0 %v599
      %v601 = vpop.xlane.xlu0 %600
      %v602 = vsel %vm492, %v570, 0.0
      %603 = vadd.xlane.f32.xlu0 %v602
      %v604 = vpop.xlane.xlu0 %603
      %v605 = vsel %vm496, %v571, 0.0
      %606 = vadd.xlane.f32.xlu0 %v605
      %v607 = vpop.xlane.xlu0 %606
      %v608 = vsel %vm492, %v572, 0.0
      %609 = vadd.xlane.f32.xlu0 %v608
      %v610 = vpop.xlane.xlu0 %609
      %v611 = vsel %vm496, %v573, 0.0
      %612 = vadd.xlane.f32.xlu0 %v611
      %v613 = vpop.xlane.xlu0 %612
      %v614 = vsel %vm492, %v574, 0.0
      %615 = vadd.xlane.f32.xlu0 %v614
      %v616 = vpop.xlane.xlu0 %615
      %v617 = vsel %vm496, %v575, 0.0
      %618 = vadd.xlane.f32.xlu0 %v617
      %v619 = vpop.xlane.xlu0 %618
      %v620 = vsel %vm492, %v576, 0.0
      %621 = vadd.xlane.f32.xlu0 %v620
      %v622 = vpop.xlane.xlu0 %621
      %v623 = vsel %vm496, %v577, 0.0
      %624 = vadd.xlane.f32.xlu0 %v623
      %v625 = vpop.xlane.xlu0 %624
      %v626 = vsel %vm492, %v578, 0.0
      %627 = vadd.xlane.f32.xlu0 %v626
      %v628 = vpop.xlane.xlu0 %627
      %v629 = vsel %vm496, %v579, 0.0
      %630 = vadd.xlane.f32.xlu0 %v629
      %v631 = vpop.xlane.xlu0 %630
      %v632 = vsel %vm492, %v580, 0.0
      %633 = vadd.xlane.f32.xlu0 %v632
      %v634 = vpop.xlane.xlu0 %633
      %v635 = vsel %vm496, %v581, 0.0
      %636 = vadd.xlane.f32.xlu0 %v635
      %v637 = vpop.xlane.xlu0 %636
      %v638 = vsel %vm492, %v582, 0.0
      %639 = vadd.xlane.f32.xlu0 %v638
      %v640 = vpop.xlane.xlu0 %639
      %v641 = vsel %vm496, %v583, 0.0
      %642 = vadd.xlane.f32.xlu0 %v641
      %v643 = vpop.xlane.xlu0 %642
      %v644 = vsel %vm492, %v584, 0.0
      %645 = vadd.xlane.f32.xlu0 %v644
      %v646 = vpop.xlane.xlu0 %645
      %v647 = vsel %vm496, %v585, 0.0
      %648 = vadd.xlane.f32.xlu0 %v647
      %v649 = vpop.xlane.xlu0 %648
      %v650 = vsel %vm492, %v586, 0.0
      %651 = vadd.xlane.f32.xlu0 %v650
      %v652 = vpop.xlane.xlu0 %651
      %v653 = vsel %vm496, %v587, 0.0
      %654 = vadd.xlane.f32.xlu0 %v653
      %v655 = vpop.xlane.xlu0 %654
      %v656 = vsel %vm492, %v588, 0.0
      %657 = vadd.xlane.f32.xlu0 %v656
      %v658 = vpop.xlane.xlu0 %657
      %v659 = vsel %vm496, %v589, 0.0
      %660 = vadd.xlane.f32.xlu0 %v659
      %v661 = vpop.xlane.xlu0 %660
      %v662 = vlaneseq
      %v663 = vshrl.u32 %v662, 7
      %v664 = vsub.s32 0, %v663
      %v665 = vrot.slane %v149, %v664
      %667 = vbcast.lane.b32.xlu0 %v665, 256
      %v668 = vpop.permute.xlu0 %667
      %s670 = sor.u32 256, 8
      %671 = vbcast.lane.b32.xlu0 %v665, %s670
      %v672 = vpop.permute.xlu0 %671
      %v673 = vlaneseq
      %v674 = vshrl.u32 %v673, 7
      %v675 = vsub.s32 1, %v674
      %v676 = vrot.slane %v149, %v675
      %678 = vbcast.lane.b32.xlu0 %v676, 256
      %v679 = vpop.permute.xlu0 %678
      %s681 = sor.u32 256, 8
      %682 = vbcast.lane.b32.xlu0 %v676, %s681
      %v683 = vpop.permute.xlu0 %682
      %v684 = vlaneseq
      %v685 = vshrl.u32 %v684, 7
      %v686 = vsub.s32 2, %v685
      %v687 = vrot.slane %v149, %v686
      %689 = vbcast.lane.b32.xlu0 %v687, 256
      %v690 = vpop.permute.xlu0 %689
      %s692 = sor.u32 256, 8
      %693 = vbcast.lane.b32.xlu0 %v687, %s692
      %v694 = vpop.permute.xlu0 %693
      %v695 = vlaneseq
      %v696 = vshrl.u32 %v695, 7
      %v697 = vsub.s32 3, %v696
      %v698 = vrot.slane %v149, %v697
      %700 = vbcast.lane.b32.xlu0 %v698, 256
      %v701 = vpop.permute.xlu0 %700
      %s703 = sor.u32 256, 8
      %704 = vbcast.lane.b32.xlu0 %v698, %s703
      %v705 = vpop.permute.xlu0 %704
      %v706 = vlaneseq
      %v707 = vshrl.u32 %v706, 7
      %v708 = vsub.s32 4, %v707
      %v709 = vrot.slane %v149, %v708
      %711 = vbcast.lane.b32.xlu0 %v709, 256
      %v712 = vpop.permute.xlu0 %711
      %s714 = sor.u32 256, 8
      %715 = vbcast.lane.b32.xlu0 %v709, %s714
      %v716 = vpop.permute.xlu0 %715
      %v717 = vlaneseq
      %v718 = vshrl.u32 %v717, 7
      %v719 = vsub.s32 5, %v718
      %v720 = vrot.slane %v149, %v719
      %722 = vbcast.lane.b32.xlu0 %v720, 256
      %v723 = vpop.permute.xlu0 %722
      %s725 = sor.u32 256, 8
      %726 = vbcast.lane.b32.xlu0 %v720, %s725
      %v727 = vpop.permute.xlu0 %726
      %v728 = vlaneseq
      %v729 = vshrl.u32 %v728, 7
      %v730 = vsub.s32 6, %v729
      %v731 = vrot.slane %v149, %v730
      %733 = vbcast.lane.b32.xlu0 %v731, 256
      %v734 = vpop.permute.xlu0 %733
      %s736 = sor.u32 256, 8
      %737 = vbcast.lane.b32.xlu0 %v731, %s736
      %v738 = vpop.permute.xlu0 %737
      %v739 = vlaneseq
      %v740 = vshrl.u32 %v739, 7
      %v741 = vsub.s32 7, %v740
      %v742 = vrot.slane %v149, %v741
      %744 = vbcast.lane.b32.xlu0 %v742, 256
      %v745 = vpop.permute.xlu0 %744
      %s747 = sor.u32 256, 8
      %748 = vbcast.lane.b32.xlu0 %v742, %s747
      %v749 = vpop.permute.xlu0 %748
      %v750 = vlaneseq
      %v751 = vshrl.u32 %v750, 7
      %v752 = vsub.s32 0, %v751
      %v753 = vrot.slane %v150, %v752
      %755 = vbcast.lane.b32.xlu0 %v753, 256
      %v756 = vpop.permute.xlu0 %755
      %s758 = sor.u32 256, 8
      %759 = vbcast.lane.b32.xlu0 %v753, %s758
      %v760 = vpop.permute.xlu0 %759
      %v761 = vlaneseq
      %v762 = vshrl.u32 %v761, 7
      %v763 = vsub.s32 1, %v762
      %v764 = vrot.slane %v150, %v763
      %766 = vbcast.lane.b32.xlu0 %v764, 256
      %v767 = vpop.permute.xlu0 %766
      %s769 = sor.u32 256, 8
      %770 = vbcast.lane.b32.xlu0 %v764, %s769
      %v771 = vpop.permute.xlu0 %770
      %v772 = vlaneseq
      %v773 = vshrl.u32 %v772, 7
      %v774 = vsub.s32 2, %v773
      %v775 = vrot.slane %v150, %v774
      %777 = vbcast.lane.b32.xlu0 %v775, 256
      %v778 = vpop.permute.xlu0 %777
      %s780 = sor.u32 256, 8
      %781 = vbcast.lane.b32.xlu0 %v775, %s780
      %v782 = vpop.permute.xlu0 %781
      %v783 = vlaneseq
      %v784 = vshrl.u32 %v783, 7
      %v785 = vsub.s32 3, %v784
      %v786 = vrot.slane %v150, %v785
      %788 = vbcast.lane.b32.xlu0 %v786, 256
      %v789 = vpop.permute.xlu0 %788
      %s791 = sor.u32 256, 8
      %792 = vbcast.lane.b32.xlu0 %v786, %s791
      %v793 = vpop.permute.xlu0 %792
      %v818 = vmul.f32 %v495, %v668
      %v819 = vmul.f32 %v499, %v672
      %v820 = vmul.f32 %v502, %v679
      %v821 = vmul.f32 %v505, %v683
      %v822 = vmul.f32 %v508, %v690
      %v823 = vmul.f32 %v511, %v694
      %v824 = vmul.f32 %v514, %v701
      %v825 = vmul.f32 %v517, %v705
      %v826 = vmul.f32 %v520, %v712
      %v827 = vmul.f32 %v523, %v716
      %v828 = vmul.f32 %v526, %v723
      %v829 = vmul.f32 %v529, %v727
      %v830 = vmul.f32 %v532, %v734
      %v831 = vmul.f32 %v535, %v738
      %v832 = vmul.f32 %v538, %v745
      %v833 = vmul.f32 %v541, %v749
      %v834 = vmul.f32 %v544, %v756
      %v835 = vmul.f32 %v547, %v760
      %v836 = vmul.f32 %v550, %v767
      %v837 = vmul.f32 %v553, %v771
      %v838 = vmul.f32 %v556, %v778
      %v839 = vmul.f32 %v559, %v782
      %v840 = vmul.f32 %v562, %v789
      %v841 = vmul.f32 %v565, %v793
      %v842 = vadd.f32 %v818, 1.0
      %v843 = vadd.f32 %v819, 1.0
      %v844 = vadd.f32 %v820, 1.0
      %v845 = vadd.f32 %v821, 1.0
      %v846 = vadd.f32 %v822, 1.0
      %v847 = vadd.f32 %v823, 1.0
      %v848 = vadd.f32 %v824, 1.0
      %v849 = vadd.f32 %v825, 1.0
      %v850 = vadd.f32 %v826, 1.0
      %v851 = vadd.f32 %v827, 1.0
      %v852 = vadd.f32 %v828, 1.0
      %v853 = vadd.f32 %v829, 1.0
      %v854 = vadd.f32 %v830, 1.0
      %v855 = vadd.f32 %v831, 1.0
      %v856 = vadd.f32 %v832, 1.0
      %v857 = vadd.f32 %v833, 1.0
      %v858 = vadd.f32 %v834, 1.0
      %v859 = vadd.f32 %v835, 1.0
      %v860 = vadd.f32 %v836, 1.0
      %v861 = vadd.f32 %v837, 1.0
      %v862 = vadd.f32 %v838, 1.0
      %v863 = vadd.f32 %v839, 1.0
      %v864 = vadd.f32 %v840, 1.0
      %v865 = vadd.f32 %v841, 1.0
      %vm866 = vcmp.gt.f32.partialorder %v842, %v592
      %vm867 = vcmp.gt.f32.partialorder %v843, %v595
      %vm868 = vcmp.gt.f32.partialorder %v844, %v598
      %vm869 = vcmp.gt.f32.partialorder %v845, %v601
      %vm870 = vcmp.gt.f32.partialorder %v846, %v604
      %vm871 = vcmp.gt.f32.partialorder %v847, %v607
      %vm872 = vcmp.gt.f32.partialorder %v848, %v610
      %vm873 = vcmp.gt.f32.partialorder %v849, %v613
      %vm874 = vcmp.gt.f32.partialorder %v850, %v616
      %vm875 = vcmp.gt.f32.partialorder %v851, %v619
      %vm876 = vcmp.gt.f32.partialorder %v852, %v622
      %vm877 = vcmp.gt.f32.partialorder %v853, %v625
      %vm878 = vcmp.gt.f32.partialorder %v854, %v628
      %vm879 = vcmp.gt.f32.partialorder %v855, %v631
      %vm880 = vcmp.gt.f32.partialorder %v856, %v634
      %vm881 = vcmp.gt.f32.partialorder %v857, %v637
      %vm882 = vcmp.gt.f32.partialorder %v858, %v640
      %vm883 = vcmp.gt.f32.partialorder %v859, %v643
      %vm884 = vcmp.gt.f32.partialorder %v860, %v646
      %vm885 = vcmp.gt.f32.partialorder %v861, %v649
      %vm886 = vcmp.gt.f32.partialorder %v862, %v652
      %vm887 = vcmp.gt.f32.partialorder %v863, %v655
      %vm888 = vcmp.gt.f32.partialorder %v864, %v658
      %vm889 = vcmp.gt.f32.partialorder %v865, %v661
      %v890 = vsel %vm866, 1.0, 0.0
      %v891 = vsel %vm867, 1.0, 0.0
      %v892 = vsel %vm868, 1.0, 0.0
      %v893 = vsel %vm869, 1.0, 0.0
      %v894 = vsel %vm870, 1.0, 0.0
      %v895 = vsel %vm871, 1.0, 0.0
      %v896 = vsel %vm872, 1.0, 0.0
      %v897 = vsel %vm873, 1.0, 0.0
      %v898 = vsel %vm874, 1.0, 0.0
      %v899 = vsel %vm875, 1.0, 0.0
      %v900 = vsel %vm876, 1.0, 0.0
      %v901 = vsel %vm877, 1.0, 0.0
      %v902 = vsel %vm878, 1.0, 0.0
      %v903 = vsel %vm879, 1.0, 0.0
      %v904 = vsel %vm880, 1.0, 0.0
      %v905 = vsel %vm881, 1.0, 0.0
      %v906 = vsel %vm882, 1.0, 0.0
      %v907 = vsel %vm883, 1.0, 0.0
      %v908 = vsel %vm884, 1.0, 0.0
      %v909 = vsel %vm885, 1.0, 0.0
      %v910 = vsel %vm886, 1.0, 0.0
      %v911 = vsel %vm887, 1.0, 0.0
      %v912 = vsel %vm888, 1.0, 0.0
      %v913 = vsel %vm889, 1.0, 0.0
      %938 = vset.pattern.permute.xlu0 0
      %939 = vperm.xlu0 %938, %v890
      %v940 = vpop.permute.xlu0 %939
      %941 = vset.pattern.permute.xlu0 0
      %942 = vperm.xlu0 %941, %v891
      %v943 = vpop.permute.xlu0 %942
      %944 = vset.pattern.permute.xlu0 0
      %945 = vperm.xlu0 %944, %v892
      %v946 = vpop.permute.xlu0 %945
      %947 = vset.pattern.permute.xlu0 0
      %948 = vperm.xlu0 %947, %v893
      %v949 = vpop.permute.xlu0 %948
      %950 = vset.pattern.permute.xlu0 0
      %951 = vperm.xlu0 %950, %v894
      %v952 = vpop.permute.xlu0 %951
      %953 = vset.pattern.permute.xlu0 0
      %954 = vperm.xlu0 %953, %v895
      %v955 = vpop.permute.xlu0 %954
      %956 = vset.pattern.permute.xlu0 0
      %957 = vperm.xlu0 %956, %v896
      %v958 = vpop.permute.xlu0 %957
      %959 = vset.pattern.permute.xlu0 0
      %960 = vperm.xlu0 %959, %v897
      %v961 = vpop.permute.xlu0 %960
      %962 = vset.pattern.permute.xlu0 0
      %963 = vperm.xlu0 %962, %v898
      %v964 = vpop.permute.xlu0 %963
      %965 = vset.pattern.permute.xlu0 0
      %966 = vperm.xlu0 %965, %v899
      %v967 = vpop.permute.xlu0 %966
      %968 = vset.pattern.permute.xlu0 0
      %969 = vperm.xlu0 %968, %v900
      %v970 = vpop.permute.xlu0 %969
      %971 = vset.pattern.permute.xlu0 0
      %972 = vperm.xlu0 %971, %v901
      %v973 = vpop.permute.xlu0 %972
      %974 = vset.pattern.permute.xlu0 0
      %975 = vperm.xlu0 %974, %v902
      %v976 = vpop.permute.xlu0 %975
      %977 = vset.pattern.permute.xlu0 0
      %978 = vperm.xlu0 %977, %v903
      %v979 = vpop.permute.xlu0 %978
      %980 = vset.pattern.permute.xlu0 0
      %981 = vperm.xlu0 %980, %v904
      %v982 = vpop.permute.xlu0 %981
      %983 = vset.pattern.permute.xlu0 0
      %984 = vperm.xlu0 %983, %v905
      %v985 = vpop.permute.xlu0 %984
      %986 = vset.pattern.permute.xlu0 0
      %987 = vperm.xlu0 %986, %v906
      %v988 = vpop.permute.xlu0 %987
      %989 = vset.pattern.permute.xlu0 0
      %990 = vperm.xlu0 %989, %v907
      %v991 = vpop.permute.xlu0 %990
      %992 = vset.pattern.permute.xlu0 0
      %993 = vperm.xlu0 %992, %v908
      %v994 = vpop.permute.xlu0 %993
      %995 = vset.pattern.permute.xlu0 0
      %996 = vperm.xlu0 %995, %v909
      %v997 = vpop.permute.xlu0 %996
      %998 = vset.pattern.permute.xlu0 0
      %999 = vperm.xlu0 %998, %v910
      %v1000 = vpop.permute.xlu0 %999
      %1001 = vset.pattern.permute.xlu0 0
      %1002 = vperm.xlu0 %1001, %v911
      %v1003 = vpop.permute.xlu0 %1002
      %1004 = vset.pattern.permute.xlu0 0
      %1005 = vperm.xlu0 %1004, %v912
      %v1006 = vpop.permute.xlu0 %1005
      %1007 = vset.pattern.permute.xlu0 0
      %1008 = vperm.xlu0 %1007, %v913
      %v1009 = vpop.permute.xlu0 %1008
      %v1010 = vlaneseq
      %v1011 = vand.u32 %v1010, 127
      %v1012 = vlaneseq
      %v1013 = vshrl.u32 %v1012, 7
      %v1014 = vsub.s32 %v1011, %v1013
      %v1015 = vrot.slane %v940, %v1014
      %v1016 = vadd.s32 %v1011, 4294967288
      %v1017 = vlaneseq
      %v1018 = vshrl.u32 %v1017, 7
      %v1019 = vsub.s32 %v1016, %v1018
      %v1020 = vrot.slane %v943, %v1019
      %vm1021 = vcmask 130112
      %v1022 = vsel %vm1021, %v1020, %v1015
      %v1023 = vlaneseq
      %v1024 = vshrl.u32 %v1023, 7
      %v1025 = vsub.s32 %v1011, %v1024
      %v1026 = vrot.slane %v946, %v1025
      %v1027 = vlaneseq
      %v1028 = vshrl.u32 %v1027, 7
      %v1029 = vsub.s32 %v1016, %v1028
      %v1030 = vrot.slane %v949, %v1029
      %v1031 = vsel %vm1021, %v1030, %v1026
      %v1032 = vlaneseq
      %v1033 = vshrl.u32 %v1032, 7
      %v1034 = vsub.s32 %v1011, %v1033
      %v1035 = vrot.slane %v952, %v1034
      %v1036 = vlaneseq
      %v1037 = vshrl.u32 %v1036, 7
      %v1038 = vsub.s32 %v1016, %v1037
      %v1039 = vrot.slane %v955, %v1038
      %v1040 = vsel %vm1021, %v1039, %v1035
      %v1041 = vlaneseq
      %v1042 = vshrl.u32 %v1041, 7
      %v1043 = vsub.s32 %v1011, %v1042
      %v1044 = vrot.slane %v958, %v1043
      %v1045 = vlaneseq
      %v1046 = vshrl.u32 %v1045, 7
      %v1047 = vsub.s32 %v1016, %v1046
      %v1048 = vrot.slane %v961, %v1047
      %v1049 = vsel %vm1021, %v1048, %v1044
      %v1050 = vlaneseq
      %v1051 = vshrl.u32 %v1050, 7
      %v1052 = vsub.s32 %v1011, %v1051
      %v1053 = vrot.slane %v964, %v1052
      %v1054 = vlaneseq
      %v1055 = vshrl.u32 %v1054, 7
      %v1056 = vsub.s32 %v1016, %v1055
      %v1057 = vrot.slane %v967, %v1056
      %v1058 = vsel %vm1021, %v1057, %v1053
      %v1059 = vlaneseq
      %v1060 = vshrl.u32 %v1059, 7
      %v1061 = vsub.s32 %v1011, %v1060
      %v1062 = vrot.slane %v970, %v1061
      %v1063 = vlaneseq
      %v1064 = vshrl.u32 %v1063, 7
      %v1065 = vsub.s32 %v1016, %v1064
      %v1066 = vrot.slane %v973, %v1065
      %v1067 = vsel %vm1021, %v1066, %v1062
      %v1068 = vlaneseq
      %v1069 = vshrl.u32 %v1068, 7
      %v1070 = vsub.s32 %v1011, %v1069
      %v1071 = vrot.slane %v976, %v1070
      %v1072 = vlaneseq
      %v1073 = vshrl.u32 %v1072, 7
      %v1074 = vsub.s32 %v1016, %v1073
      %v1075 = vrot.slane %v979, %v1074
      %v1076 = vsel %vm1021, %v1075, %v1071
      %v1077 = vlaneseq
      %v1078 = vshrl.u32 %v1077, 7
      %v1079 = vsub.s32 %v1011, %v1078
      %v1080 = vrot.slane %v982, %v1079
      %v1081 = vlaneseq
      %v1082 = vshrl.u32 %v1081, 7
      %v1083 = vsub.s32 %v1016, %v1082
      %v1084 = vrot.slane %v985, %v1083
      %v1085 = vsel %vm1021, %v1084, %v1080
      %v1086 = vlaneseq
      %v1087 = vshrl.u32 %v1086, 7
      %v1088 = vsub.s32 %v1011, %v1087
      %v1089 = vrot.slane %v988, %v1088
      %v1090 = vlaneseq
      %v1091 = vshrl.u32 %v1090, 7
      %v1092 = vsub.s32 %v1016, %v1091
      %v1093 = vrot.slane %v991, %v1092
      %v1094 = vsel %vm1021, %v1093, %v1089
      %v1095 = vlaneseq
      %v1096 = vshrl.u32 %v1095, 7
      %v1097 = vsub.s32 %v1011, %v1096
      %v1098 = vrot.slane %v994, %v1097
      %v1099 = vlaneseq
      %v1100 = vshrl.u32 %v1099, 7
      %v1101 = vsub.s32 %v1016, %v1100
      %v1102 = vrot.slane %v997, %v1101
      %v1103 = vsel %vm1021, %v1102, %v1098
      %v1104 = vlaneseq
      %v1105 = vshrl.u32 %v1104, 7
      %v1106 = vsub.s32 %v1011, %v1105
      %v1107 = vrot.slane %v1000, %v1106
      %v1108 = vlaneseq
      %v1109 = vshrl.u32 %v1108, 7
      %v1110 = vsub.s32 %v1016, %v1109
      %v1111 = vrot.slane %v1003, %v1110
      %v1112 = vsel %vm1021, %v1111, %v1107
      %v1113 = vlaneseq
      %v1114 = vshrl.u32 %v1113, 7
      %v1115 = vsub.s32 %v1011, %v1114
      %v1116 = vrot.slane %v1006, %v1115
      %v1117 = vlaneseq
      %v1118 = vshrl.u32 %v1117, 7
      %v1119 = vsub.s32 %v1016, %v1118
      %v1120 = vrot.slane %v1009, %v1119
      %v1121 = vsel %vm1021, %v1120, %v1116
      %vm1122 = vcmask 1041409
      %v1123 = vsel %vm1122, %v1031, %v1022
      %vm1124 = vcmask 1042434
      %v1125 = vsel %vm1124, %v1040, %v1123
      %vm1126 = vcmask 1043459
      %v1127 = vsel %vm1126, %v1049, %v1125
      %vm1128 = vcmask 1044484
      %v1129 = vsel %vm1128, %v1058, %v1127
      %vm1130 = vcmask 1045509
      %v1131 = vsel %vm1130, %v1067, %v1129
      %vm1132 = vcmask 1046534
      %v1133 = vsel %vm1132, %v1076, %v1131
      %vm1134 = vcmask 1047559
      %v1135 = vsel %vm1134, %v1085, %v1133
      %v1136 = vsel %vm1122, %v1103, %v1094
      %v1137 = vsel %vm1124, %v1112, %v1136
      %v1138 = vsel %vm1126, %v1121, %v1137
      %v1141 = vsel %vm492, %v1135, 0.0
      %1142 = vadd.xlane.f32.xlu0 %v1141
      %v1143 = vpop.xlane.xlu0 %1142
      %v1144 = vsel %vm496, %v1138, 0.0
      %1145 = vadd.xlane.f32.xlu0 %v1144
      %v1146 = vpop.xlane.xlu0 %1145
      %v1147 = vsel %vm866, %v668, 0.0
      %v1148 = vsel %vm867, %v672, 0.0
      %v1149 = vsel %vm868, %v679, 0.0
      %v1150 = vsel %vm869, %v683, 0.0
      %v1151 = vsel %vm870, %v690, 0.0
      %v1152 = vsel %vm871, %v694, 0.0
      %v1153 = vsel %vm872, %v701, 0.0
      %v1154 = vsel %vm873, %v705, 0.0
      %v1155 = vsel %vm874, %v712, 0.0
      %v1156 = vsel %vm875, %v716, 0.0
      %v1157 = vsel %vm876, %v723, 0.0
      %v1158 = vsel %vm877, %v727, 0.0
      %v1159 = vsel %vm878, %v734, 0.0
      %v1160 = vsel %vm879, %v738, 0.0
      %v1161 = vsel %vm880, %v745, 0.0
      %v1162 = vsel %vm881, %v749, 0.0
      %v1163 = vsel %vm882, %v756, 0.0
      %v1164 = vsel %vm883, %v760, 0.0
      %v1165 = vsel %vm884, %v767, 0.0
      %v1166 = vsel %vm885, %v771, 0.0
      %v1167 = vsel %vm886, %v778, 0.0
      %v1168 = vsel %vm887, %v782, 0.0
      %v1169 = vsel %vm888, %v789, 0.0
      %v1170 = vsel %vm889, %v793, 0.0
      %1195 = vset.pattern.permute.xlu0 0
      %1196 = vperm.xlu0 %1195, %v1147
      %v1197 = vpop.permute.xlu0 %1196
      %1198 = vset.pattern.permute.xlu0 0
      %1199 = vperm.xlu0 %1198, %v1148
      %v1200 = vpop.permute.xlu0 %1199
      %1201 = vset.pattern.permute.xlu0 0
      %1202 = vperm.xlu0 %1201, %v1149
      %v1203 = vpop.permute.xlu0 %1202
      %1204 = vset.pattern.permute.xlu0 0
      %1205 = vperm.xlu0 %1204, %v1150
      %v1206 = vpop.permute.xlu0 %1205
      %1207 = vset.pattern.permute.xlu0 0
      %1208 = vperm.xlu0 %1207, %v1151
      %v1209 = vpop.permute.xlu0 %1208
      %1210 = vset.pattern.permute.xlu0 0
      %1211 = vperm.xlu0 %1210, %v1152
      %v1212 = vpop.permute.xlu0 %1211
      %1213 = vset.pattern.permute.xlu0 0
      %1214 = vperm.xlu0 %1213, %v1153
      %v1215 = vpop.permute.xlu0 %1214
      %1216 = vset.pattern.permute.xlu0 0
      %1217 = vperm.xlu0 %1216, %v1154
      %v1218 = vpop.permute.xlu0 %1217
      %1219 = vset.pattern.permute.xlu0 0
      %1220 = vperm.xlu0 %1219, %v1155
      %v1221 = vpop.permute.xlu0 %1220
      %1222 = vset.pattern.permute.xlu0 0
      %1223 = vperm.xlu0 %1222, %v1156
      %v1224 = vpop.permute.xlu0 %1223
      %1225 = vset.pattern.permute.xlu0 0
      %1226 = vperm.xlu0 %1225, %v1157
      %v1227 = vpop.permute.xlu0 %1226
      %1228 = vset.pattern.permute.xlu0 0
      %1229 = vperm.xlu0 %1228, %v1158
      %v1230 = vpop.permute.xlu0 %1229
      %1231 = vset.pattern.permute.xlu0 0
      %1232 = vperm.xlu0 %1231, %v1159
      %v1233 = vpop.permute.xlu0 %1232
      %1234 = vset.pattern.permute.xlu0 0
      %1235 = vperm.xlu0 %1234, %v1160
      %v1236 = vpop.permute.xlu0 %1235
      %1237 = vset.pattern.permute.xlu0 0
      %1238 = vperm.xlu0 %1237, %v1161
      %v1239 = vpop.permute.xlu0 %1238
      %1240 = vset.pattern.permute.xlu0 0
      %1241 = vperm.xlu0 %1240, %v1162
      %v1242 = vpop.permute.xlu0 %1241
      %1243 = vset.pattern.permute.xlu0 0
      %1244 = vperm.xlu0 %1243, %v1163
      %v1245 = vpop.permute.xlu0 %1244
      %1246 = vset.pattern.permute.xlu0 0
      %1247 = vperm.xlu0 %1246, %v1164
      %v1248 = vpop.permute.xlu0 %1247
      %1249 = vset.pattern.permute.xlu0 0
      %1250 = vperm.xlu0 %1249, %v1165
      %v1251 = vpop.permute.xlu0 %1250
      %1252 = vset.pattern.permute.xlu0 0
      %1253 = vperm.xlu0 %1252, %v1166
      %v1254 = vpop.permute.xlu0 %1253
      %1255 = vset.pattern.permute.xlu0 0
      %1256 = vperm.xlu0 %1255, %v1167
      %v1257 = vpop.permute.xlu0 %1256
      %1258 = vset.pattern.permute.xlu0 0
      %1259 = vperm.xlu0 %1258, %v1168
      %v1260 = vpop.permute.xlu0 %1259
      %1261 = vset.pattern.permute.xlu0 0
      %1262 = vperm.xlu0 %1261, %v1169
      %v1263 = vpop.permute.xlu0 %1262
      %1264 = vset.pattern.permute.xlu0 0
      %1265 = vperm.xlu0 %1264, %v1170
      %v1266 = vpop.permute.xlu0 %1265
      %v1267 = vlaneseq
      %v1268 = vshrl.u32 %v1267, 7
      %v1269 = vsub.s32 %v1011, %v1268
      %v1270 = vrot.slane %v1197, %v1269
      %v1271 = vlaneseq
      %v1272 = vshrl.u32 %v1271, 7
      %v1273 = vsub.s32 %v1016, %v1272
      %v1274 = vrot.slane %v1200, %v1273
      %v1275 = vsel %vm1021, %v1274, %v1270
      %v1276 = vlaneseq
      %v1277 = vshrl.u32 %v1276, 7
      %v1278 = vsub.s32 %v1011, %v1277
      %v1279 = vrot.slane %v1203, %v1278
      %v1280 = vlaneseq
      %v1281 = vshrl.u32 %v1280, 7
      %v1282 = vsub.s32 %v1016, %v1281
      %v1283 = vrot.slane %v1206, %v1282
      %v1284 = vsel %vm1021, %v1283, %v1279
      %v1285 = vlaneseq
      %v1286 = vshrl.u32 %v1285, 7
      %v1287 = vsub.s32 %v1011, %v1286
      %v1288 = vrot.slane %v1209, %v1287
      %v1289 = vlaneseq
      %v1290 = vshrl.u32 %v1289, 7
      %v1291 = vsub.s32 %v1016, %v1290
      %v1292 = vrot.slane %v1212, %v1291
      %v1293 = vsel %vm1021, %v1292, %v1288
      %v1294 = vlaneseq
      %v1295 = vshrl.u32 %v1294, 7
      %v1296 = vsub.s32 %v1011, %v1295
      %v1297 = vrot.slane %v1215, %v1296
      %v1298 = vlaneseq
      %v1299 = vshrl.u32 %v1298, 7
      %v1300 = vsub.s32 %v1016, %v1299
      %v1301 = vrot.slane %v1218, %v1300
      %v1302 = vsel %vm1021, %v1301, %v1297
      %v1303 = vlaneseq
      %v1304 = vshrl.u32 %v1303, 7
      %v1305 = vsub.s32 %v1011, %v1304
      %v1306 = vrot.slane %v1221, %v1305
      %v1307 = vlaneseq
      %v1308 = vshrl.u32 %v1307, 7
      %v1309 = vsub.s32 %v1016, %v1308
      %v1310 = vrot.slane %v1224, %v1309
      %v1311 = vsel %vm1021, %v1310, %v1306
      %v1312 = vlaneseq
      %v1313 = vshrl.u32 %v1312, 7
      %v1314 = vsub.s32 %v1011, %v1313
      %v1315 = vrot.slane %v1227, %v1314
      %v1316 = vlaneseq
      %v1317 = vshrl.u32 %v1316, 7
      %v1318 = vsub.s32 %v1016, %v1317
      %v1319 = vrot.slane %v1230, %v1318
      %v1320 = vsel %vm1021, %v1319, %v1315
      %v1321 = vlaneseq
      %v1322 = vshrl.u32 %v1321, 7
      %v1323 = vsub.s32 %v1011, %v1322
      %v1324 = vrot.slane %v1233, %v1323
      %v1325 = vlaneseq
      %v1326 = vshrl.u32 %v1325, 7
      %v1327 = vsub.s32 %v1016, %v1326
      %v1328 = vrot.slane %v1236, %v1327
      %v1329 = vsel %vm1021, %v1328, %v1324
      %v1330 = vlaneseq
      %v1331 = vshrl.u32 %v1330, 7
      %v1332 = vsub.s32 %v1011, %v1331
      %v1333 = vrot.slane %v1239, %v1332
      %v1334 = vlaneseq
      %v1335 = vshrl.u32 %v1334, 7
      %v1336 = vsub.s32 %v1016, %v1335
      %v1337 = vrot.slane %v1242, %v1336
      %v1338 = vsel %vm1021, %v1337, %v1333
      %v1339 = vlaneseq
      %v1340 = vshrl.u32 %v1339, 7
      %v1341 = vsub.s32 %v1011, %v1340
      %v1342 = vrot.slane %v1245, %v1341
      %v1343 = vlaneseq
      %v1344 = vshrl.u32 %v1343, 7
      %v1345 = vsub.s32 %v1016, %v1344
      %v1346 = vrot.slane %v1248, %v1345
      %v1347 = vsel %vm1021, %v1346, %v1342
      %v1348 = vlaneseq
      %v1349 = vshrl.u32 %v1348, 7
      %v1350 = vsub.s32 %v1011, %v1349
      %v1351 = vrot.slane %v1251, %v1350
      %v1352 = vlaneseq
      %v1353 = vshrl.u32 %v1352, 7
      %v1354 = vsub.s32 %v1016, %v1353
      %v1355 = vrot.slane %v1254, %v1354
      %v1356 = vsel %vm1021, %v1355, %v1351
      %v1357 = vlaneseq
      %v1358 = vshrl.u32 %v1357, 7
      %v1359 = vsub.s32 %v1011, %v1358
      %v1360 = vrot.slane %v1257, %v1359
      %v1361 = vlaneseq
      %v1362 = vshrl.u32 %v1361, 7
      %v1363 = vsub.s32 %v1016, %v1362
      %v1364 = vrot.slane %v1260, %v1363
      %v1365 = vsel %vm1021, %v1364, %v1360
      %v1366 = vlaneseq
      %v1367 = vshrl.u32 %v1366, 7
      %v1368 = vsub.s32 %v1011, %v1367
      %v1369 = vrot.slane %v1263, %v1368
      %v1370 = vlaneseq
      %v1371 = vshrl.u32 %v1370, 7
      %v1372 = vsub.s32 %v1016, %v1371
      %v1373 = vrot.slane %v1266, %v1372
      %v1374 = vsel %vm1021, %v1373, %v1369
      %v1375 = vsel %vm1122, %v1284, %v1275
      %v1376 = vsel %vm1124, %v1293, %v1375
      %v1377 = vsel %vm1126, %v1302, %v1376
      %v1378 = vsel %vm1128, %v1311, %v1377
      %v1379 = vsel %vm1130, %v1320, %v1378
      %v1380 = vsel %vm1132, %v1329, %v1379
      %v1381 = vsel %vm1134, %v1338, %v1380
      %v1382 = vsel %vm1122, %v1356, %v1347
      %v1383 = vsel %vm1124, %v1365, %v1382
      %v1384 = vsel %vm1126, %v1374, %v1383
      %v1387 = vsel %vm492, %v1381, 0.0
      %1388 = vadd.xlane.f32.xlu0 %v1387
      %v1389 = vpop.xlane.xlu0 %1388
      %v1390 = vsel %vm496, %v1384, 0.0
      %1391 = vadd.xlane.f32.xlu0 %v1390
      %v1392 = vpop.xlane.xlu0 %1391
      %v1393 = vsub.f32 %v1389, 1.0
      %v1394 = vsub.f32 %v1392, 1.0
      %v1395 = vrcp.pop %v1143
      %v1396 = vrcp.pop %v1146
      %v1397 = vmul.f32 %v1393, %v1395
      %v1398 = vmul.f32 %v1394, %v1396
      %v1399 = vsub.f32 %v149, %v1397
      %v1400 = vsub.f32 %v150, %v1398
      %v1401 = vmax.f32 %v1399, 0.0
      %v1402 = vmax.f32 %v1400, 0.0
      %v1404 = vsel %vm492, %v1401, 0
      %v1407 = vsel %vm492, %v1402, 0
      %vm1409 = vcmask 1043456
      %v1411 = vsel %vm1409, %v148, 0
      %1413 = vmatprep.subr.mxu0 0.0
      %1414 = vmatpush1.msra.mxu0 %v147
      %1415 = vmatprep.subr.mxu0 0.0
      %1416 = vmatpush1.msra.mxu0 %v1411
      %1417 = vmatprep.subr.mxu0 0.0
      %1418 = vmatpush1.msra.mxu0 0.0
      %1419 = vmatprep.subr.mxu0 0.0
      %1420 = vmatpush1.msra.mxu0 0.0
      %1421 = vmatprep.subr.mxu0 0.0
      %1422 = vmatpush1.msra.mxu0 0.0
      %1423 = vmatprep.subr.mxu0 0.0
      %1424 = vmatpush1.msra.mxu0 0.0
      %1425 = vmatprep.subr.mxu0 0.0
      %1426 = vmatpush1.msra.mxu0 0.0
      %1427 = vmatprep.subr.mxu0 0.0
      %1428 = vmatpush1.msra.mxu0 0.0
      %1429 = vmatprep.subr.mxu0 0.0
      %1430 = vmatpush1.msra.mxu0 0.0
      %1431 = vmatprep.subr.mxu0 0.0
      %1432 = vmatpush1.msra.mxu0 0.0
      %1433 = vmatprep.subr.mxu0 0.0
      %1434 = vmatpush1.msra.mxu0 0.0
      %1435 = vmatprep.subr.mxu0 0.0
      %1436 = vmatpush1.msra.mxu0 0.0
      %1437 = vmatprep.subr.mxu0 0.0
      %1438 = vmatpush1.msra.mxu0 0.0
      %1439 = vmatprep.subr.mxu0 0.0
      %1440 = vmatpush1.msra.mxu0 0.0
      %1441 = vmatprep.subr.mxu0 0.0
      %1442 = vmatpush1.msra.mxu0 0.0
      %1443 = vmatprep.subr.mxu0 0.0
      %1444 = vmatpush1.msra.mxu0 0.0
      %1445 = vmatprep.subr.mxu0 0.0
      %1446 = vmatpush1.msra.mxu0 0.0
      %1447 = vmatprep.subr.mxu0 0.0
      %1448 = vmatpush1.msra.mxu0 0.0
      %1449 = vmatprep.subr.mxu0 0.0
      %1450 = vmatpush1.msra.mxu0 0.0
      %1451 = vmatprep.subr.mxu0 0.0
      %1452 = vmatpush1.msra.mxu0 0.0
      %1453 = vmatprep.subr.mxu0 0.0
      %1454 = vmatpush1.msra.mxu0 0.0
      %1455 = vmatprep.subr.mxu0 0.0
      %1456 = vmatpush1.msra.mxu0 0.0
      %1457 = vmatprep.subr.mxu0 0.0
      %1458 = vmatpush1.msra.mxu0 0.0
      %1459 = vmatprep.subr.mxu0 0.0
      %1460 = vmatpush1.msra.mxu0 0.0
      %1461 = vmatprep.subr.mxu0 0.0
      %1462 = vmatpush1.msra.mxu0 0.0
      %1463 = vmatprep.subr.mxu0 0.0
      %1464 = vmatpush1.msra.mxu0 0.0
      %1465 = vmatprep.subr.mxu0 0.0
      %1466 = vmatpush1.msra.mxu0 0.0
      %1467 = vmatprep.subr.mxu0 0.0
      %1468 = vmatpush1.msra.mxu0 0.0
      %1469 = vmatprep.subr.mxu0 0.0
      %1470 = vmatpush1.msra.mxu0 0.0
      %1471 = vmatprep.subr.mxu0 0.0
      %1472 = vmatpush1.msra.mxu0 0.0
      %1473 = vmatprep.subr.mxu0 0.0
      %1474 = vmatpush1.msra.mxu0 0.0
      %1475 = vmatprep.subr.mxu0 0.0
      %1476 = vmatpush1.msra.mxu0 0.0
      %1477 = vmatprep.mubr.f32.mxu0 0.0
      %1478 = vmatmul.mubr.f32.gmra.mrb[0].mxu0 %v1404
      %v1479 = vpop.f32.mrb[0].mxu0
      %v1480 = vadd.f32 0.0, %v1479
      %v1481 = vpop.f32.mrb[0].mxu0
      %1482 = vmatprep.mubr.f32.mxu0 0.0
      %1483 = vmatmul.mubr.f32.gmra.mrb[0].mxu0 %v1407
      %v1484 = vpop.f32.mrb[0].mxu0
      %v1485 = vadd.f32 0.0, %v1484
      %v1486 = vpop.f32.mrb[0].mxu0
      %1487 = vdwg.mxu0
      %v1488 = vld [vmem:[#allocation5] sm:$0xff]
      %v1489 = vld [vmem:[#allocation5 + $0x8] sm:$0xff]
      %v1490 = vld [vmem:[%s5] sm:$0x1]
      %v1492 = vlaneseq
      %v1493 = vshrl.u32 %v1492, 7
      %v1494 = vsub.s32 0, %v1493
      %v1495 = vrot.slane %v1490, %v1494
      %vm1497 = vcmask 130048
      %v1499 = vsel %vm1497, %v1480, 0
      %v1502 = vsel %vm1497, %v1485, 0
      %1504 = vmatprep.subr.mxu0 0.0
      %1505 = vmatpush1.msra.mxu0 %v1488
      %1506 = vmatprep.subr.mxu0 0.0
      %1507 = vmatpush1.msra.mxu0 %v1489
      %1508 = vmatprep.subr.mxu0 0.0
      %1509 = vmatpush1.msra.mxu0 0.0
      %1510 = vmatprep.subr.mxu0 0.0
      %1511 = vmatpush1.msra.mxu0 0.0
      %1512 = vmatprep.subr.mxu0 0.0
      %1513 = vmatpush1.msra.mxu0 0.0
      %1514 = vmatprep.subr.mxu0 0.0
      %1515 = vmatpush1.msra.mxu0 0.0
      %1516 = vmatprep.subr.mxu0 0.0
      %1517 = vmatpush1.msra.mxu0 0.0
      %1518 = vmatprep.subr.mxu0 0.0
      %1519 = vmatpush1.msra.mxu0 0.0
      %1520 = vmatprep.subr.mxu0 0.0
      %1521 = vmatpush1.msra.mxu0 0.0
      %1522 = vmatprep.subr.mxu0 0.0
      %1523 = vmatpush1.msra.mxu0 0.0
      %1524 = vmatprep.subr.mxu0 0.0
      %1525 = vmatpush1.msra.mxu0 0.0
      %1526 = vmatprep.subr.mxu0 0.0
      %1527 = vmatpush1.msra.mxu0 0.0
      %1528 = vmatprep.subr.mxu0 0.0
      %1529 = vmatpush1.msra.mxu0 0.0
      %1530 = vmatprep.subr.mxu0 0.0
      %1531 = vmatpush1.msra.mxu0 0.0
      %1532 = vmatprep.subr.mxu0 0.0
      %1533 = vmatpush1.msra.mxu0 0.0
      %1534 = vmatprep.subr.mxu0 0.0
      %1535 = vmatpush1.msra.mxu0 0.0
      %1536 = vmatprep.subr.mxu0 0.0
      %1537 = vmatpush1.msra.mxu0 0.0
      %1538 = vmatprep.subr.mxu0 0.0
      %1539 = vmatpush1.msra.mxu0 0.0
      %1540 = vmatprep.subr.mxu0 0.0
      %1541 = vmatpush1.msra.mxu0 0.0
      %1542 = vmatprep.subr.mxu0 0.0
      %1543 = vmatpush1.msra.mxu0 0.0
      %1544 = vmatprep.subr.mxu0 0.0
      %1545 = vmatpush1.msra.mxu0 0.0
      %1546 = vmatprep.subr.mxu0 0.0
      %1547 = vmatpush1.msra.mxu0 0.0
      %1548 = vmatprep.subr.mxu0 0.0
      %1549 = vmatpush1.msra.mxu0 0.0
      %1550 = vmatprep.subr.mxu0 0.0
      %1551 = vmatpush1.msra.mxu0 0.0
      %1552 = vmatprep.subr.mxu0 0.0
      %1553 = vmatpush1.msra.mxu0 0.0
      %1554 = vmatprep.subr.mxu0 0.0
      %1555 = vmatpush1.msra.mxu0 0.0
      %1556 = vmatprep.subr.mxu0 0.0
      %1557 = vmatpush1.msra.mxu0 0.0
      %1558 = vmatprep.subr.mxu0 0.0
      %1559 = vmatpush1.msra.mxu0 0.0
      %1560 = vmatprep.subr.mxu0 0.0
      %1561 = vmatpush1.msra.mxu0 0.0
      %1562 = vmatprep.subr.mxu0 0.0
      %1563 = vmatpush1.msra.mxu0 0.0
      %1564 = vmatprep.subr.mxu0 0.0
      %1565 = vmatpush1.msra.mxu0 0.0
      %1566 = vmatprep.subr.mxu0 0.0
      %1567 = vmatpush1.msra.mxu0 0.0
      %1568 = vmatprep.mubr.f32.mxu0 0.0
      %1569 = vmatmul.mubr.f32.gmra.mrb[0].mxu0 %v1499
      %v1570 = vpop.f32.mrb[0].mxu0
      %v1571 = vadd.f32 %v1495, %v1570
      %v1572 = vpop.f32.mrb[0].mxu0
      %1573 = vmatprep.mubr.f32.mxu0 0.0
      %1574 = vmatmul.mubr.f32.gmra.mrb[0].mxu0 %v1502
      %v1575 = vpop.f32.mrb[0].mxu0
      %v1576 = vadd.f32 %v1495, %v1575
      %v1577 = vpop.f32.mrb[0].mxu0
      %1578 = vdwg.mxu0
      %v1579 = vmax.f32 %v1571, 0.0
      %v1580 = vmax.f32 %v1576, 0.0
      %v1581 = vpack.c.bf16 %v1580, %v1579
      %v1582 = vld [vmem:[#allocation7] sm:$0xff]
      %v1583 = vld [vmem:[#allocation7 + $0x8] sm:$0xff]
      %v1584 = vld [vmem:[#allocation7 + $0x10] sm:$0xff]
      %v1585 = vld [vmem:[#allocation7 + $0x18] sm:$0xf]
      %v1586 = vld [vmem:[#allocation7 + $0x1c] sm:$0xff]
      %v1587 = vld [vmem:[#allocation7 + $0x24] sm:$0xff]
      %v1588 = vld [vmem:[#allocation7 + $0x2c] sm:$0xff]
      %v1589 = vld [vmem:[#allocation7 + $0x34] sm:$0xf]
      %v1590 = vld [vmem:[#allocation8] sm:$0xff]
      %v1592 = vlaneseq
      %v1593 = vshrl.u32 %v1592, 7
      %v1594 = vsub.s32 0, %v1593
      %v1595 = vrot.slane %v1590, %v1594
      %v1596 = vlaneseq
      %v1597 = vshrl.u32 %v1596, 7
      %v1598 = vsub.s32 1, %v1597
      %v1599 = vrot.slane %v1590, %v1598
      %v1600 = vlaneseq
      %v1601 = vshrl.u32 %v1600, 7
      %v1602 = vsub.s32 2, %v1601
      %v1603 = vrot.slane %v1590, %v1602
      %v1604 = vlaneseq
      %v1605 = vshrl.u32 %v1604, 7
      %v1606 = vsub.s32 3, %v1605
      %v1607 = vrot.slane %v1590, %v1606
      %v1608 = vlaneseq
      %v1609 = vshrl.u32 %v1608, 7
      %v1610 = vsub.s32 4, %v1609
      %v1611 = vrot.slane %v1590, %v1610
      %v1612 = vlaneseq
      %v1613 = vshrl.u32 %v1612, 7
      %v1614 = vsub.s32 5, %v1613
      %v1615 = vrot.slane %v1590, %v1614
      %v1616 = vlaneseq
      %v1617 = vshrl.u32 %v1616, 7
      %v1618 = vsub.s32 6, %v1617
      %v1619 = vrot.slane %v1590, %v1618
      %v1635 = vunpack.c.l.b16 %v1582
      %v1636 = vunpack.c.h.b16 %v1582
      %v1637 = vunpack.c.l.b16 %v1583
      %v1638 = vunpack.c.h.b16 %v1583
      %v1639 = vunpack.c.l.b16 %v1584
      %v1640 = vunpack.c.h.b16 %v1584
      %v1641 = vunpack.c.l.b16 %v1585
      %v1642 = vunpack.c.l.b16 %v1586
      %v1643 = vunpack.c.h.b16 %v1586
      %v1644 = vunpack.c.l.b16 %v1587
      %v1645 = vunpack.c.h.b16 %v1587
      %v1646 = vunpack.c.l.b16 %v1588
      %v1647 = vunpack.c.h.b16 %v1588
      %v1648 = vunpack.c.l.b16 %v1589
      %v1649 = vpack.c.b16 %v1642, %v1635
      %v1650 = vpack.c.b16 %v1643, %v1636
      %v1651 = vpack.c.b16 %v1644, %v1637
      %v1652 = vpack.c.b16 %v1645, %v1638
      %v1653 = vpack.c.b16 %v1646, %v1639
      %v1654 = vpack.c.b16 %v1647, %v1640
      %v1655 = vpack.c.b16 %v1648, %v1641
      %v1664 = vsel %vm1497, %v1581, 0
      %1666 = vmatprep.subr.bf16.mxu0 %v1650
      %1667 = vmatpush1.bf16.msra.mxu0 %v1649
      %1668 = vmatprep.subr.bf16.mxu0 0
      %1669 = vmatpush1.bf16.msra.mxu0 0
      %1670 = vmatprep.subr.bf16.mxu0 0
      %1671 = vmatpush1.bf16.msra.mxu0 0
      %1672 = vmatprep.subr.bf16.mxu0 0
      %1673 = vmatpush1.bf16.msra.mxu0 0
      %1674 = vmatprep.subr.bf16.mxu0 0
      %1675 = vmatpush1.bf16.msra.mxu0 0
      %1676 = vmatprep.subr.bf16.mxu0 0
      %1677 = vmatpush1.bf16.msra.mxu0 0
      %1678 = vmatprep.subr.bf16.mxu0 0
      %1679 = vmatpush1.bf16.msra.mxu0 0
      %1680 = vmatprep.subr.bf16.mxu0 0
      %1681 = vmatpush1.bf16.msra.mxu0 0
      %1682 = vmatprep.subr.bf16.mxu0 0
      %1683 = vmatpush1.bf16.msra.mxu0 0
      %1684 = vmatprep.subr.bf16.mxu0 0
      %1685 = vmatpush1.bf16.msra.mxu0 0
      %1686 = vmatprep.subr.bf16.mxu0 0
      %1687 = vmatpush1.bf16.msra.mxu0 0
      %1688 = vmatprep.subr.bf16.mxu0 0
      %1689 = vmatpush1.bf16.msra.mxu0 0
      %1690 = vmatprep.subr.bf16.mxu0 0
      %1691 = vmatpush1.bf16.msra.mxu0 0
      %1692 = vmatprep.subr.bf16.mxu0 0
      %1693 = vmatpush1.bf16.msra.mxu0 0
      %1694 = vmatprep.subr.bf16.mxu0 0
      %1695 = vmatpush1.bf16.msra.mxu0 0
      %1696 = vmatprep.subr.bf16.mxu0 0
      %1697 = vmatpush1.bf16.msra.mxu0 0
      %1698 = vmatprep.mubr.bf16.mxu0 0
      %1699 = vmatmul.mubr.bf16.gmra.mrb[0].mxu0 %v1664
      %v1700 = vpop.f32.mrb[0].mxu0
      %v1701 = vadd.f32 %v1595, %v1700
      %v1702 = vpop.f32.mrb[0].mxu0
      %v1703 = vadd.f32 %v1599, %v1702
      %v1704 = vpop.f32.mrb[0].mxu0
      %v1705 = vadd.f32 %v1595, %v1704
      %v1706 = vpop.f32.mrb[0].mxu0
      %v1707 = vadd.f32 %v1599, %v1706
      %1708 = vdwg.mxu0
      %1709 = vmatprep.subr.bf16.mxu0 %v1652
      %1710 = vmatpush1.bf16.msra.mxu0 %v1651
      %1711 = vmatprep.subr.bf16.mxu0 0
      %1712 = vmatpush1.bf16.msra.mxu0 0
      %1713 = vmatprep.subr.bf16.mxu0 0
      %1714 = vmatpush1.bf16.msra.mxu0 0
      %1715 = vmatprep.subr.bf16.mxu0 0
      %1716 = vmatpush1.bf16.msra.mxu0 0
      %1717 = vmatprep.subr.bf16.mxu0 0
      %1718 = vmatpush1.bf16.msra.mxu0 0
      %1719 = vmatprep.subr.bf16.mxu0 0
      %1720 = vmatpush1.bf16.msra.mxu0 0
      %1721 = vmatprep.subr.bf16.mxu0 0
      %1722 = vmatpush1.bf16.msra.mxu0 0
      %1723 = vmatprep.subr.bf16.mxu0 0
      %1724 = vmatpush1.bf16.msra.mxu0 0
      %1725 = vmatprep.subr.bf16.mxu0 0
      %1726 = vmatpush1.bf16.msra.mxu0 0
      %1727 = vmatprep.subr.bf16.mxu0 0
      %1728 = vmatpush1.bf16.msra.mxu0 0
      %1729 = vmatprep.subr.bf16.mxu0 0
      %1730 = vmatpush1.bf16.msra.mxu0 0
      %1731 = vmatprep.subr.bf16.mxu0 0
      %1732 = vmatpush1.bf16.msra.mxu0 0
      %1733 = vmatprep.subr.bf16.mxu0 0
      %1734 = vmatpush1.bf16.msra.mxu0 0
      %1735 = vmatprep.subr.bf16.mxu0 0
      %1736 = vmatpush1.bf16.msra.mxu0 0
      %1737 = vmatprep.subr.bf16.mxu0 0
      %1738 = vmatpush1.bf16.msra.mxu0 0
      %1739 = vmatprep.subr.bf16.mxu0 0
      %1740 = vmatpush1.bf16.msra.mxu0 0
      %1741 = vmatprep.mubr.bf16.mxu0 0
      %1742 = vmatmul.mubr.bf16.gmra.mrb[0].mxu0 %v1664
      %v1743 = vpop.f32.mrb[0].mxu0
      %v1744 = vadd.f32 %v1603, %v1743
      %v1745 = vpop.f32.mrb[0].mxu0
      %v1746 = vadd.f32 %v1607, %v1745
      %v1747 = vpop.f32.mrb[0].mxu0
      %v1748 = vadd.f32 %v1603, %v1747
      %v1749 = vpop.f32.mrb[0].mxu0
      %v1750 = vadd.f32 %v1607, %v1749
      %1751 = vdwg.mxu0
      %1752 = vmatprep.subr.bf16.mxu0 %v1654
      %1753 = vmatpush1.bf16.msra.mxu0 %v1653
      %1754 = vmatprep.subr.bf16.mxu0 0
      %1755 = vmatpush1.bf16.msra.mxu0 0
      %1756 = vmatprep.subr.bf16.mxu0 0
      %1757 = vmatpush1.bf16.msra.mxu0 0
      %1758 = vmatprep.subr.bf16.mxu0 0
      %1759 = vmatpush1.bf16.msra.mxu0 0
      %1760 = vmatprep.subr.bf16.mxu0 0
      %1761 = vmatpush1.bf16.msra.mxu0 0
      %1762 = vmatprep.subr.bf16.mxu0 0
      %1763 = vmatpush1.bf16.msra.mxu0 0
      %1764 = vmatprep.subr.bf16.mxu0 0
      %1765 = vmatpush1.bf16.msra.mxu0 0
      %1766 = vmatprep.subr.bf16.mxu0 0
      %1767 = vmatpush1.bf16.msra.mxu0 0
      %1768 = vmatprep.subr.bf16.mxu0 0
      %1769 = vmatpush1.bf16.msra.mxu0 0
      %1770 = vmatprep.subr.bf16.mxu0 0
      %1771 = vmatpush1.bf16.msra.mxu0 0
      %1772 = vmatprep.subr.bf16.mxu0 0
      %1773 = vmatpush1.bf16.msra.mxu0 0
      %1774 = vmatprep.subr.bf16.mxu0 0
      %1775 = vmatpush1.bf16.msra.mxu0 0
      %1776 = vmatprep.subr.bf16.mxu0 0
      %1777 = vmatpush1.bf16.msra.mxu0 0
      %1778 = vmatprep.subr.bf16.mxu0 0
      %1779 = vmatpush1.bf16.msra.mxu0 0
      %1780 = vmatprep.subr.bf16.mxu0 0
      %1781 = vmatpush1.bf16.msra.mxu0 0
      %1782 = vmatprep.subr.bf16.mxu0 0
      %1783 = vmatpush1.bf16.msra.mxu0 0
      %1784 = vmatprep.mubr.bf16.mxu0 0
      %1785 = vmatmul.mubr.bf16.gmra.mrb[0].mxu0 %v1664
      %v1786 = vpop.f32.mrb[0].mxu0
      %v1787 = vadd.f32 %v1611, %v1786
      %v1788 = vpop.f32.mrb[0].mxu0
      %v1789 = vadd.f32 %v1615, %v1788
      %v1790 = vpop.f32.mrb[0].mxu0
      %v1791 = vadd.f32 %v1611, %v1790
      %v1792 = vpop.f32.mrb[0].mxu0
      %v1793 = vadd.f32 %v1615, %v1792
      %1794 = vdwg.mxu0
      %1795 = vmatprep.subr.bf16.mxu0 0
      %1796 = vmatpush1.bf16.msra.mxu0 %v1655
      %1797 = vmatprep.subr.bf16.mxu0 0
      %1798 = vmatpush1.bf16.msra.mxu0 0
      %1799 = vmatprep.subr.bf16.mxu0 0
      %1800 = vmatpush1.bf16.msra.mxu0 0
      %1801 = vmatprep.subr.bf16.mxu0 0
      %1802 = vmatpush1.bf16.msra.mxu0 0
      %1803 = vmatprep.subr.bf16.mxu0 0
      %1804 = vmatpush1.bf16.msra.mxu0 0
      %1805 = vmatprep.subr.bf16.mxu0 0
      %1806 = vmatpush1.bf16.msra.mxu0 0
      %1807 = vmatprep.subr.bf16.mxu0 0
      %1808 = vmatpush1.bf16.msra.mxu0 0
      %1809 = vmatprep.subr.bf16.mxu0 0
      %1810 = vmatpush1.bf16.msra.mxu0 0
      %1811 = vmatprep.subr.bf16.mxu0 0
      %1812 = vmatpush1.bf16.msra.mxu0 0
      %1813 = vmatprep.subr.bf16.mxu0 0
      %1814 = vmatpush1.bf16.msra.mxu0 0
      %1815 = vmatprep.subr.bf16.mxu0 0
      %1816 = vmatpush1.bf16.msra.mxu0 0
      %1817 = vmatprep.subr.bf16.mxu0 0
      %1818 = vmatpush1.bf16.msra.mxu0 0
      %1819 = vmatprep.subr.bf16.mxu0 0
      %1820 = vmatpush1.bf16.msra.mxu0 0
      %1821 = vmatprep.subr.bf16.mxu0 0
      %1822 = vmatpush1.bf16.msra.mxu0 0
      %1823 = vmatprep.subr.bf16.mxu0 0
      %1824 = vmatpush1.bf16.msra.mxu0 0
      %1825 = vmatprep.subr.bf16.mxu0 0
      %1826 = vmatpush1.bf16.msra.mxu0 0
      %1827 = vmatprep.mubr.bf16.mxu0 0
      %1828 = vmatmul.mubr.bf16.gmra.mrb[0].mxu0 %v1664
      %v1829 = vpop.f32.mrb[0].mxu0
      %v1830 = vadd.f32 %v1619, %v1829
      %v1831 = vpop.f32.mrb[0].mxu0
      %v1832 = vpop.f32.mrb[0].mxu0
      %v1833 = vadd.f32 %v1619, %v1832
      %v1834 = vpop.f32.mrb[0].mxu0
      %1835 = vdwg.mxu0
      %v1836 = vtanh.pop %v1701
      %v1837 = vtanh.pop %v1703
      %v1838 = vtanh.pop %v1744
      %v1839 = vtanh.pop %v1746
      %v1840 = vtanh.pop %v1787
      %v1841 = vtanh.pop %v1789
      %v1842 = vtanh.pop %v1830
      %v1843 = vtanh.pop %v1705
      %v1844 = vtanh.pop %v1707
      %v1845 = vtanh.pop %v1748
      %v1846 = vtanh.pop %v1750
      %v1847 = vtanh.pop %v1791
      %v1848 = vtanh.pop %v1793
      %v1849 = vtanh.pop %v1833
      %v1850 = vpack.c.bf16 %v1843, %v1836
      %v1851 = vpack.c.bf16 %v1844, %v1837
      %v1852 = vpack.c.bf16 %v1845, %v1838
      %v1853 = vpack.c.bf16 %v1846, %v1839
      %v1854 = vpack.c.bf16 %v1847, %v1840
      %v1855 = vpack.c.bf16 %v1848, %v1841
      %v1856 = vpack.c.bf16 %v1849, %v1842
      %s1857 = smul.u32 %s142, 14
      %s1858 = smul.addr %s1857, 4
      %s1859 = scalar_lea.vmem %s3, %s1858
      %v1860 = vld [vmem:[%s1859] sm:$0xff]
      %v1861 = vld [vmem:[%s1859 + $0x8] sm:$0xff]
      %v1862 = vld [vmem:[%s1859 + $0x10] sm:$0xff]
      %v1863 = vld [vmem:[%s1859 + $0x18] sm:$0xf]
      %v1864 = vld [vmem:[%s1859 + $0x1c] sm:$0x33]
      %v1865 = vld [vmem:[%s1859 + $0x24] sm:$0x33]
      %v1866 = vld [vmem:[%s1859 + $0x2c] sm:$0x33]
      %v1867 = vld [vmem:[%s1859 + $0x34] sm:$0x3]
      %v1876 = vunpack.c.l.b16 %v1860
      %v1877 = vunpack.c.h.b16 %v1860
      %v1878 = vunpack.c.l.b16 %v1861
      %v1879 = vunpack.c.h.b16 %v1861
      %v1880 = vunpack.c.l.b16 %v1862
      %v1881 = vunpack.c.h.b16 %v1862
      %v1882 = vunpack.c.l.b16 %v1863
      %v1883 = vunpack.c.l.b16 %v1864
      %v1884 = vunpack.c.h.b16 %v1864
      %v1885 = vunpack.c.l.b16 %v1865
      %v1886 = vunpack.c.h.b16 %v1865
      %v1887 = vunpack.c.l.b16 %v1866
      %v1888 = vunpack.c.h.b16 %v1866
      %v1889 = vunpack.c.l.b16 %v1867
      %v1890 = vpack.c.b16 %v1883, %v1876
      %v1891 = vpack.c.b16 %v1884, %v1877
      %v1892 = vpack.c.b16 %v1885, %v1878
      %v1893 = vpack.c.b16 %v1886, %v1879
      %v1894 = vpack.c.b16 %v1887, %v1880
      %v1895 = vpack.c.b16 %v1888, %v1881
      %v1896 = vpack.c.b16 %v1889, %v1882
      %v1904 = vmul.bf16 %v1850, %v1890
      %v1905 = vmul.bf16 %v1851, %v1891
      %v1906 = vmul.bf16 %v1852, %v1892
      %v1907 = vmul.bf16 %v1853, %v1893
      %v1908 = vmul.bf16 %v1854, %v1894
      %v1909 = vmul.bf16 %v1855, %v1895
      %v1910 = vmul.bf16 %v1856, %v1896
      %v1911 = vld [vmem:[%s8] sm:$0xf]
      %v1912 = vld [vmem:[%s8 + $0x4] sm:$0xf]
      %v1913 = vld [vmem:[%s8 + $0x8] sm:$0xf]
      %v1914 = vld [vmem:[%s8 + $0xc] sm:$0xf]
      %v1915 = vld [vmem:[%s8 + $0x10] sm:$0xf]
      %v1916 = vld [vmem:[%s8 + $0x14] sm:$0xf]
      %v1917 = vld [vmem:[%s8 + $0x18] sm:$0xf]
      %v1918 = vld [vmem:[%s8 + $0x1c] sm:$0xf]
      %v1919 = vld [vmem:[%s8 + $0x20] sm:$0xf]
      %v1920 = vld [vmem:[%s8 + $0x24] sm:$0xf]
      %v1921 = vld [vmem:[%s8 + $0x28] sm:$0xf]
      %v1922 = vld [vmem:[%s8 + $0x2c] sm:$0xf]
      %v1923 = vld [vmem:[%s8 + $0x30] sm:$0xf]
      %v1924 = vld [vmem:[%s8 + $0x34] sm:$0xf]
      %v1925 = vld [vmem:[%s8 + $0x38] sm:$0xf]
      %v1926 = vld [vmem:[%s8 + $0x3c] sm:$0xf]
      %v1927 = vld [vmem:[%s8 + $0x40] sm:$0xf]
      %v1928 = vld [vmem:[%s8 + $0x44] sm:$0xf]
      %v1929 = vld [vmem:[%s8 + $0x48] sm:$0xf]
      %v1930 = vld [vmem:[%s8 + $0x4c] sm:$0xf]
      %v1931 = vld [vmem:[%s8 + $0x50] sm:$0xf]
      %v1932 = vld [vmem:[%s8 + $0x54] sm:$0xf]
      %v1933 = vld [vmem:[%s8 + $0x58] sm:$0xf]
      %v1934 = vld [vmem:[%s8 + $0x5c] sm:$0xf]
      %v1935 = vld [vmem:[%s8 + $0x60] sm:$0xf]
      %v1936 = vld [vmem:[%s8 + $0x64] sm:$0xf]
      %v1937 = vld [vmem:[%s8 + $0x68] sm:$0xf]
      %v1938 = vld [vmem:[%s8 + $0x6c] sm:$0xf]
      %v1939 = vld [vmem:[%s8 + $0x70] sm:$0xf]
      %v1940 = vld [vmem:[%s8 + $0x74] sm:$0xf]
      %v1941 = vld [vmem:[%s8 + $0x78] sm:$0xf]
      %v1942 = vld [vmem:[%s8 + $0x7c] sm:$0xf]
      %v1943 = vld [vmem:[%s8 + $0x80] sm:$0xf]
      %v1944 = vld [vmem:[%s8 + $0x84] sm:$0xf]
      %v1945 = vld [vmem:[%s8 + $0x88] sm:$0xf]
      %v1946 = vld [vmem:[%s8 + $0x8c] sm:$0xf]
      %v1947 = vld [vmem:[%s8 + $0x90] sm:$0xf]
      %v1948 = vld [vmem:[%s8 + $0x94] sm:$0xf]
      %v1949 = vld [vmem:[%s8 + $0x98] sm:$0xf]
      %v1950 = vld [vmem:[%s8 + $0x9c] sm:$0xf]
      %v1951 = vld [vmem:[%s8 + $0xa0] sm:$0xf]
      %v1952 = vld [vmem:[%s8 + $0xa4] sm:$0xf]
      %v1953 = vld [vmem:[%s8 + $0xa8] sm:$0xf]
      %v1954 = vld [vmem:[%s8 + $0xac] sm:$0xf]
      %v1955 = vld [vmem:[%s8 + $0xb0] sm:$0xf]
      %v1956 = vld [vmem:[%s8 + $0xb4] sm:$0xf]
      %v1957 = vld [vmem:[%s8 + $0xb8] sm:$0xf]
      %v1958 = vld [vmem:[%s8 + $0xbc] sm:$0xf]
      %v1959 = vld [vmem:[%s8 + $0xc0] sm:$0xf]
      %v1960 = vld [vmem:[%s8 + $0xc4] sm:$0xf]
      %v1961 = vld [vmem:[%s8 + $0xc8] sm:$0xf]
      %v1962 = vld [vmem:[%s8 + $0xcc] sm:$0xf]
      %v1963 = vld [vmem:[%s8 + $0xd0] sm:$0xf]
      %v1964 = vld [vmem:[%s8 + $0xd4] sm:$0xf]
      %v1965 = vld [vmem:[%s8 + $0xd8] sm:$0xf]
      %v1966 = vld [vmem:[%s8 + $0xdc] sm:$0xf]
      %v1967 = vld [vmem:[%s8 + $0xe0] sm:$0xf]
      %v1968 = vld [vmem:[%s8 + $0xe4] sm:$0xf]
      %v1969 = vld [vmem:[%s8 + $0xe8] sm:$0xf]
      %v1970 = vld [vmem:[%s8 + $0xec] sm:$0xf]
      %v1971 = vld [vmem:[%s8 + $0xf0] sm:$0xf]
      %v1972 = vld [vmem:[%s8 + $0xf4] sm:$0xf]
      %v1973 = vld [vmem:[%s8 + $0xf8] sm:$0xf]
      %v1974 = vld [vmem:[%s8 + $0xfc] sm:$0xf]
      %v1975 = vld [vmem:[%s8 + $0x100] sm:$0xf]
      %v1976 = vld [vmem:[%s8 + $0x104] sm:$0xf]
      %v1977 = vld [vmem:[%s8 + $0x108] sm:$0xf]
      %v1978 = vld [vmem:[%s8 + $0x10c] sm:$0xf]
      %v1979 = vld [vmem:[%s8 + $0x110] sm:$0xf]
      %v1980 = vld [vmem:[%s8 + $0x114] sm:$0xf]
      %v1981 = vld [vmem:[%s8 + $0x118] sm:$0xf]
      %v1982 = vld [vmem:[%s8 + $0x11c] sm:$0xf]
      %v1983 = vld [vmem:[%s8 + $0x120] sm:$0xf]
      %v1984 = vld [vmem:[%s8 + $0x124] sm:$0xf]
      %v1985 = vld [vmem:[%s8 + $0x128] sm:$0xf]
      %v1986 = vld [vmem:[%s8 + $0x12c] sm:$0xf]
      %v1987 = vld [vmem:[%s8 + $0x130] sm:$0xf]
      %v1988 = vld [vmem:[%s8 + $0x134] sm:$0xf]
      %v1989 = vld [vmem:[%s8 + $0x138] sm:$0xf]
      %v1990 = vld [vmem:[%s8 + $0x13c] sm:$0xf]
      %v1991 = vld [vmem:[%s8 + $0x140] sm:$0xf]
      %v1992 = vld [vmem:[%s8 + $0x144] sm:$0xf]
      %v1993 = vld [vmem:[%s8 + $0x148] sm:$0xf]
      %v1994 = vld [vmem:[%s8 + $0x14c] sm:$0xf]
      %v1995 = vld [vmem:[%s8 + $0x150] sm:$0xf]
      %v1996 = vld [vmem:[%s8 + $0x154] sm:$0xf]
      %v1997 = vld [vmem:[%s8 + $0x158] sm:$0xf]
      %v1998 = vld [vmem:[%s8 + $0x15c] sm:$0xf]
      %v1999 = vld [vmem:[%s8 + $0x160] sm:$0xf]
      %v2000 = vld [vmem:[%s8 + $0x164] sm:$0xf]
      %v2001 = vld [vmem:[%s8 + $0x168] sm:$0xf]
      %v2002 = vld [vmem:[%s8 + $0x16c] sm:$0xf]
      %v2003 = vld [vmem:[%s8 + $0x170] sm:$0xf]
      %v2004 = vld [vmem:[%s8 + $0x174] sm:$0xf]
      %v2005 = vld [vmem:[%s8 + $0x178] sm:$0xf]
      %v2006 = vld [vmem:[%s8 + $0x17c] sm:$0xf]
      %v2007 = vld [vmem:[%s8 + $0x180] sm:$0xf]
      %v2008 = vld [vmem:[%s8 + $0x184] sm:$0xf]
      %v2009 = vld [vmem:[%s8 + $0x188] sm:$0xf]
      %v2010 = vld [vmem:[%s8 + $0x18c] sm:$0xf]
      %v2011 = vld [vmem:[%s8 + $0x190] sm:$0xf]
      %v2012 = vld [vmem:[%s8 + $0x194] sm:$0xf]
      %v2013 = vld [vmem:[%s8 + $0x198] sm:$0xf]
      %v2014 = vld [vmem:[%s8 + $0x19c] sm:$0xf]
      %v2015 = vld [vmem:[%s8 + $0x1a0] sm:$0xf]
      %v2016 = vld [vmem:[%s8 + $0x1a4] sm:$0xf]
      %v2017 = vld [vmem:[%s8 + $0x1a8] sm:$0xf]
      %v2018 = vld [vmem:[%s8 + $0x1ac] sm:$0xf]
      %v2019 = vld [vmem:[%s8 + $0x1b0] sm:$0xf]
      %v2020 = vld [vmem:[%s8 + $0x1b4] sm:$0xf]
      %v2021 = vld [vmem:[%s8 + $0x1b8] sm:$0xf]
      %v2022 = vld [vmem:[%s8 + $0x1bc] sm:$0xf]
      %v2135 = vunpack.c.l.b16 %v1911
      %v2136 = vunpack.c.l.b16 %v1912
      %v2137 = vunpack.c.l.b16 %v1913
      %v2138 = vunpack.c.l.b16 %v1914
      %v2139 = vunpack.c.l.b16 %v1915
      %v2140 = vunpack.c.l.b16 %v1916
      %v2141 = vunpack.c.l.b16 %v1917
      %v2142 = vunpack.c.l.b16 %v1918
      %v2143 = vunpack.c.l.b16 %v1919
      %v2144 = vunpack.c.l.b16 %v1920
      %v2145 = vunpack.c.l.b16 %v1921
      %v2146 = vunpack.c.l.b16 %v1922
      %v2147 = vunpack.c.l.b16 %v1923
      %v2148 = vunpack.c.l.b16 %v1924
      %v2149 = vunpack.c.l.b16 %v1925
      %v2150 = vunpack.c.l.b16 %v1926
      %v2151 = vunpack.c.l.b16 %v1927
      %v2152 = vunpack.c.l.b16 %v1928
      %v2153 = vunpack.c.l.b16 %v1929
      %v2154 = vunpack.c.l.b16 %v1930
      %v2155 = vunpack.c.l.b16 %v1931
      %v2156 = vunpack.c.l.b16 %v1932
      %v2157 = vunpack.c.l.b16 %v1933
      %v2158 = vunpack.c.l.b16 %v1934
      %v2159 = vunpack.c.l.b16 %v1935
      %v2160 = vunpack.c.l.b16 %v1936
      %v2161 = vunpack.c.l.b16 %v1937
      %v2162 = vunpack.c.l.b16 %v1938
      %v2163 = vunpack.c.l.b16 %v1939
      %v2164 = vunpack.c.l.b16 %v1940
      %v2165 = vunpack.c.l.b16 %v1941
      %v2166 = vunpack.c.l.b16 %v1942
      %v2167 = vunpack.c.l.b16 %v1943
      %v2168 = vunpack.c.l.b16 %v1944
      %v2169 = vunpack.c.l.b16 %v1945
      %v2170 = vunpack.c.l.b16 %v1946
      %v2171 = vunpack.c.l.b16 %v1947
      %v2172 = vunpack.c.l.b16 %v1948
      %v2173 = vunpack.c.l.b16 %v1949
      %v2174 = vunpack.c.l.b16 %v1950
      %v2175 = vunpack.c.l.b16 %v1951
      %v2176 = vunpack.c.l.b16 %v1952
      %v2177 = vunpack.c.l.b16 %v1953
      %v2178 = vunpack.c.l.b16 %v1954
      %v2179 = vunpack.c.l.b16 %v1955
      %v2180 = vunpack.c.l.b16 %v1956
      %v2181 = vunpack.c.l.b16 %v1957
      %v2182 = vunpack.c.l.b16 %v1958
      %v2183 = vunpack.c.l.b16 %v1959
      %v2184 = vunpack.c.l.b16 %v1960
      %v2185 = vunpack.c.l.b16 %v1961
      %v2186 = vunpack.c.l.b16 %v1962
      %v2187 = vunpack.c.l.b16 %v1963
      %v2188 = vunpack.c.l.b16 %v1964
      %v2189 = vunpack.c.l.b16 %v1965
      %v2190 = vunpack.c.l.b16 %v1966
      %v2191 = vunpack.c.l.b16 %v1967
      %v2192 = vunpack.c.l.b16 %v1968
      %v2193 = vunpack.c.l.b16 %v1969
      %v2194 = vunpack.c.l.b16 %v1970
      %v2195 = vunpack.c.l.b16 %v1971
      %v2196 = vunpack.c.l.b16 %v1972
      %v2197 = vunpack.c.l.b16 %v1973
      %v2198 = vunpack.c.l.b16 %v1974
      %v2199 = vunpack.c.l.b16 %v1975
      %v2200 = vunpack.c.l.b16 %v1976
      %v2201 = vunpack.c.l.b16 %v1977
      %v2202 = vunpack.c.l.b16 %v1978
      %v2203 = vunpack.c.l.b16 %v1979
      %v2204 = vunpack.c.l.b16 %v1980
      %v2205 = vunpack.c.l.b16 %v1981
      %v2206 = vunpack.c.l.b16 %v1982
      %v2207 = vunpack.c.l.b16 %v1983
      %v2208 = vunpack.c.l.b16 %v1984
      %v2209 = vunpack.c.l.b16 %v1985
      %v2210 = vunpack.c.l.b16 %v1986
      %v2211 = vunpack.c.l.b16 %v1987
      %v2212 = vunpack.c.l.b16 %v1988
      %v2213 = vunpack.c.l.b16 %v1989
      %v2214 = vunpack.c.l.b16 %v1990
      %v2215 = vunpack.c.l.b16 %v1991
      %v2216 = vunpack.c.l.b16 %v1992
      %v2217 = vunpack.c.l.b16 %v1993
      %v2218 = vunpack.c.l.b16 %v1994
      %v2219 = vunpack.c.l.b16 %v1995
      %v2220 = vunpack.c.l.b16 %v1996
      %v2221 = vunpack.c.l.b16 %v1997
      %v2222 = vunpack.c.l.b16 %v1998
      %v2223 = vunpack.c.l.b16 %v1999
      %v2224 = vunpack.c.l.b16 %v2000
      %v2225 = vunpack.c.l.b16 %v2001
      %v2226 = vunpack.c.l.b16 %v2002
      %v2227 = vunpack.c.l.b16 %v2003
      %v2228 = vunpack.c.l.b16 %v2004
      %v2229 = vunpack.c.l.b16 %v2005
      %v2230 = vunpack.c.l.b16 %v2006
      %v2231 = vunpack.c.l.b16 %v2007
      %v2232 = vunpack.c.l.b16 %v2008
      %v2233 = vunpack.c.l.b16 %v2009
      %v2234 = vunpack.c.l.b16 %v2010
      %v2235 = vunpack.c.l.b16 %v2011
      %v2236 = vunpack.c.l.b16 %v2012
      %v2237 = vunpack.c.l.b16 %v2013
      %v2238 = vunpack.c.l.b16 %v2014
      %v2239 = vunpack.c.l.b16 %v2015
      %v2240 = vunpack.c.l.b16 %v2016
      %v2241 = vunpack.c.l.b16 %v2017
      %v2242 = vunpack.c.l.b16 %v2018
      %v2243 = vunpack.c.l.b16 %v2019
      %v2244 = vunpack.c.l.b16 %v2020
      %v2245 = vunpack.c.l.b16 %v2021
      %v2246 = vunpack.c.l.b16 %v2022
      %v2247 = vpack.c.b16 %v2136, %v2135
      %v2248 = vpack.c.b16 %v2138, %v2137
      %v2249 = vpack.c.b16 %v2140, %v2139
      %v2250 = vpack.c.b16 %v2142, %v2141
      %v2251 = vpack.c.b16 %v2144, %v2143
      %v2252 = vpack.c.b16 %v2146, %v2145
      %v2253 = vpack.c.b16 %v2148, %v2147
      %v2254 = vpack.c.b16 %v2150, %v2149
      %v2255 = vpack.c.b16 %v2152, %v2151
      %v2256 = vpack.c.b16 %v2154, %v2153
      %v2257 = vpack.c.b16 %v2156, %v2155
      %v2258 = vpack.c.b16 %v2158, %v2157
      %v2259 = vpack.c.b16 %v2160, %v2159
      %v2260 = vpack.c.b16 %v2162, %v2161
      %v2261 = vpack.c.b16 %v2164, %v2163
      %v2262 = vpack.c.b16 %v2166, %v2165
      %v2263 = vpack.c.b16 %v2168, %v2167
      %v2264 = vpack.c.b16 %v2170, %v2169
      %v2265 = vpack.c.b16 %v2172, %v2171
      %v2266 = vpack.c.b16 %v2174, %v2173
      %v2267 = vpack.c.b16 %v2176, %v2175
      %v2268 = vpack.c.b16 %v2178, %v2177
      %v2269 = vpack.c.b16 %v2180, %v2179
      %v2270 = vpack.c.b16 %v2182, %v2181
      %v2271 = vpack.c.b16 %v2184, %v2183
      %v2272 = vpack.c.b16 %v2186, %v2185
      %v2273 = vpack.c.b16 %v2188, %v2187
      %v2274 = vpack.c.b16 %v2190, %v2189
      %v2275 = vpack.c.b16 %v2192, %v2191
      %v2276 = vpack.c.b16 %v2194, %v2193
      %v2277 = vpack.c.b16 %v2196, %v2195
      %v2278 = vpack.c.b16 %v2198, %v2197
      %v2279 = vpack.c.b16 %v2200, %v2199
      %v2280 = vpack.c.b16 %v2202, %v2201
      %v2281 = vpack.c.b16 %v2204, %v2203
      %v2282 = vpack.c.b16 %v2206, %v2205
      %v2283 = vpack.c.b16 %v2208, %v2207
      %v2284 = vpack.c.b16 %v2210, %v2209
      %v2285 = vpack.c.b16 %v2212, %v2211
      %v2286 = vpack.c.b16 %v2214, %v2213
      %v2287 = vpack.c.b16 %v2216, %v2215
      %v2288 = vpack.c.b16 %v2218, %v2217
      %v2289 = vpack.c.b16 %v2220, %v2219
      %v2290 = vpack.c.b16 %v2222, %v2221
      %v2291 = vpack.c.b16 %v2224, %v2223
      %v2292 = vpack.c.b16 %v2226, %v2225
      %v2293 = vpack.c.b16 %v2228, %v2227
      %v2294 = vpack.c.b16 %v2230, %v2229
      %v2295 = vpack.c.b16 %v2232, %v2231
      %v2296 = vpack.c.b16 %v2234, %v2233
      %v2297 = vpack.c.b16 %v2236, %v2235
      %v2298 = vpack.c.b16 %v2238, %v2237
      %v2299 = vpack.c.b16 %v2240, %v2239
      %v2300 = vpack.c.b16 %v2242, %v2241
      %v2301 = vpack.c.b16 %v2244, %v2243
      %v2302 = vpack.c.b16 %v2246, %v2245
      %2359 = vmatprep.subr.bf16.mxu0 0
      %2360 = vmatpush1.bf16.msra.mxu0 %v2247
      %2361 = vmatprep.subr.bf16.mxu0 0
      %2362 = vmatpush1.bf16.msra.mxu0 %v2248
      %2363 = vmatprep.subr.bf16.mxu0 0
      %2364 = vmatpush1.bf16.msra.mxu0 %v2249
      %2365 = vmatprep.subr.bf16.mxu0 0
      %2366 = vmatpush1.bf16.msra.mxu0 %v2250
      %2367 = vmatprep.subr.bf16.mxu0 0
      %2368 = vmatpush1.bf16.msra.mxu0 %v2251
      %2369 = vmatprep.subr.bf16.mxu0 0
      %2370 = vmatpush1.bf16.msra.mxu0 %v2252
      %2371 = vmatprep.subr.bf16.mxu0 0
      %2372 = vmatpush1.bf16.msra.mxu0 %v2253
      %2373 = vmatprep.subr.bf16.mxu0 0
      %2374 = vmatpush1.bf16.msra.mxu0 %v2254
      %2375 = vmatprep.subr.bf16.mxu0 0
      %2376 = vmatpush1.bf16.msra.mxu0 %v2255
      %2377 = vmatprep.subr.bf16.mxu0 0
      %2378 = vmatpush1.bf16.msra.mxu0 %v2256
      %2379 = vmatprep.subr.bf16.mxu0 0
      %2380 = vmatpush1.bf16.msra.mxu0 %v2257
      %2381 = vmatprep.subr.bf16.mxu0 0
      %2382 = vmatpush1.bf16.msra.mxu0 %v2258
      %2383 = vmatprep.subr.bf16.mxu0 0
      %2384 = vmatpush1.bf16.msra.mxu0 %v2259
      %2385 = vmatprep.subr.bf16.mxu0 0
      %2386 = vmatpush1.bf16.msra.mxu0 %v2260
      %2387 = vmatprep.subr.bf16.mxu0 0
      %2388 = vmatpush1.bf16.msra.mxu0 %v2261
      %2389 = vmatprep.subr.bf16.mxu0 0
      %2390 = vmatpush1.bf16.msra.mxu0 %v2262
      %2391 = vmatprep.mubr.bf16.mxu0 %v1905
      %2392 = vmatmul.mubr.bf16.gmra.mrb[0].mxu0 %v1904
      %v2393 = vpop.f32.mrb[0].mxu0
      %v2394 = vadd.f32 0.0, %v2393
      %v2395 = vpop.f32.mrb[0].mxu0
      %v2396 = vpop.f32.mrb[0].mxu0
      %v2397 = vadd.f32 0.0, %v2396
      %v2398 = vpop.f32.mrb[0].mxu0
      %2399 = vdwg.mxu0
      %2400 = vmatprep.subr.bf16.mxu0 0
      %2401 = vmatpush1.bf16.msra.mxu0 %v2263
      %2402 = vmatprep.subr.bf16.mxu0 0
      %2403 = vmatpush1.bf16.msra.mxu0 %v2264
      %2404 = vmatprep.subr.bf16.mxu0 0
      %2405 = vmatpush1.bf16.msra.mxu0 %v2265
      %2406 = vmatprep.subr.bf16.mxu0 0
      %2407 = vmatpush1.bf16.msra.mxu0 %v2266
      %2408 = vmatprep.subr.bf16.mxu0 0
      %2409 = vmatpush1.bf16.msra.mxu0 %v2267
      %2410 = vmatprep.subr.bf16.mxu0 0
      %2411 = vmatpush1.bf16.msra.mxu0 %v2268
      %2412 = vmatprep.subr.bf16.mxu0 0
      %2413 = vmatpush1.bf16.msra.mxu0 %v2269
      %2414 = vmatprep.subr.bf16.mxu0 0
      %2415 = vmatpush1.bf16.msra.mxu0 %v2270
      %2416 = vmatprep.subr.bf16.mxu0 0
      %2417 = vmatpush1.bf16.msra.mxu0 %v2271
      %2418 = vmatprep.subr.bf16.mxu0 0
      %2419 = vmatpush1.bf16.msra.mxu0 %v2272
      %2420 = vmatprep.subr.bf16.mxu0 0
      %2421 = vmatpush1.bf16.msra.mxu0 %v2273
      %2422 = vmatprep.subr.bf16.mxu0 0
      %2423 = vmatpush1.bf16.msra.mxu0 %v2274
      %2424 = vmatprep.subr.bf16.mxu0 0
      %2425 = vmatpush1.bf16.msra.mxu0 %v2275
      %2426 = vmatprep.subr.bf16.mxu0 0
      %2427 = vmatpush1.bf16.msra.mxu0 %v2276
      %2428 = vmatprep.subr.bf16.mxu0 0
      %2429 = vmatpush1.bf16.msra.mxu0 %v2277
      %2430 = vmatprep.subr.bf16.mxu0 0
      %2431 = vmatpush1.bf16.msra.mxu0 %v2278
      %2432 = vmatprep.mubr.bf16.mxu0 %v1907
      %2433 = vmatmul.mubr.bf16.gmra.mrb[0].mxu0 %v1906
      %v2434 = vpop.f32.mrb[0].mxu0
      %v2435 = vadd.f32 %v2394, %v2434
      %v2436 = vpop.f32.mrb[0].mxu0
      %v2437 = vpop.f32.mrb[0].mxu0
      %v2438 = vadd.f32 %v2397, %v2437
      %v2439 = vpop.f32.mrb[0].mxu0
      %2440 = vdwg.mxu0
      %2441 = vmatprep.subr.bf16.mxu0 0
      %2442 = vmatpush1.bf16.msra.mxu0 %v2279
      %2443 = vmatprep.subr.bf16.mxu0 0
      %2444 = vmatpush1.bf16.msra.mxu0 %v2280
      %2445 = vmatprep.subr.bf16.mxu0 0
      %2446 = vmatpush1.bf16.msra.mxu0 %v2281
      %2447 = vmatprep.subr.bf16.mxu0 0
      %2448 = vmatpush1.bf16.msra.mxu0 %v2282
      %2449 = vmatprep.subr.bf16.mxu0 0
      %2450 = vmatpush1.bf16.msra.mxu0 %v2283
      %2451 = vmatprep.subr.bf16.mxu0 0
      %2452 = vmatpush1.bf16.msra.mxu0 %v2284
      %2453 = vmatprep.subr.bf16.mxu0 0
      %2454 = vmatpush1.bf16.msra.mxu0 %v2285
      %2455 = vmatprep.subr.bf16.mxu0 0
      %2456 = vmatpush1.bf16.msra.mxu0 %v2286
      %2457 = vmatprep.subr.bf16.mxu0 0
      %2458 = vmatpush1.bf16.msra.mxu0 %v2287
      %2459 = vmatprep.subr.bf16.mxu0 0
      %2460 = vmatpush1.bf16.msra.mxu0 %v2288
      %2461 = vmatprep.subr.bf16.mxu0 0
      %2462 = vmatpush1.bf16.msra.mxu0 %v2289
      %2463 = vmatprep.subr.bf16.mxu0 0
      %2464 = vmatpush1.bf16.msra.mxu0 %v2290
      %2465 = vmatprep.subr.bf16.mxu0 0
      %2466 = vmatpush1.bf16.msra.mxu0 %v2291
      %2467 = vmatprep.subr.bf16.mxu0 0
      %2468 = vmatpush1.bf16.msra.mxu0 %v2292
      %2469 = vmatprep.subr.bf16.mxu0 0
      %2470 = vmatpush1.bf16.msra.mxu0 %v2293
      %2471 = vmatprep.subr.bf16.mxu0 0
      %2472 = vmatpush1.bf16.msra.mxu0 %v2294
      %2473 = vmatprep.mubr.bf16.mxu0 %v1909
      %2474 = vmatmul.mubr.bf16.gmra.mrb[0].mxu0 %v1908
      %v2475 = vpop.f32.mrb[0].mxu0
      %v2476 = vadd.f32 %v2435, %v2475
      %v2477 = vpop.f32.mrb[0].mxu0
      %v2478 = vpop.f32.mrb[0].mxu0
      %v2479 = vadd.f32 %v2438, %v2478
      %v2480 = vpop.f32.mrb[0].mxu0
      %2481 = vdwg.mxu0
      %2482 = vmatprep.subr.bf16.mxu0 0
      %2483 = vmatpush1.bf16.msra.mxu0 %v2295
      %2484 = vmatprep.subr.bf16.mxu0 0
      %2485 = vmatpush1.bf16.msra.mxu0 %v2296
      %2486 = vmatprep.subr.bf16.mxu0 0
      %2487 = vmatpush1.bf16.msra.mxu0 %v2297
      %2488 = vmatprep.subr.bf16.mxu0 0
      %2489 = vmatpush1.bf16.msra.mxu0 %v2298
      %2490 = vmatprep.subr.bf16.mxu0 0
      %2491 = vmatpush1.bf16.msra.mxu0 %v2299
      %2492 = vmatprep.subr.bf16.mxu0 0
      %2493 = vmatpush1.bf16.msra.mxu0 %v2300
      %2494 = vmatprep.subr.bf16.mxu0 0
      %2495 = vmatpush1.bf16.msra.mxu0 %v2301
      %2496 = vmatprep.subr.bf16.mxu0 0
      %2497 = vmatpush1.bf16.msra.mxu0 %v2302
      %2498 = vmatprep.subr.bf16.mxu0 0
      %2499 = vmatpush1.bf16.msra.mxu0 0
      %2500 = vmatprep.subr.bf16.mxu0 0
      %2501 = vmatpush1.bf16.msra.mxu0 0
      %2502 = vmatprep.subr.bf16.mxu0 0
      %2503 = vmatpush1.bf16.msra.mxu0 0
      %2504 = vmatprep.subr.bf16.mxu0 0
      %2505 = vmatpush1.bf16.msra.mxu0 0
      %2506 = vmatprep.subr.bf16.mxu0 0
      %2507 = vmatpush1.bf16.msra.mxu0 0
      %2508 = vmatprep.subr.bf16.mxu0 0
      %2509 = vmatpush1.bf16.msra.mxu0 0
      %2510 = vmatprep.subr.bf16.mxu0 0
      %2511 = vmatpush1.bf16.msra.mxu0 0
      %2512 = vmatprep.subr.bf16.mxu0 0
      %2513 = vmatpush1.bf16.msra.mxu0 0
      %2514 = vmatprep.mubr.bf16.mxu0 0
      %2515 = vmatmul.mubr.bf16.gmra.mrb[0].mxu0 %v1910
      %v2516 = vpop.f32.mrb[0].mxu0
      %v2517 = vadd.f32 %v2476, %v2516
      %v2518 = vpop.f32.mrb[0].mxu0
      %v2519 = vpop.f32.mrb[0].mxu0
      %v2520 = vadd.f32 %v2479, %v2519
      %v2521 = vpop.f32.mrb[0].mxu0
      %2522 = vdwg.mxu0
      %v2523 = vmul.f32 %v2517, 0.33333334
      %v2524 = vmul.f32 %v2520, 0.33333334
      %v2525 = vadd.f32 %v147, %v2523
      %v2526 = vadd.f32 %v148, %v2524
      %v2527 = vld [vmem:[%s9] sm:$0xff]
      %v2528 = vld [vmem:[%s9 + $0x8] sm:$0xff]
      %v2530 = vsel %vm1497, %v2517, 0
      %v2533 = vsel %vm1497, %v2520, 0
      %2535 = vmatprep.subr.mxu0 0.0
      %2536 = vmatpush1.msra.mxu0 %v2527
      %2537 = vmatprep.subr.mxu0 0.0
      %2538 = vmatpush1.msra.mxu0 %v2528
      %2539 = vmatprep.subr.mxu0 0.0
      %2540 = vmatpush1.msra.mxu0 0.0
      %2541 = vmatprep.subr.mxu0 0.0
      %2542 = vmatpush1.msra.mxu0 0.0
      %2543 = vmatprep.subr.mxu0 0.0
      %2544 = vmatpush1.msra.mxu0 0.0
      %2545 = vmatprep.subr.mxu0 0.0
      %2546 = vmatpush1.msra.mxu0 0.0
      %2547 = vmatprep.subr.mxu0 0.0
      %2548 = vmatpush1.msra.mxu0 0.0
      %2549 = vmatprep.subr.mxu0 0.0
      %2550 = vmatpush1.msra.mxu0 0.0
      %2551 = vmatprep.subr.mxu0 0.0
      %2552 = vmatpush1.msra.mxu0 0.0
      %2553 = vmatprep.subr.mxu0 0.0
      %2554 = vmatpush1.msra.mxu0 0.0
      %2555 = vmatprep.subr.mxu0 0.0
      %2556 = vmatpush1.msra.mxu0 0.0
      %2557 = vmatprep.subr.mxu0 0.0
      %2558 = vmatpush1.msra.mxu0 0.0
      %2559 = vmatprep.subr.mxu0 0.0
      %2560 = vmatpush1.msra.mxu0 0.0
      %2561 = vmatprep.subr.mxu0 0.0
      %2562 = vmatpush1.msra.mxu0 0.0
      %2563 = vmatprep.subr.mxu0 0.0
      %2564 = vmatpush1.msra.mxu0 0.0
      %2565 = vmatprep.subr.mxu0 0.0
      %2566 = vmatpush1.msra.mxu0 0.0
      %2567 = vmatprep.subr.mxu0 0.0
      %2568 = vmatpush1.msra.mxu0 0.0
      %2569 = vmatprep.subr.mxu0 0.0
      %2570 = vmatpush1.msra.mxu0 0.0
      %2571 = vmatprep.subr.mxu0 0.0
      %2572 = vmatpush1.msra.mxu0 0.0
      %2573 = vmatprep.subr.mxu0 0.0
      %2574 = vmatpush1.msra.mxu0 0.0
      %2575 = vmatprep.subr.mxu0 0.0
      %2576 = vmatpush1.msra.mxu0 0.0
      %2577 = vmatprep.subr.mxu0 0.0
      %2578 = vmatpush1.msra.mxu0 0.0
      %2579 = vmatprep.subr.mxu0 0.0
      %2580 = vmatpush1.msra.mxu0 0.0
      %2581 = vmatprep.subr.mxu0 0.0
      %2582 = vmatpush1.msra.mxu0 0.0
      %2583 = vmatprep.subr.mxu0 0.0
      %2584 = vmatpush1.msra.mxu0 0.0
      %2585 = vmatprep.subr.mxu0 0.0
      %2586 = vmatpush1.msra.mxu0 0.0
      %2587 = vmatprep.subr.mxu0 0.0
      %2588 = vmatpush1.msra.mxu0 0.0
      %2589 = vmatprep.subr.mxu0 0.0
      %2590 = vmatpush1.msra.mxu0 0.0
      %2591 = vmatprep.subr.mxu0 0.0
      %2592 = vmatpush1.msra.mxu0 0.0
      %2593 = vmatprep.subr.mxu0 0.0
      %2594 = vmatpush1.msra.mxu0 0.0
      %2595 = vmatprep.subr.mxu0 0.0
      %2596 = vmatpush1.msra.mxu0 0.0
      %2597 = vmatprep.subr.mxu0 0.0
      %2598 = vmatpush1.msra.mxu0 0.0
      %2599 = vmatprep.mubr.f32.mxu0 0.0
      %2600 = vmatmul.mubr.f32.gmra.mrb[0].mxu0 %v2530
      %v2601 = vpop.f32.mrb[0].mxu0
      %v2602 = vadd.f32 0.0, %v2601
      %v2603 = vpop.f32.mrb[0].mxu0
      %2604 = vmatprep.mubr.f32.mxu0 0.0
      %2605 = vmatmul.mubr.f32.gmra.mrb[0].mxu0 %v2533
      %v2606 = vpop.f32.mrb[0].mxu0
      %v2607 = vadd.f32 0.0, %v2606
      %v2608 = vpop.f32.mrb[0].mxu0
      %2609 = vdwg.mxu0
      %v2610 = vmul.f32 %v2602, 0.33333334
      %v2611 = vmul.f32 %v2607, 0.33333334
      %v2612 = vadd.f32 %v151, %v2610
      %v2613 = vadd.f32 %v152, %v2611
      %2616 = vrot.lane.b32.xlu0 %v2612, 16
      %v2617 = vpop.permute.xlu0 %2616
      %2618 = vrot.lane.b32.xlu0 %v2613, 16
      %v2619 = vpop.permute.xlu0 %2618
      %2622 = vrot.lane.b32.xlu0 %v2517, 32
      %v2623 = vpop.permute.xlu0 %2622
      %2624 = vrot.lane.b32.xlu0 %v2520, 32
      %v2625 = vpop.permute.xlu0 %2624
      %v2628 = vsel %vm1497, %v2602, %v2617
      %v2629 = vsel %vm1497, %v2607, %v2619
      %vm2630 = vcmask 261120
      %v2631 = vsel %vm2630, %v2628, %v2623
      %v2632 = vsel %vm2630, %v2629, %v2625
      %v2633 = vld [vmem:[#allocation10] sm:$0xff]
      %v2634 = vld [vmem:[#allocation10 + $0x8] sm:$0xf]
      %2635 = vrot.lane.b32.xlu0 %v2517, 16
      %v2636 = vpop.permute.xlu0 %2635
      %2637 = vrot.lane.b32.xlu0 %v2520, 16
      %v2638 = vpop.permute.xlu0 %2637
      %2643 = vrot.lane.b32.xlu0 %v2633, 32
      %v2644 = vpop.permute.xlu0 %2643
      %2645 = vrot.lane.b32.xlu0 %v2634, 32
      %v2646 = vpop.permute.xlu0 %2645
      %v2649 = vsel %vm1497, %v2525, %v2636
      %v2650 = vsel %vm1497, %v2526, %v2638
      %v2651 = vsel %vm2630, %v2649, %v2644
      %v2652 = vsel %vm2630, %v2650, %v2646
      %vm2653 = vcmask 392192
      %v2655 = vsel %vm2653, %v2631, 0
      %v2658 = vsel %vm2653, %v2632, 0
      %v2661 = vsel %vm2653, %v2651, 0
      %v2664 = vsel %vm2653, %v2652, 0
      %2666 = vmatprep.subr.mxu0 0.0
      %2667 = vmatpush1.xpose.msra.mxu0 %v2661
      %2668 = vmatprep.subr.mxu0 0.0
      %2669 = vmatpush1.xpose.msra.mxu0 %v2664
      %2670 = vmatprep.subr.mxu0 0.0
      %2671 = vmatpush1.xpose.msra.mxu0 0.0
      %2672 = vmatprep.subr.mxu0 0.0
      %2673 = vmatpush1.xpose.msra.mxu0 0.0
      %2674 = vmatprep.subr.mxu0 0.0
      %2675 = vmatpush1.xpose.msra.mxu0 0.0
      %2676 = vmatprep.subr.mxu0 0.0
      %2677 = vmatpush1.xpose.msra.mxu0 0.0
      %2678 = vmatprep.subr.mxu0 0.0
      %2679 = vmatpush1.xpose.msra.mxu0 0.0
      %2680 = vmatprep.subr.mxu0 0.0
      %2681 = vmatpush1.xpose.msra.mxu0 0.0
      %2682 = vmatprep.subr.mxu0 0.0
      %2683 = vmatpush1.xpose.msra.mxu0 0.0
      %2684 = vmatprep.subr.mxu0 0.0
      %2685 = vmatpush1.xpose.msra.mxu0 0.0
      %2686 = vmatprep.subr.mxu0 0.0
      %2687 = vmatpush1.xpose.msra.mxu0 0.0
      %2688 = vmatprep.subr.mxu0 0.0
      %2689 = vmatpush1.xpose.msra.mxu0 0.0
      %2690 = vmatprep.subr.mxu0 0.0
      %2691 = vmatpush1.xpose.msra.mxu0 0.0
      %2692 = vmatprep.subr.mxu0 0.0
      %2693 = vmatpush1.xpose.msra.mxu0 0.0
      %2694 = vmatprep.subr.mxu0 0.0
      %2695 = vmatpush1.xpose.msra.mxu0 0.0
      %2696 = vmatprep.subr.mxu0 0.0
      %2697 = vmatpush1.xpose.msra.mxu0 0.0
      %2698 = vmatprep.subr.mxu0 0.0
      %2699 = vmatpush1.xpose.msra.mxu0 0.0
      %2700 = vmatprep.subr.mxu0 0.0
      %2701 = vmatpush1.xpose.msra.mxu0 0.0
      %2702 = vmatprep.subr.mxu0 0.0
      %2703 = vmatpush1.xpose.msra.mxu0 0.0
      %2704 = vmatprep.subr.mxu0 0.0
      %2705 = vmatpush1.xpose.msra.mxu0 0.0
      %2706 = vmatprep.subr.mxu0 0.0
      %2707 = vmatpush1.xpose.msra.mxu0 0.0
      %2708 = vmatprep.subr.mxu0 0.0
      %2709 = vmatpush1.xpose.msra.mxu0 0.0
      %2710 = vmatprep.subr.mxu0 0.0
      %2711 = vmatpush1.xpose.msra.mxu0 0.0
      %2712 = vmatprep.subr.mxu0 0.0
      %2713 = vmatpush1.xpose.msra.mxu0 0.0
      %2714 = vmatprep.subr.mxu0 0.0
      %2715 = vmatpush1.xpose.msra.mxu0 0.0
      %2716 = vmatprep.subr.mxu0 0.0
      %2717 = vmatpush1.xpose.msra.mxu0 0.0
      %2718 = vmatprep.subr.mxu0 0.0
      %2719 = vmatpush1.xpose.msra.mxu0 0.0
      %2720 = vmatprep.subr.mxu0 0.0
      %2721 = vmatpush1.xpose.msra.mxu0 0.0
      %2722 = vmatprep.subr.mxu0 0.0
      %2723 = vmatpush1.xpose.msra.mxu0 0.0
      %2724 = vmatprep.subr.mxu0 0.0
      %2725 = vmatpush1.xpose.msra.mxu0 0.0
      %2726 = vmatprep.subr.mxu0 0.0
      %2727 = vmatpush1.xpose.msra.mxu0 0.0
      %2728 = vmatprep.subr.mxu0 0.0
      %2729 = vmatpush1.xpose.msra.mxu0 0.0
      %2730 = vmatprep.mubr.f32.mxu0 0.0
      %2731 = vmatmul.mubr.f32.gmra.mrb[0].mxu0 %v2655
      %v2732 = vpop.f32.mrb[0].mxu0
      %v2733 = vadd.f32 0.0, %v2732
      %v2734 = vpop.f32.mrb[0].mxu0
      %2735 = vmatprep.mubr.f32.mxu0 0.0
      %2736 = vmatmul.mubr.f32.gmra.mrb[0].mxu0 %v2658
      %v2737 = vpop.f32.mrb[0].mxu0
      %v2738 = vadd.f32 0.0, %v2737
      %v2739 = vpop.f32.mrb[0].mxu0
      %2740 = vdwg.mxu0
      %v2741 = vmul.f32 %v2733, 0.055555556
      %v2742 = vmul.f32 %v2738, 0.055555556
      %v2743 = vadd.f32 %v149, %v2741
      %v2744 = vadd.f32 %v150, %v2742
    $region94: #{tpu_custom_call.1} parent=1 // loop_footer
      %s146 = sadd.s32 1, %s142
    $region95: #{tpu_custom_call.1} parent=1 // loop_footer_branch
      %141 = sbr.rel target = $region91
    $region96: #{tpu_custom_call.1} parent=1 // loop_exit
      _
    %v2745 = vld [vmem:[#allocation11] sm:$0xff]
    %v2746 = vld [vmem:[#allocation11 + $0x8] sm:$0xff]
    %vm2747 = vcmask 130048
    %v2749 = vsel %vm2747, %v147, 0
    %v2752 = vsel %vm2747, %v148, 0
    %2754 = vmatprep.subr.mxu0 0.0
    %2755 = vmatpush1.msra.mxu0 %v2745
    %2756 = vmatprep.subr.mxu0 0.0
    %2757 = vmatpush1.msra.mxu0 %v2746
    %2758 = vmatprep.subr.mxu0 0.0
    %2759 = vmatpush1.msra.mxu0 0.0
    %2760 = vmatprep.subr.mxu0 0.0
    %2761 = vmatpush1.msra.mxu0 0.0
    %2762 = vmatprep.subr.mxu0 0.0
    %2763 = vmatpush1.msra.mxu0 0.0
    %2764 = vmatprep.subr.mxu0 0.0
    %2765 = vmatpush1.msra.mxu0 0.0
    %2766 = vmatprep.subr.mxu0 0.0
    %2767 = vmatpush1.msra.mxu0 0.0
    %2768 = vmatprep.subr.mxu0 0.0
    %2769 = vmatpush1.msra.mxu0 0.0
    %2770 = vmatprep.subr.mxu0 0.0
    %2771 = vmatpush1.msra.mxu0 0.0
    %2772 = vmatprep.subr.mxu0 0.0
    %2773 = vmatpush1.msra.mxu0 0.0
    %2774 = vmatprep.subr.mxu0 0.0
    %2775 = vmatpush1.msra.mxu0 0.0
    %2776 = vmatprep.subr.mxu0 0.0
    %2777 = vmatpush1.msra.mxu0 0.0
    %2778 = vmatprep.subr.mxu0 0.0
    %2779 = vmatpush1.msra.mxu0 0.0
    %2780 = vmatprep.subr.mxu0 0.0
    %2781 = vmatpush1.msra.mxu0 0.0
    %2782 = vmatprep.subr.mxu0 0.0
    %2783 = vmatpush1.msra.mxu0 0.0
    %2784 = vmatprep.subr.mxu0 0.0
    %2785 = vmatpush1.msra.mxu0 0.0
    %2786 = vmatprep.subr.mxu0 0.0
    %2787 = vmatpush1.msra.mxu0 0.0
    %2788 = vmatprep.subr.mxu0 0.0
    %2789 = vmatpush1.msra.mxu0 0.0
    %2790 = vmatprep.subr.mxu0 0.0
    %2791 = vmatpush1.msra.mxu0 0.0
    %2792 = vmatprep.subr.mxu0 0.0
    %2793 = vmatpush1.msra.mxu0 0.0
    %2794 = vmatprep.subr.mxu0 0.0
    %2795 = vmatpush1.msra.mxu0 0.0
    %2796 = vmatprep.subr.mxu0 0.0
    %2797 = vmatpush1.msra.mxu0 0.0
    %2798 = vmatprep.subr.mxu0 0.0
    %2799 = vmatpush1.msra.mxu0 0.0
    %2800 = vmatprep.subr.mxu0 0.0
    %2801 = vmatpush1.msra.mxu0 0.0
    %2802 = vmatprep.subr.mxu0 0.0
    %2803 = vmatpush1.msra.mxu0 0.0
    %2804 = vmatprep.subr.mxu0 0.0
    %2805 = vmatpush1.msra.mxu0 0.0
    %2806 = vmatprep.subr.mxu0 0.0
    %2807 = vmatpush1.msra.mxu0 0.0
    %2808 = vmatprep.subr.mxu0 0.0
    %2809 = vmatpush1.msra.mxu0 0.0
    %2810 = vmatprep.subr.mxu0 0.0
    %2811 = vmatpush1.msra.mxu0 0.0
    %2812 = vmatprep.subr.mxu0 0.0
    %2813 = vmatpush1.msra.mxu0 0.0
    %2814 = vmatprep.subr.mxu0 0.0
    %2815 = vmatpush1.msra.mxu0 0.0
    %2816 = vmatprep.subr.mxu0 0.0
    %2817 = vmatpush1.msra.mxu0 0.0
    %2818 = vmatprep.mubr.f32.mxu0 0.0
    %2819 = vmatmul.mubr.f32.gmra.mrb[0].mxu0 %v2749
    %v2820 = vpop.f32.mrb[0].mxu0
    %v2821 = vadd.f32 0.0, %v2820
    %v2822 = vpop.f32.mrb[0].mxu0
    %2823 = vmatprep.mubr.f32.mxu0 0.0
    %2824 = vmatmul.mubr.f32.gmra.mrb[0].mxu0 %v2752
    %v2825 = vpop.f32.mrb[0].mxu0
    %v2826 = vadd.f32 0.0, %v2825
    %v2827 = vpop.f32.mrb[0].mxu0
    %2828 = vdwg.mxu0
    %v2829 = vld [vmem:[%s12] sm:$0xff]
    %v2830 = vld [vmem:[%s12 + $0x8] sm:$0xf]
    %v2831 = vmul.f32 %v2821, %v2829
    %v2832 = vmul.f32 %v2826, %v2830
    %v2833 = vld [vmem:[%s13] sm:$0xff]
    %v2834 = vld [vmem:[%s13 + $0x8] sm:$0xff]
    %v2835 = vld [vmem:[%s13 + $0x10] sm:$0xff]
    %v2836 = vld [vmem:[%s13 + $0x18] sm:$0xff]
    %v2837 = vld [vmem:[%s13 + $0x20] sm:$0xff]
    %v2838 = vld [vmem:[%s13 + $0x28] sm:$0xff]
    %v2839 = vld [vmem:[%s13 + $0x30] sm:$0xff]
    %v2840 = vld [vmem:[%s13 + $0x38] sm:$0xf]
    %vm2841 = vcmask 490496
    %v2843 = vsel %vm2841, %v2831, 0
    %v2846 = vsel %vm2841, %v2832, 0
    %vm2848 = vcmask 1043456
    %v2850 = vsel %vm2848, %v2840, 0
    %2852 = vmatprep.subr.mxu0 0.0
    %2853 = vmatpush1.msra.mxu0 %v2833
    %2854 = vmatprep.subr.mxu0 0.0
    %2855 = vmatpush1.msra.mxu0 %v2834
    %2856 = vmatprep.subr.mxu0 0.0
    %2857 = vmatpush1.msra.mxu0 %v2835
    %2858 = vmatprep.subr.mxu0 0.0
    %2859 = vmatpush1.msra.mxu0 %v2836
    %2860 = vmatprep.subr.mxu0 0.0
    %2861 = vmatpush1.msra.mxu0 %v2837
    %2862 = vmatprep.subr.mxu0 0.0
    %2863 = vmatpush1.msra.mxu0 %v2838
    %2864 = vmatprep.subr.mxu0 0.0
    %2865 = vmatpush1.msra.mxu0 %v2839
    %2866 = vmatprep.subr.mxu0 0.0
    %2867 = vmatpush1.msra.mxu0 %v2850
    %2868 = vmatprep.subr.mxu0 0.0
    %2869 = vmatpush1.msra.mxu0 0.0
    %2870 = vmatprep.subr.mxu0 0.0
    %2871 = vmatpush1.msra.mxu0 0.0
    %2872 = vmatprep.subr.mxu0 0.0
    %2873 = vmatpush1.msra.mxu0 0.0
    %2874 = vmatprep.subr.mxu0 0.0
    %2875 = vmatpush1.msra.mxu0 0.0
    %2876 = vmatprep.subr.mxu0 0.0
    %2877 = vmatpush1.msra.mxu0 0.0
    %2878 = vmatprep.subr.mxu0 0.0
    %2879 = vmatpush1.msra.mxu0 0.0
    %2880 = vmatprep.subr.mxu0 0.0
    %2881 = vmatpush1.msra.mxu0 0.0
    %2882 = vmatprep.subr.mxu0 0.0
    %2883 = vmatpush1.msra.mxu0 0.0
    %2884 = vmatprep.subr.mxu0 0.0
    %2885 = vmatpush1.msra.mxu0 0.0
    %2886 = vmatprep.subr.mxu0 0.0
    %2887 = vmatpush1.msra.mxu0 0.0
    %2888 = vmatprep.subr.mxu0 0.0
    %2889 = vmatpush1.msra.mxu0 0.0
    %2890 = vmatprep.subr.mxu0 0.0
    %2891 = vmatpush1.msra.mxu0 0.0
    %2892 = vmatprep.subr.mxu0 0.0
    %2893 = vmatpush1.msra.mxu0 0.0
    %2894 = vmatprep.subr.mxu0 0.0
    %2895 = vmatpush1.msra.mxu0 0.0
    %2896 = vmatprep.subr.mxu0 0.0
    %2897 = vmatpush1.msra.mxu0 0.0
    %2898 = vmatprep.subr.mxu0 0.0
    %2899 = vmatpush1.msra.mxu0 0.0
    %2900 = vmatprep.subr.mxu0 0.0
    %2901 = vmatpush1.msra.mxu0 0.0
    %2902 = vmatprep.subr.mxu0 0.0
    %2903 = vmatpush1.msra.mxu0 0.0
    %2904 = vmatprep.subr.mxu0 0.0
    %2905 = vmatpush1.msra.mxu0 0.0
    %2906 = vmatprep.subr.mxu0 0.0
    %2907 = vmatpush1.msra.mxu0 0.0
    %2908 = vmatprep.subr.mxu0 0.0
    %2909 = vmatpush1.msra.mxu0 0.0
    %2910 = vmatprep.subr.mxu0 0.0
    %2911 = vmatpush1.msra.mxu0 0.0
    %2912 = vmatprep.subr.mxu0 0.0
    %2913 = vmatpush1.msra.mxu0 0.0
    %2914 = vmatprep.subr.mxu0 0.0
    %2915 = vmatpush1.msra.mxu0 0.0
    %2916 = vmatprep.mubr.f32.mxu0 0.0
    %2917 = vmatmul.mubr.f32.gmra.mrb[0].mxu0 %v2843
    %v2918 = vpop.f32.mrb[0].mxu0
    %v2919 = vadd.f32 0.0, %v2918
    %v2920 = vpop.f32.mrb[0].mxu0
    %2921 = vmatprep.mubr.f32.mxu0 0.0
    %2922 = vmatmul.mubr.f32.gmra.mrb[0].mxu0 %v2846
    %v2923 = vpop.f32.mrb[0].mxu0
    %v2924 = vadd.f32 0.0, %v2923
    %v2925 = vpop.f32.mrb[0].mxu0
    %2926 = vdwg.mxu0
    %v2927 = vld [vmem:[%s14] sm:$0x3]
    %v2928 = vld [vmem:[%s15] sm:$0x1]
    %v2930 = vlaneseq
    %v2931 = vshrl.u32 %v2930, 7
    %v2932 = vsub.s32 0, %v2931
    %v2933 = vrot.slane %v2928, %v2932
    %vm2935 = vcmask 97280
    %v2937 = vsel %vm2935, %v2927, 0
    %v2940 = vsel %vm2848, %v2924, 0
    %2942 = vmatprep.subr.mxu0 0.0
    %2943 = vmatpush1.msra.mxu0 %v2919
    %2944 = vmatprep.subr.mxu0 0.0
    %2945 = vmatpush1.msra.mxu0 %v2940
    %2946 = vmatprep.subr.mxu0 0.0
    %2947 = vmatpush1.msra.mxu0 0.0
    %2948 = vmatprep.subr.mxu0 0.0
    %2949 = vmatpush1.msra.mxu0 0.0
    %2950 = vmatprep.subr.mxu0 0.0
    %2951 = vmatpush1.msra.mxu0 0.0
    %2952 = vmatprep.subr.mxu0 0.0
    %2953 = vmatpush1.msra.mxu0 0.0
    %2954 = vmatprep.subr.mxu0 0.0
    %2955 = vmatpush1.msra.mxu0 0.0
    %2956 = vmatprep.subr.mxu0 0.0
    %2957 = vmatpush1.msra.mxu0 0.0
    %2958 = vmatprep.subr.mxu0 0.0
    %2959 = vmatpush1.msra.mxu0 0.0
    %2960 = vmatprep.subr.mxu0 0.0
    %2961 = vmatpush1.msra.mxu0 0.0
    %2962 = vmatprep.subr.mxu0 0.0
    %2963 = vmatpush1.msra.mxu0 0.0
    %2964 = vmatprep.subr.mxu0 0.0
    %2965 = vmatpush1.msra.mxu0 0.0
    %2966 = vmatprep.subr.mxu0 0.0
    %2967 = vmatpush1.msra.mxu0 0.0
    %2968 = vmatprep.subr.mxu0 0.0
    %2969 = vmatpush1.msra.mxu0 0.0
    %2970 = vmatprep.subr.mxu0 0.0
    %2971 = vmatpush1.msra.mxu0 0.0
    %2972 = vmatprep.subr.mxu0 0.0
    %2973 = vmatpush1.msra.mxu0 0.0
    %2974 = vmatprep.subr.mxu0 0.0
    %2975 = vmatpush1.msra.mxu0 0.0
    %2976 = vmatprep.subr.mxu0 0.0
    %2977 = vmatpush1.msra.mxu0 0.0
    %2978 = vmatprep.subr.mxu0 0.0
    %2979 = vmatpush1.msra.mxu0 0.0
    %2980 = vmatprep.subr.mxu0 0.0
    %2981 = vmatpush1.msra.mxu0 0.0
    %2982 = vmatprep.subr.mxu0 0.0
    %2983 = vmatpush1.msra.mxu0 0.0
    %2984 = vmatprep.subr.mxu0 0.0
    %2985 = vmatpush1.msra.mxu0 0.0
    %2986 = vmatprep.subr.mxu0 0.0
    %2987 = vmatpush1.msra.mxu0 0.0
    %2988 = vmatprep.subr.mxu0 0.0
    %2989 = vmatpush1.msra.mxu0 0.0
    %2990 = vmatprep.subr.mxu0 0.0
    %2991 = vmatpush1.msra.mxu0 0.0
    %2992 = vmatprep.subr.mxu0 0.0
    %2993 = vmatpush1.msra.mxu0 0.0
    %2994 = vmatprep.subr.mxu0 0.0
    %2995 = vmatpush1.msra.mxu0 0.0
    %2996 = vmatprep.subr.mxu0 0.0
    %2997 = vmatpush1.msra.mxu0 0.0
    %2998 = vmatprep.subr.mxu0 0.0
    %2999 = vmatpush1.msra.mxu0 0.0
    %3000 = vmatprep.subr.mxu0 0.0
    %3001 = vmatpush1.msra.mxu0 0.0
    %3002 = vmatprep.subr.mxu0 0.0
    %3003 = vmatpush1.msra.mxu0 0.0
    %3004 = vmatprep.subr.mxu0 0.0
    %3005 = vmatpush1.msra.mxu0 0.0
    %3006 = vmatprep.mubr.f32.mxu0 0.0
    %3007 = vmatmul.mubr.f32.gmra.mrb[0].mxu0 %v2937
    %v3008 = vpop.f32.mrb[0].mxu0
    %v3009 = vadd.f32 %v2933, %v3008
    %v3010 = vpop.f32.mrb[0].mxu0
    %3011 = vdwg.mxu0
    %vm3012 = vcmask 74752
    %3013 = vst.msk [vmem:[#allocation13] sm:$0x3] %vm3012, %v3009
    // Predicated region
    $region97: #{tpu_custom_call.1} parent=1 // pred_check
      _
    $region98: #{tpu_custom_call.1} parent=1 // pred_check_branch
      %3015 = sbr.rel (0) target = $region100
    $region99: #{tpu_custom_call.1} parent=1 // pred_region
      %s3017 = ssub.s32 32, 32
      %3018 = vsyncadd [#allocation4], %s3017
      %s3020 = sshll.u32 [#allocation13], 4
      %s3021 = int_to_ptr.vmem [resolvable:$true] %s3020
      %3023 = dma.vmem_to_hbm [thread:$0]  %s3021, 32, %s16, [#allocation4]
    $region100: #{tpu_custom_call.1} parent=1 // pred_fallthru
      _
    // Predicated region
    $region101: #{tpu_custom_call.1} parent=1 // pred_check
      _
    $region102: #{tpu_custom_call.1} parent=1 // pred_check_branch
      %3025 = sbr.rel (0) target = $region104
    $region103: #{tpu_custom_call.1} parent=1 // pred_region
      %3026 = dma.done [#allocation4], 32
    $region104: #{tpu_custom_call.1} parent=1 // pred_fallthru
      _
    %3027 = vsyncpa [#allocation3], 1
    %3028 = vsyncpa [#allocation6], 1
    %3029 = vsyncpa [#allocation9], 1
    %3030 = vsyncpa [#allocation12], 1
    %3031 = vsyncpa [#allocation4], 1

</llo_original>
